<compile_context>
chip_gen: v7x
topology: tpu7x:2x2x1
jax: 0.10.0
libtpu: 0.0.40
codegen_flags: <defaults>
</compile_context>

<pallas_src>
import functools

import jax
import jax.numpy as jnp
from jax import lax
from jax.experimental import pallas as pl
from jax.experimental.pallas import tpu as pltpu


# ------------------------------ fused kernel -------------------------------

def _down_fused_kernel(xw_ref, w1_ref, b1_ref, w2_ref, b2_ref, adp_ref, o_ref,
                       pad1_ref, pad2_ref, *, Hp, Wp):
    M = Hp * Wp
    top = Wp + 1                      # 1 guard row + one zero-padded image row

    # ---- 2x2 max-pool (window elements pre-stacked on axis 1 by the wrapper) ----
    pooled = jnp.maximum(jnp.maximum(xw_ref[0, 0], xw_ref[0, 1]),
                         jnp.maximum(xw_ref[0, 2], xw_ref[0, 3]))      # (M, Cin)

    # Row masks for the width borders (flattened rows are (y, x) row-major).
    col = lax.broadcasted_iota(jnp.int32, (M, 1), 0) % Wp
    edge_l = col == 0                 # taps with dx == 0 invalid on these rows
    edge_r = col == Wp - 1            # taps with dx == 2 invalid on these rows

    def fill_padded(pad_ref, data):
        # pad_ref rows: [1 guard + Wp zeros] + [M image rows] + [Wp zeros + 1 guard]
        c = pad_ref.shape[-1]
        pad_ref[0:top, :] = jnp.zeros((top, c), pad_ref.dtype)
        pad_ref[top:top + M, :] = data.astype(pad_ref.dtype)
        pad_ref[top + M:top + M + top, :] = jnp.zeros((top, c), pad_ref.dtype)

    def conv3x3(pad_ref, w_ref):
        # out(y, x) = sum_{dy, dx} in_pad(y + dy - 1, x + dx - 1) @ W[dy, dx]
        # Tap (dy, dx) of the flattened H-padded buffer is the contiguous slab
        # starting at scratch row dy*Wp + dx (the guard row absorbs the dx-1 shift).
        cout = w_ref.shape[-1]
        acc = jnp.zeros((M, cout), jnp.float32)
        for dx in range(3):
            part = jnp.zeros((M, cout), jnp.float32)
            for dy in range(3):
                start = dy * Wp + dx
                slab = pad_ref[start:start + M, :]
                part = part + jnp.dot(slab, w_ref[dy * 3 + dx],
                                      preferred_element_type=jnp.float32)
            if dx == 0:
                part = jnp.where(edge_l, 0.0, part)
            elif dx == 2:
                part = jnp.where(edge_r, 0.0, part)
            acc = acc + part
        return acc

    # ---- conv1 + folded BN1 + ReLU ----
    fill_padded(pad1_ref, pooled)
    x1 = jnp.maximum(conv3x3(pad1_ref, w1_ref) + b1_ref[...], 0.0)     # (M, Cmid)

    # ---- conv2 + folded BN2 + ReLU ----
    fill_padded(pad2_ref, x1)
    x2 = jnp.maximum(conv3x3(pad2_ref, w2_ref) + b2_ref[0:1, :], 0.0)  # (M, Cout)

    # ---- _SelfAdaption (grouped 1x1 convs, hidden=4) + residual (lambda1 = 1) ----
    # adp.relu1 is a no-op on x2 (already >= 0).  Unroll the 4 hidden units as 2-D
    # (M, Cout) VPU ops (no 3-D intermediate, no cross-sublane reduction).
    adp_p = adp_ref[...]                                    # (3, 4, Cout)
    w1a, b1a, w3a = adp_p[0], adp_p[1], adp_p[2]            # each (4, Cout)
    adp = jnp.zeros_like(x2)
    for j in range(4):
        hj = jnp.maximum(x2 * w1a[j:j + 1, :] + b1a[j:j + 1, :], 0.0)
        adp = adp + hj * w3a[j:j + 1, :]
    out = x2 + adp + b2_ref[1:2, :]                         # + b_a3, residual

    # Store channel-major so the lane axis carries the (large) spatial dimension.
    o_ref[0, :, :] = jnp.transpose(out, (1, 0)).astype(o_ref.dtype)


# ------------------------------- wrapper -----------------------------------

def down_forward(x_nchw, p, matmul_dtype=jnp.float32):
    """Forward pass of Down (eval-mode BN); NCHW in, NCHW out."""
    eps = 1e-5
    N, Cin, H, W = x_nchw.shape
    Hp, Wp = H // 2, W // 2
    M = Hp * Wp
    Cmid = p['w_c1'].shape[-1]
    Cout = p['w_c2'].shape[-1]

    # NCHW -> NHWC, then stack the four elements of each 2x2 pooling window so the
    # in-kernel pool is three jnp.maximum ops (cheap VPU work under the matmuls).
    x = jnp.transpose(x_nchw, (0, 2, 3, 1))
    xw = (x.reshape(N, Hp, 2, Wp, 2, Cin)
           .transpose(0, 2, 4, 1, 3, 5)
           .reshape(N, 4, M, Cin))

    # Fold BatchNorm (inference) + conv bias into the conv weights / bias.
    s1 = p['g_bn1'] / jnp.sqrt(p['v_bn1'] + eps)
    b1 = (p['b_c1'] - p['m_bn1']) * s1 + p['be_bn1']
    w1 = (p['w_c1'] * s1).reshape(9, Cin, Cmid).astype(matmul_dtype)

    s2 = p['g_bn2'] / jnp.sqrt(p['v_bn2'] + eps)
    b2 = (p['b_c2'] - p['m_bn2']) * s2 + p['be_bn2']
    w2 = (p['w_c2'] * s2).reshape(9, Cmid, Cout).astype(matmul_dtype)

    # _SelfAdaption params repacked to (hidden=4, Cout); entry [j, c] acts on channel
    # group c, hidden unit j.  Coalesced into one (3, 4, Cout) operand.
    w1a = p['w_a1'].reshape(Cout, 4).T
    b1a = p['b_a1'].reshape(Cout, 4).T
    w3a = p['w_a3'].T
    adp_pack = jnp.stack([w1a, b1a, w3a], axis=0).astype(jnp.float32)   # (3, 4, Cout)
    bias_pack = jnp.stack([b2, p['b_a3']], axis=0).astype(jnp.float32)  # (2, Cout)

    pad_rows = M + 2 * (Wp + 1)
    kernel = functools.partial(_down_fused_kernel, Hp=Hp, Wp=Wp)
    out = pl.pallas_call(
        kernel,
        out_shape=jax.ShapeDtypeStruct((N, Cout, M), x_nchw.dtype),
        grid=(N,),
        in_specs=[
            pl.BlockSpec((1, 4, M, Cin), lambda n: (n, 0, 0, 0)),
            pl.BlockSpec((9, Cin, Cmid), lambda n: (0, 0, 0)),
            pl.BlockSpec((1, Cmid), lambda n: (0, 0)),
            pl.BlockSpec((9, Cmid, Cout), lambda n: (0, 0, 0)),
            pl.BlockSpec((2, Cout), lambda n: (0, 0)),
            pl.BlockSpec((3, 4, Cout), lambda n: (0, 0, 0)),
        ],
        out_specs=pl.BlockSpec((1, Cout, M), lambda n: (n, 0, 0)),
        scratch_shapes=[
            pltpu.VMEM((pad_rows, Cin), matmul_dtype),
            pltpu.VMEM((pad_rows, Cmid), matmul_dtype),
        ],
        compiler_params=pltpu.CompilerParams(
            dimension_semantics=("parallel",)),
    )(xw, w1, b1.reshape(1, Cmid).astype(jnp.float32), w2, bias_pack, adp_pack)

    return out.reshape(N, Cout, Hp, Wp)                 # channel-major == NCHW


# -------------------------- pure-JAX reference ------------------------------

def ref_down(x_nchw, p):
    eps = 1e-5
    dn = ('NHWC', 'HWIO', 'NHWC')
    x = jnp.transpose(x_nchw, (0, 2, 3, 1))
    x = lax.reduce_window(x, -jnp.inf, lax.max, (1, 2, 2, 1), (1, 2, 2, 1), 'VALID')
    y = lax.conv_general_dilated(x, p['w_c1'], (1, 1), 'SAME', dimension_numbers=dn) + p['b_c1']
    y = (y - p['m_bn1']) / jnp.sqrt(p['v_bn1'] + eps) * p['g_bn1'] + p['be_bn1']
    y = jnp.maximum(y, 0.0)
    y = lax.conv_general_dilated(y, p['w_c2'], (1, 1), 'SAME', dimension_numbers=dn) + p['b_c2']
    y = (y - p['m_bn2']) / jnp.sqrt(p['v_bn2'] + eps) * p['g_bn2'] + p['be_bn2']
    y = jnp.maximum(y, 0.0)
    Cout = y.shape[-1]
    h = jnp.maximum(y, 0.0)
    wa1 = p['w_a1'].reshape(1, 1, 1, 4 * Cout)
    z = lax.conv_general_dilated(h, wa1, (1, 1), 'VALID', dimension_numbers=dn,
                                 feature_group_count=Cout) + p['b_a1']
    z = jnp.maximum(z, 0.0)
    wa3 = jnp.transpose(p['w_a3'].reshape(Cout, 4, 1, 1), (2, 3, 1, 0))
    a = lax.conv_general_dilated(z, wa3, (1, 1), 'VALID', dimension_numbers=dn,
                                 feature_group_count=Cout) + p['b_a3']
    out = y + a
    return jnp.transpose(out, (0, 3, 1, 2))


# ---------------------------------- main ------------------------------------

if __name__ == "__main__":
    key = jax.random.PRNGKey(0)
    ks = jax.random.split(key, 20)

    N, Cin, H, W = 2, 4, 16, 16     # Down(in_channels=4, out_channels=8)
    Cout = 8
    Cmid = Cout                     # mid_channels defaults to out_channels

    x = jax.random.normal(ks[0], (N, Cin, H, W), jnp.float32)

    p = {
        # conv1 (3x3, Cin -> Cmid), HWIO
        'w_c1':  0.2 * jax.random.normal(ks[1], (3, 3, Cin, Cmid), jnp.float32),
        'b_c1':  0.1 * jax.random.normal(ks[2], (Cmid,), jnp.float32),
        'g_bn1': 0.5 + jax.random.uniform(ks[3], (Cmid,), jnp.float32),
        'be_bn1': 0.1 * jax.random.normal(ks[4], (Cmid,), jnp.float32),
        'm_bn1': 0.1 * jax.random.normal(ks[5], (Cmid,), jnp.float32),
        'v_bn1': 0.5 + jax.random.uniform(ks[6], (Cmid,), jnp.float32),
        # conv2 (3x3, Cmid -> Cout), HWIO
        'w_c2':  0.2 * jax.random.normal(ks[7], (3, 3, Cmid, Cout), jnp.float32),
        'b_c2':  0.1 * jax.random.normal(ks[8], (Cout,), jnp.float32),
        'g_bn2': 0.5 + jax.random.uniform(ks[9], (Cout,), jnp.float32),
        'be_bn2': 0.1 * jax.random.normal(ks[10], (Cout,), jnp.float32),
        'm_bn2': 0.1 * jax.random.normal(ks[11], (Cout,), jnp.float32),
        'v_bn2': 0.5 + jax.random.uniform(ks[12], (Cout,), jnp.float32),
        # _SelfAdaption: convs1 (grouped 1x1, Cout -> 4*Cout), convs3 (4*Cout -> Cout)
        'w_a1':  0.5 * jax.random.normal(ks[13], (4 * Cout,), jnp.float32),
        'b_a1':  0.1 * jax.random.normal(ks[14], (4 * Cout,), jnp.float32),
        'w_a3':  0.5 * jax.random.normal(ks[15], (Cout, 4), jnp.float32),
        'b_a3':  0.1 * jax.random.normal(ks[16], (Cout,), jnp.float32),
    }

    out = down_forward(x, p)          # matmul_dtype=jnp.bfloat16 on v6e/v7x if desired
    out = jax.block_until_ready(out)

    ref = jax.block_until_ready(ref_down(x, p))
    assert out.shape == (N, Cout, H // 2, W // 2), out.shape
    assert jnp.allclose(out, ref, atol=2e-4, rtol=2e-4), float(jnp.max(jnp.abs(out - ref)))

    print("KERNEL_OK")
</pallas_src>

<mosaic_0001>
module attributes {stable_mosaic.version = 11 : i64} {
  func.func @_down_fused_kernel(%arg0: i32, %arg1: memref<1x4x64x4xf32, #tpu.memory_space<vmem>>, %arg2: memref<9x4x8xf32, #tpu.memory_space<vmem>>, %arg3: memref<1x8xf32, #tpu.memory_space<vmem>>, %arg4: memref<9x8x8xf32, #tpu.memory_space<vmem>>, %arg5: memref<2x8xf32, #tpu.memory_space<vmem>>, %arg6: memref<3x4x8xf32, #tpu.memory_space<vmem>>, %arg7: memref<1x8x64xf32, #tpu.memory_space<vmem>>, %arg8: memref<82x4xf32, #tpu.memory_space<vmem>>, %arg9: memref<82x8xf32, #tpu.memory_space<vmem>>) attributes {dimension_semantics = [#tpu.dimension_semantics<parallel>], iteration_bounds = array<i64: 2>, scalar_prefetch = 0 : i64, scratch_operands = 2 : i64, tpu.core_type = #tpu.core_type<tc>, window_params = [{transform_indices = @transform_0, window_bounds = array<i64: 1, 4, 64, 4>}, {pipeline_mode = #tpu.pipeline_mode<synchronous>, transform_indices = @transform_1, window_bounds = array<i64: 9, 4, 8>}, {pipeline_mode = #tpu.pipeline_mode<synchronous>, transform_indices = @transform_2, window_bounds = array<i64: 1, 8>}, {pipeline_mode = #tpu.pipeline_mode<synchronous>, transform_indices = @transform_3, window_bounds = array<i64: 9, 8, 8>}, {pipeline_mode = #tpu.pipeline_mode<synchronous>, transform_indices = @transform_4, window_bounds = array<i64: 2, 8>}, {pipeline_mode = #tpu.pipeline_mode<synchronous>, transform_indices = @transform_5, window_bounds = array<i64: 3, 4, 8>}, {transform_indices = @transform_6, window_bounds = array<i64: 1, 8, 64>}]} {
    %c0 = arith.constant 0 : index
    %c0_0 = arith.constant 0 : index
    %c0_1 = arith.constant 0 : index
    %c0_2 = arith.constant 0 : index
    %0 = vector.load %arg1[%c0, %c0_0, %c0_1, %c0_2] : memref<1x4x64x4xf32, #tpu.memory_space<vmem>>, vector<1x1x64x4xf32>
    %1 = vector.shape_cast %0 : vector<1x1x64x4xf32> to vector<64x4xf32>
    %c0_3 = arith.constant 0 : index
    %c1 = arith.constant 1 : index
    %c0_4 = arith.constant 0 : index
    %c0_5 = arith.constant 0 : index
    %2 = vector.load %arg1[%c0_3, %c1, %c0_4, %c0_5] : memref<1x4x64x4xf32, #tpu.memory_space<vmem>>, vector<1x1x64x4xf32>
    %3 = vector.shape_cast %2 : vector<1x1x64x4xf32> to vector<64x4xf32>
    %4 = arith.maximumf %1, %3 : vector<64x4xf32>
    %c0_6 = arith.constant 0 : index
    %c2 = arith.constant 2 : index
    %c0_7 = arith.constant 0 : index
    %c0_8 = arith.constant 0 : index
    %5 = vector.load %arg1[%c0_6, %c2, %c0_7, %c0_8] : memref<1x4x64x4xf32, #tpu.memory_space<vmem>>, vector<1x1x64x4xf32>
    %6 = vector.shape_cast %5 : vector<1x1x64x4xf32> to vector<64x4xf32>
    %c0_9 = arith.constant 0 : index
    %c3 = arith.constant 3 : index
    %c0_10 = arith.constant 0 : index
    %c0_11 = arith.constant 0 : index
    %7 = vector.load %arg1[%c0_9, %c3, %c0_10, %c0_11] : memref<1x4x64x4xf32, #tpu.memory_space<vmem>>, vector<1x1x64x4xf32>
    %8 = vector.shape_cast %7 : vector<1x1x64x4xf32> to vector<64x4xf32>
    %9 = arith.maximumf %6, %8 : vector<64x4xf32>
    %10 = arith.maximumf %4, %9 : vector<64x4xf32>
    %11 = tpu.iota {dimensions = array<i32: 0>} : vector<64x1xi32>
    %c8_i32 = arith.constant 8 : i32
    %c0_i32 = arith.constant 0 : i32
    %12 = arith.cmpi eq, %c8_i32, %c0_i32 : i32
    %c1_i32 = arith.constant 1 : i32
    %13 = arith.select %12, %c1_i32, %c8_i32 : i32
    %14 = vector.broadcast %13 : i32 to vector<64x1xi32>
    %15 = arith.remsi %11, %14 : vector<64x1xi32>
    %c0_i32_12 = arith.constant 0 : i32
    %16 = vector.broadcast %c0_i32_12 : i32 to vector<64x1xi32>
    %17 = arith.cmpi ne, %15, %16 : vector<64x1xi32>
    %c0_i32_13 = arith.constant 0 : i32
    %18 = vector.broadcast %c0_i32_13 : i32 to vector<64x1xi32>
    %19 = arith.cmpi slt, %15, %18 : vector<64x1xi32>
    %c0_i32_14 = arith.constant 0 : i32
    %20 = arith.cmpi slt, %13, %c0_i32_14 : i32
    %21 = vector.broadcast %20 : i1 to vector<64x1xi1>
    %22 = vector.broadcast %21 : vector<64x1xi1> to vector<64x1xi1>
    %23 = arith.xori %19, %22 : vector<64x1xi1>
    %24 = arith.andi %23, %17 : vector<64x1xi1>
    %25 = vector.broadcast %13 : i32 to vector<64x1xi32>
    %26 = arith.addi %15, %25 : vector<64x1xi32>
    %27 = arith.select %24, %26, %15 : vector<64x1xi1>, vector<64x1xi32>
    %c0_i32_15 = arith.constant 0 : i32
    %28 = vector.broadcast %c0_i32_15 : i32 to vector<64x1xi32>
    %29 = arith.cmpi eq, %27, %28 : vector<64x1xi32>
    %c7_i32 = arith.constant 7 : i32
    %30 = vector.broadcast %c7_i32 : i32 to vector<64x1xi32>
    %31 = arith.cmpi eq, %27, %30 : vector<64x1xi32>
    %cst = arith.constant 0.000000e+00 : f32
    %32 = vector.broadcast %cst : f32 to vector<9x4xf32>
    %c0_16 = arith.constant 0 : index
    %c0_17 = arith.constant 0 : index
    %33 = vector.load %arg8[%c0_16, %c0_17] : memref<82x4xf32, #tpu.memory_space<vmem>>, vector<9x4xf32>
    tpu.vector_store %arg8[%c0_16, %c0_17], %32 {strides = array<i32>} : memref<82x4xf32, #tpu.memory_space<vmem>>, vector<9x4xf32>,
    %c9 = arith.constant 9 : index
    %c0_18 = arith.constant 0 : index
    %34 = vector.load %arg8[%c9, %c0_18] : memref<82x4xf32, #tpu.memory_space<vmem>>, vector<64x4xf32>
    tpu.vector_store %arg8[%c9, %c0_18], %10 {strides = array<i32>} : memref<82x4xf32, #tpu.memory_space<vmem>>, vector<64x4xf32>,
    %cst_19 = arith.constant 0.000000e+00 : f32
    %35 = vector.broadcast %cst_19 : f32 to vector<9x4xf32>
    %c73 = arith.constant 73 : index
    %c0_20 = arith.constant 0 : index
    %36 = vector.load %arg8[%c73, %c0_20] : memref<82x4xf32, #tpu.memory_space<vmem>>, vector<9x4xf32>
    tpu.vector_store %arg8[%c73, %c0_20], %35 {strides = array<i32>} : memref<82x4xf32, #tpu.memory_space<vmem>>, vector<9x4xf32>,
    %cst_21 = arith.constant 0.000000e+00 : f32
    %37 = vector.broadcast %cst_21 : f32 to vector<64x8xf32>
    %cst_22 = arith.constant 0.000000e+00 : f32
    %38 = vector.broadcast %cst_22 : f32 to vector<64x8xf32>
    %c0_23 = arith.constant 0 : index
    %c0_24 = arith.constant 0 : index
    %39 = vector.load %arg8[%c0_23, %c0_24] : memref<82x4xf32, #tpu.memory_space<vmem>>, vector<64x4xf32>
    %c0_25 = arith.constant 0 : index
    %c0_26 = arith.constant 0 : index
    %c0_27 = arith.constant 0 : index
    %40 = vector.load %arg2[%c0_25, %c0_26, %c0_27] : memref<9x4x8xf32, #tpu.memory_space<vmem>>, vector<1x4x8xf32>
    %41 = vector.shape_cast %40 : vector<1x4x8xf32> to vector<4x8xf32>
    %cst_28 = arith.constant dense<0.000000e+00> : vector<64x8xf32>
    %42 = tpu.matmul %39, %41, %cst_28 {dimension_numbers = #tpu.dot_dimension_numbers<[1], [0], [0], [1], [0, 0, 1, 1], [], []>} : vector<64x4xf32>, vector<4x8xf32>, vector<64x8xf32> -> vector<64x8xf32>
    %43 = arith.addf %38, %42 : vector<64x8xf32>
    %c8 = arith.constant 8 : index
    %c0_29 = arith.constant 0 : index
    %44 = vector.load %arg8[%c8, %c0_29] : memref<82x4xf32, #tpu.memory_space<vmem>>, vector<64x4xf32>
    %c3_30 = arith.constant 3 : index
    %c0_31 = arith.constant 0 : index
    %c0_32 = arith.constant 0 : index
    %45 = vector.load %arg2[%c3_30, %c0_31, %c0_32] : memref<9x4x8xf32, #tpu.memory_space<vmem>>, vector<1x4x8xf32>
    %46 = vector.shape_cast %45 : vector<1x4x8xf32> to vector<4x8xf32>
    %cst_33 = arith.constant dense<0.000000e+00> : vector<64x8xf32>
    %47 = tpu.matmul %44, %46, %cst_33 {dimension_numbers = #tpu.dot_dimension_numbers<[1], [0], [0], [1], [0, 0, 1, 1], [], []>} : vector<64x4xf32>, vector<4x8xf32>, vector<64x8xf32> -> vector<64x8xf32>
    %48 = arith.addf %43, %47 : vector<64x8xf32>
    %c16 = arith.constant 16 : index
    %c0_34 = arith.constant 0 : index
    %49 = vector.load %arg8[%c16, %c0_34] : memref<82x4xf32, #tpu.memory_space<vmem>>, vector<64x4xf32>
    %c6 = arith.constant 6 : index
    %c0_35 = arith.constant 0 : index
    %c0_36 = arith.constant 0 : index
    %50 = vector.load %arg2[%c6, %c0_35, %c0_36] : memref<9x4x8xf32, #tpu.memory_space<vmem>>, vector<1x4x8xf32>
    %51 = vector.shape_cast %50 : vector<1x4x8xf32> to vector<4x8xf32>
    %cst_37 = arith.constant dense<0.000000e+00> : vector<64x8xf32>
    %52 = tpu.matmul %49, %51, %cst_37 {dimension_numbers = #tpu.dot_dimension_numbers<[1], [0], [0], [1], [0, 0, 1, 1], [], []>} : vector<64x4xf32>, vector<4x8xf32>, vector<64x8xf32> -> vector<64x8xf32>
    %53 = arith.addf %48, %52 : vector<64x8xf32>
    %cst_38 = arith.constant 0.000000e+00 : f32
    %54 = vector.shape_cast %29 : vector<64x1xi1> to vector<64x1xi1>
    %55 = vector.broadcast %54 : vector<64x1xi1> to vector<64x8xi1>
    %56 = vector.broadcast %cst_38 : f32 to vector<64x8xf32>
    %57 = arith.select %55, %56, %53 : vector<64x8xi1>, vector<64x8xf32>
    %58 = arith.addf %37, %57 : vector<64x8xf32>
    %cst_39 = arith.constant 0.000000e+00 : f32
    %59 = vector.broadcast %cst_39 : f32 to vector<64x8xf32>
    %c1_40 = arith.constant 1 : index
    %c0_41 = arith.constant 0 : index
    %60 = vector.load %arg8[%c1_40, %c0_41] : memref<82x4xf32, #tpu.memory_space<vmem>>, vector<64x4xf32>
    %c1_42 = arith.constant 1 : index
    %c0_43 = arith.constant 0 : index
    %c0_44 = arith.constant 0 : index
    %61 = vector.load %arg2[%c1_42, %c0_43, %c0_44] : memref<9x4x8xf32, #tpu.memory_space<vmem>>, vector<1x4x8xf32>
    %62 = vector.shape_cast %61 : vector<1x4x8xf32> to vector<4x8xf32>
    %cst_45 = arith.constant dense<0.000000e+00> : vector<64x8xf32>
    %63 = tpu.matmul %60, %62, %cst_45 {dimension_numbers = #tpu.dot_dimension_numbers<[1], [0], [0], [1], [0, 0, 1, 1], [], []>} : vector<64x4xf32>, vector<4x8xf32>, vector<64x8xf32> -> vector<64x8xf32>
    %64 = arith.addf %59, %63 : vector<64x8xf32>
    %c9_46 = arith.constant 9 : index
    %c0_47 = arith.constant 0 : index
    %65 = vector.load %arg8[%c9_46, %c0_47] : memref<82x4xf32, #tpu.memory_space<vmem>>, vector<64x4xf32>
    %c4 = arith.constant 4 : index
    %c0_48 = arith.constant 0 : index
    %c0_49 = arith.constant 0 : index
    %66 = vector.load %arg2[%c4, %c0_48, %c0_49] : memref<9x4x8xf32, #tpu.memory_space<vmem>>, vector<1x4x8xf32>
    %67 = vector.shape_cast %66 : vector<1x4x8xf32> to vector<4x8xf32>
    %cst_50 = arith.constant dense<0.000000e+00> : vector<64x8xf32>
    %68 = tpu.matmul %65, %67, %cst_50 {dimension_numbers = #tpu.dot_dimension_numbers<[1], [0], [0], [1], [0, 0, 1, 1], [], []>} : vector<64x4xf32>, vector<4x8xf32>, vector<64x8xf32> -> vector<64x8xf32>
    %69 = arith.addf %64, %68 : vector<64x8xf32>
    %c17 = arith.constant 17 : index
    %c0_51 = arith.constant 0 : index
    %70 = vector.load %arg8[%c17, %c0_51] : memref<82x4xf32, #tpu.memory_space<vmem>>, vector<64x4xf32>
    %c7 = arith.constant 7 : index
    %c0_52 = arith.constant 0 : index
    %c0_53 = arith.constant 0 : index
    %71 = vector.load %arg2[%c7, %c0_52, %c0_53] : memref<9x4x8xf32, #tpu.memory_space<vmem>>, vector<1x4x8xf32>
    %72 = vector.shape_cast %71 : vector<1x4x8xf32> to vector<4x8xf32>
    %cst_54 = arith.constant dense<0.000000e+00> : vector<64x8xf32>
    %73 = tpu.matmul %70, %72, %cst_54 {dimension_numbers = #tpu.dot_dimension_numbers<[1], [0], [0], [1], [0, 0, 1, 1], [], []>} : vector<64x4xf32>, vector<4x8xf32>, vector<64x8xf32> -> vector<64x8xf32>
    %74 = arith.addf %69, %73 : vector<64x8xf32>
    %75 = arith.addf %58, %74 : vector<64x8xf32>
    %cst_55 = arith.constant 0.000000e+00 : f32
    %76 = vector.broadcast %cst_55 : f32 to vector<64x8xf32>
    %c2_56 = arith.constant 2 : index
    %c0_57 = arith.constant 0 : index
    %77 = vector.load %arg8[%c2_56, %c0_57] : memref<82x4xf32, #tpu.memory_space<vmem>>, vector<64x4xf32>
    %c2_58 = arith.constant 2 : index
    %c0_59 = arith.constant 0 : index
    %c0_60 = arith.constant 0 : index
    %78 = vector.load %arg2[%c2_58, %c0_59, %c0_60] : memref<9x4x8xf32, #tpu.memory_space<vmem>>, vector<1x4x8xf32>
    %79 = vector.shape_cast %78 : vector<1x4x8xf32> to vector<4x8xf32>
    %cst_61 = arith.constant dense<0.000000e+00> : vector<64x8xf32>
    %80 = tpu.matmul %77, %79, %cst_61 {dimension_numbers = #tpu.dot_dimension_numbers<[1], [0], [0], [1], [0, 0, 1, 1], [], []>} : vector<64x4xf32>, vector<4x8xf32>, vector<64x8xf32> -> vector<64x8xf32>
    %81 = arith.addf %76, %80 : vector<64x8xf32>
    %c10 = arith.constant 10 : index
    %c0_62 = arith.constant 0 : index
    %82 = vector.load %arg8[%c10, %c0_62] : memref<82x4xf32, #tpu.memory_space<vmem>>, vector<64x4xf32>
    %c5 = arith.constant 5 : index
    %c0_63 = arith.constant 0 : index
    %c0_64 = arith.constant 0 : index
    %83 = vector.load %arg2[%c5, %c0_63, %c0_64] : memref<9x4x8xf32, #tpu.memory_space<vmem>>, vector<1x4x8xf32>
    %84 = vector.shape_cast %83 : vector<1x4x8xf32> to vector<4x8xf32>
    %cst_65 = arith.constant dense<0.000000e+00> : vector<64x8xf32>
    %85 = tpu.matmul %82, %84, %cst_65 {dimension_numbers = #tpu.dot_dimension_numbers<[1], [0], [0], [1], [0, 0, 1, 1], [], []>} : vector<64x4xf32>, vector<4x8xf32>, vector<64x8xf32> -> vector<64x8xf32>
    %86 = arith.addf %81, %85 : vector<64x8xf32>
    %c18 = arith.constant 18 : index
    %c0_66 = arith.constant 0 : index
    %87 = vector.load %arg8[%c18, %c0_66] : memref<82x4xf32, #tpu.memory_space<vmem>>, vector<64x4xf32>
    %c8_67 = arith.constant 8 : index
    %c0_68 = arith.constant 0 : index
    %c0_69 = arith.constant 0 : index
    %88 = vector.load %arg2[%c8_67, %c0_68, %c0_69] : memref<9x4x8xf32, #tpu.memory_space<vmem>>, vector<1x4x8xf32>
    %89 = vector.shape_cast %88 : vector<1x4x8xf32> to vector<4x8xf32>
    %cst_70 = arith.constant dense<0.000000e+00> : vector<64x8xf32>
    %90 = tpu.matmul %87, %89, %cst_70 {dimension_numbers = #tpu.dot_dimension_numbers<[1], [0], [0], [1], [0, 0, 1, 1], [], []>} : vector<64x4xf32>, vector<4x8xf32>, vector<64x8xf32> -> vector<64x8xf32>
    %91 = arith.addf %86, %90 : vector<64x8xf32>
    %cst_71 = arith.constant 0.000000e+00 : f32
    %92 = vector.shape_cast %31 : vector<64x1xi1> to vector<64x1xi1>
    %93 = vector.broadcast %92 : vector<64x1xi1> to vector<64x8xi1>
    %94 = vector.broadcast %cst_71 : f32 to vector<64x8xf32>
    %95 = arith.select %93, %94, %91 : vector<64x8xi1>, vector<64x8xf32>
    %96 = arith.addf %75, %95 : vector<64x8xf32>
    %c0_72 = arith.constant 0 : index
    %c0_73 = arith.constant 0 : index
    %97 = vector.load %arg3[%c0_72, %c0_73] : memref<1x8xf32, #tpu.memory_space<vmem>>, vector<1x8xf32>
    %98 = vector.broadcast %97 : vector<1x8xf32> to vector<64x8xf32>
    %99 = arith.addf %96, %98 : vector<64x8xf32>
    %cst_74 = arith.constant 0.000000e+00 : f32
    %100 = vector.broadcast %cst_74 : f32 to vector<64x8xf32>
    %101 = arith.maximumf %99, %100 : vector<64x8xf32>
    %cst_75 = arith.constant 0.000000e+00 : f32
    %102 = vector.broadcast %cst_75 : f32 to vector<9x8xf32>
    %c0_76 = arith.constant 0 : index
    %c0_77 = arith.constant 0 : index
    %103 = vector.load %arg9[%c0_76, %c0_77] : memref<82x8xf32, #tpu.memory_space<vmem>>, vector<9x8xf32>
    tpu.vector_store %arg9[%c0_76, %c0_77], %102 {strides = array<i32>} : memref<82x8xf32, #tpu.memory_space<vmem>>, vector<9x8xf32>,
    %c9_78 = arith.constant 9 : index
    %c0_79 = arith.constant 0 : index
    %104 = vector.load %arg9[%c9_78, %c0_79] : memref<82x8xf32, #tpu.memory_space<vmem>>, vector<64x8xf32>
    tpu.vector_store %arg9[%c9_78, %c0_79], %101 {strides = array<i32>} : memref<82x8xf32, #tpu.memory_space<vmem>>, vector<64x8xf32>,
    %cst_80 = arith.constant 0.000000e+00 : f32
    %105 = vector.broadcast %cst_80 : f32 to vector<9x8xf32>
    %c73_81 = arith.constant 73 : index
    %c0_82 = arith.constant 0 : index
    %106 = vector.load %arg9[%c73_81, %c0_82] : memref<82x8xf32, #tpu.memory_space<vmem>>, vector<9x8xf32>
    tpu.vector_store %arg9[%c73_81, %c0_82], %105 {strides = array<i32>} : memref<82x8xf32, #tpu.memory_space<vmem>>, vector<9x8xf32>,
    %cst_83 = arith.constant 0.000000e+00 : f32
    %107 = vector.broadcast %cst_83 : f32 to vector<64x8xf32>
    %cst_84 = arith.constant 0.000000e+00 : f32
    %108 = vector.broadcast %cst_84 : f32 to vector<64x8xf32>
    %c0_85 = arith.constant 0 : index
    %c0_86 = arith.constant 0 : index
    %109 = vector.load %arg9[%c0_85, %c0_86] : memref<82x8xf32, #tpu.memory_space<vmem>>, vector<64x8xf32>
    %c0_87 = arith.constant 0 : index
    %c0_88 = arith.constant 0 : index
    %c0_89 = arith.constant 0 : index
    %110 = vector.load %arg4[%c0_87, %c0_88, %c0_89] : memref<9x8x8xf32, #tpu.memory_space<vmem>>, vector<1x8x8xf32>
    %111 = vector.shape_cast %110 : vector<1x8x8xf32> to vector<8x8xf32>
    %cst_90 = arith.constant dense<0.000000e+00> : vector<64x8xf32>
    %112 = tpu.matmul %109, %111, %cst_90 {dimension_numbers = #tpu.dot_dimension_numbers<[1], [0], [0], [1], [0, 0, 1, 1], [], []>} : vector<64x8xf32>, vector<8x8xf32>, vector<64x8xf32> -> vector<64x8xf32>
    %113 = arith.addf %108, %112 : vector<64x8xf32>
    %c8_91 = arith.constant 8 : index
    %c0_92 = arith.constant 0 : index
    %114 = vector.load %arg9[%c8_91, %c0_92] : memref<82x8xf32, #tpu.memory_space<vmem>>, vector<64x8xf32>
    %c3_93 = arith.constant 3 : index
    %c0_94 = arith.constant 0 : index
    %c0_95 = arith.constant 0 : index
    %115 = vector.load %arg4[%c3_93, %c0_94, %c0_95] : memref<9x8x8xf32, #tpu.memory_space<vmem>>, vector<1x8x8xf32>
    %116 = vector.shape_cast %115 : vector<1x8x8xf32> to vector<8x8xf32>
    %cst_96 = arith.constant dense<0.000000e+00> : vector<64x8xf32>
    %117 = tpu.matmul %114, %116, %cst_96 {dimension_numbers = #tpu.dot_dimension_numbers<[1], [0], [0], [1], [0, 0, 1, 1], [], []>} : vector<64x8xf32>, vector<8x8xf32>, vector<64x8xf32> -> vector<64x8xf32>
    %118 = arith.addf %113, %117 : vector<64x8xf32>
    %c16_97 = arith.constant 16 : index
    %c0_98 = arith.constant 0 : index
    %119 = vector.load %arg9[%c16_97, %c0_98] : memref<82x8xf32, #tpu.memory_space<vmem>>, vector<64x8xf32>
    %c6_99 = arith.constant 6 : index
    %c0_100 = arith.constant 0 : index
    %c0_101 = arith.constant 0 : index
    %120 = vector.load %arg4[%c6_99, %c0_100, %c0_101] : memref<9x8x8xf32, #tpu.memory_space<vmem>>, vector<1x8x8xf32>
    %121 = vector.shape_cast %120 : vector<1x8x8xf32> to vector<8x8xf32>
    %cst_102 = arith.constant dense<0.000000e+00> : vector<64x8xf32>
    %122 = tpu.matmul %119, %121, %cst_102 {dimension_numbers = #tpu.dot_dimension_numbers<[1], [0], [0], [1], [0, 0, 1, 1], [], []>} : vector<64x8xf32>, vector<8x8xf32>, vector<64x8xf32> -> vector<64x8xf32>
    %123 = arith.addf %118, %122 : vector<64x8xf32>
    %cst_103 = arith.constant 0.000000e+00 : f32
    %124 = vector.shape_cast %29 : vector<64x1xi1> to vector<64x1xi1>
    %125 = vector.broadcast %124 : vector<64x1xi1> to vector<64x8xi1>
    %126 = vector.broadcast %cst_103 : f32 to vector<64x8xf32>
    %127 = arith.select %125, %126, %123 : vector<64x8xi1>, vector<64x8xf32>
    %128 = arith.addf %107, %127 : vector<64x8xf32>
    %cst_104 = arith.constant 0.000000e+00 : f32
    %129 = vector.broadcast %cst_104 : f32 to vector<64x8xf32>
    %c1_105 = arith.constant 1 : index
    %c0_106 = arith.constant 0 : index
    %130 = vector.load %arg9[%c1_105, %c0_106] : memref<82x8xf32, #tpu.memory_space<vmem>>, vector<64x8xf32>
    %c1_107 = arith.constant 1 : index
    %c0_108 = arith.constant 0 : index
    %c0_109 = arith.constant 0 : index
    %131 = vector.load %arg4[%c1_107, %c0_108, %c0_109] : memref<9x8x8xf32, #tpu.memory_space<vmem>>, vector<1x8x8xf32>
    %132 = vector.shape_cast %131 : vector<1x8x8xf32> to vector<8x8xf32>
    %cst_110 = arith.constant dense<0.000000e+00> : vector<64x8xf32>
    %133 = tpu.matmul %130, %132, %cst_110 {dimension_numbers = #tpu.dot_dimension_numbers<[1], [0], [0], [1], [0, 0, 1, 1], [], []>} : vector<64x8xf32>, vector<8x8xf32>, vector<64x8xf32> -> vector<64x8xf32>
    %134 = arith.addf %129, %133 : vector<64x8xf32>
    %c9_111 = arith.constant 9 : index
    %c0_112 = arith.constant 0 : index
    %135 = vector.load %arg9[%c9_111, %c0_112] : memref<82x8xf32, #tpu.memory_space<vmem>>, vector<64x8xf32>
    %c4_113 = arith.constant 4 : index
    %c0_114 = arith.constant 0 : index
    %c0_115 = arith.constant 0 : index
    %136 = vector.load %arg4[%c4_113, %c0_114, %c0_115] : memref<9x8x8xf32, #tpu.memory_space<vmem>>, vector<1x8x8xf32>
    %137 = vector.shape_cast %136 : vector<1x8x8xf32> to vector<8x8xf32>
    %cst_116 = arith.constant dense<0.000000e+00> : vector<64x8xf32>
    %138 = tpu.matmul %135, %137, %cst_116 {dimension_numbers = #tpu.dot_dimension_numbers<[1], [0], [0], [1], [0, 0, 1, 1], [], []>} : vector<64x8xf32>, vector<8x8xf32>, vector<64x8xf32> -> vector<64x8xf32>
    %139 = arith.addf %134, %138 : vector<64x8xf32>
    %c17_117 = arith.constant 17 : index
    %c0_118 = arith.constant 0 : index
    %140 = vector.load %arg9[%c17_117, %c0_118] : memref<82x8xf32, #tpu.memory_space<vmem>>, vector<64x8xf32>
    %c7_119 = arith.constant 7 : index
    %c0_120 = arith.constant 0 : index
    %c0_121 = arith.constant 0 : index
    %141 = vector.load %arg4[%c7_119, %c0_120, %c0_121] : memref<9x8x8xf32, #tpu.memory_space<vmem>>, vector<1x8x8xf32>
    %142 = vector.shape_cast %141 : vector<1x8x8xf32> to vector<8x8xf32>
    %cst_122 = arith.constant dense<0.000000e+00> : vector<64x8xf32>
    %143 = tpu.matmul %140, %142, %cst_122 {dimension_numbers = #tpu.dot_dimension_numbers<[1], [0], [0], [1], [0, 0, 1, 1], [], []>} : vector<64x8xf32>, vector<8x8xf32>, vector<64x8xf32> -> vector<64x8xf32>
    %144 = arith.addf %139, %143 : vector<64x8xf32>
    %145 = arith.addf %128, %144 : vector<64x8xf32>
    %cst_123 = arith.constant 0.000000e+00 : f32
    %146 = vector.broadcast %cst_123 : f32 to vector<64x8xf32>
    %c2_124 = arith.constant 2 : index
    %c0_125 = arith.constant 0 : index
    %147 = vector.load %arg9[%c2_124, %c0_125] : memref<82x8xf32, #tpu.memory_space<vmem>>, vector<64x8xf32>
    %c2_126 = arith.constant 2 : index
    %c0_127 = arith.constant 0 : index
    %c0_128 = arith.constant 0 : index
    %148 = vector.load %arg4[%c2_126, %c0_127, %c0_128] : memref<9x8x8xf32, #tpu.memory_space<vmem>>, vector<1x8x8xf32>
    %149 = vector.shape_cast %148 : vector<1x8x8xf32> to vector<8x8xf32>
    %cst_129 = arith.constant dense<0.000000e+00> : vector<64x8xf32>
    %150 = tpu.matmul %147, %149, %cst_129 {dimension_numbers = #tpu.dot_dimension_numbers<[1], [0], [0], [1], [0, 0, 1, 1], [], []>} : vector<64x8xf32>, vector<8x8xf32>, vector<64x8xf32> -> vector<64x8xf32>
    %151 = arith.addf %146, %150 : vector<64x8xf32>
    %c10_130 = arith.constant 10 : index
    %c0_131 = arith.constant 0 : index
    %152 = vector.load %arg9[%c10_130, %c0_131] : memref<82x8xf32, #tpu.memory_space<vmem>>, vector<64x8xf32>
    %c5_132 = arith.constant 5 : index
    %c0_133 = arith.constant 0 : index
    %c0_134 = arith.constant 0 : index
    %153 = vector.load %arg4[%c5_132, %c0_133, %c0_134] : memref<9x8x8xf32, #tpu.memory_space<vmem>>, vector<1x8x8xf32>
    %154 = vector.shape_cast %153 : vector<1x8x8xf32> to vector<8x8xf32>
    %cst_135 = arith.constant dense<0.000000e+00> : vector<64x8xf32>
    %155 = tpu.matmul %152, %154, %cst_135 {dimension_numbers = #tpu.dot_dimension_numbers<[1], [0], [0], [1], [0, 0, 1, 1], [], []>} : vector<64x8xf32>, vector<8x8xf32>, vector<64x8xf32> -> vector<64x8xf32>
    %156 = arith.addf %151, %155 : vector<64x8xf32>
    %c18_136 = arith.constant 18 : index
    %c0_137 = arith.constant 0 : index
    %157 = vector.load %arg9[%c18_136, %c0_137] : memref<82x8xf32, #tpu.memory_space<vmem>>, vector<64x8xf32>
    %c8_138 = arith.constant 8 : index
    %c0_139 = arith.constant 0 : index
    %c0_140 = arith.constant 0 : index
    %158 = vector.load %arg4[%c8_138, %c0_139, %c0_140] : memref<9x8x8xf32, #tpu.memory_space<vmem>>, vector<1x8x8xf32>
    %159 = vector.shape_cast %158 : vector<1x8x8xf32> to vector<8x8xf32>
    %cst_141 = arith.constant dense<0.000000e+00> : vector<64x8xf32>
    %160 = tpu.matmul %157, %159, %cst_141 {dimension_numbers = #tpu.dot_dimension_numbers<[1], [0], [0], [1], [0, 0, 1, 1], [], []>} : vector<64x8xf32>, vector<8x8xf32>, vector<64x8xf32> -> vector<64x8xf32>
    %161 = arith.addf %156, %160 : vector<64x8xf32>
    %cst_142 = arith.constant 0.000000e+00 : f32
    %162 = vector.shape_cast %31 : vector<64x1xi1> to vector<64x1xi1>
    %163 = vector.broadcast %162 : vector<64x1xi1> to vector<64x8xi1>
    %164 = vector.broadcast %cst_142 : f32 to vector<64x8xf32>
    %165 = arith.select %163, %164, %161 : vector<64x8xi1>, vector<64x8xf32>
    %166 = arith.addf %145, %165 : vector<64x8xf32>
    %c0_143 = arith.constant 0 : index
    %c0_144 = arith.constant 0 : index
    %167 = vector.load %arg5[%c0_143, %c0_144] : memref<2x8xf32, #tpu.memory_space<vmem>>, vector<1x8xf32>
    %168 = vector.broadcast %167 : vector<1x8xf32> to vector<64x8xf32>
    %169 = arith.addf %166, %168 : vector<64x8xf32>
    %cst_145 = arith.constant 0.000000e+00 : f32
    %170 = vector.broadcast %cst_145 : f32 to vector<64x8xf32>
    %171 = arith.maximumf %169, %170 : vector<64x8xf32>
    %c0_146 = arith.constant 0 : index
    %c0_147 = arith.constant 0 : index
    %c0_148 = arith.constant 0 : index
    %172 = vector.load %arg6[%c0_146, %c0_147, %c0_148] : memref<3x4x8xf32, #tpu.memory_space<vmem>>, vector<3x4x8xf32>
    %173 = vector.extract_strided_slice %172 {offsets = [0, 0, 0], sizes = [1, 4, 8], strides = [1, 1, 1]} : vector<3x4x8xf32> to vector<1x4x8xf32>
    %174 = vector.shape_cast %173 : vector<1x4x8xf32> to vector<4x8xf32>
    %175 = vector.extract_strided_slice %172 {offsets = [1, 0, 0], sizes = [1, 4, 8], strides = [1, 1, 1]} : vector<3x4x8xf32> to vector<1x4x8xf32>
    %176 = vector.shape_cast %175 : vector<1x4x8xf32> to vector<4x8xf32>
    %177 = vector.extract_strided_slice %172 {offsets = [2, 0, 0], sizes = [1, 4, 8], strides = [1, 1, 1]} : vector<3x4x8xf32> to vector<1x4x8xf32>
    %178 = vector.shape_cast %177 : vector<1x4x8xf32> to vector<4x8xf32>
    %cst_149 = arith.constant 0.000000e+00 : f32
    %179 = vector.broadcast %cst_149 : f32 to vector<64x8xf32>
    %180 = vector.extract_strided_slice %174 {offsets = [0, 0], sizes = [1, 8], strides = [1, 1]} : vector<4x8xf32> to vector<1x8xf32>
    %181 = vector.broadcast %180 : vector<1x8xf32> to vector<64x8xf32>
    %182 = arith.mulf %171, %181 : vector<64x8xf32>
    %183 = vector.extract_strided_slice %176 {offsets = [0, 0], sizes = [1, 8], strides = [1, 1]} : vector<4x8xf32> to vector<1x8xf32>
    %184 = vector.broadcast %183 : vector<1x8xf32> to vector<64x8xf32>
    %185 = arith.addf %182, %184 : vector<64x8xf32>
    %cst_150 = arith.constant 0.000000e+00 : f32
    %186 = vector.broadcast %cst_150 : f32 to vector<64x8xf32>
    %187 = arith.maximumf %185, %186 : vector<64x8xf32>
    %188 = vector.extract_strided_slice %178 {offsets = [0, 0], sizes = [1, 8], strides = [1, 1]} : vector<4x8xf32> to vector<1x8xf32>
    %189 = vector.broadcast %188 : vector<1x8xf32> to vector<64x8xf32>
    %190 = arith.mulf %187, %189 : vector<64x8xf32>
    %191 = arith.addf %179, %190 : vector<64x8xf32>
    %192 = vector.extract_strided_slice %174 {offsets = [1, 0], sizes = [1, 8], strides = [1, 1]} : vector<4x8xf32> to vector<1x8xf32>
    %193 = vector.broadcast %192 : vector<1x8xf32> to vector<64x8xf32>
    %194 = arith.mulf %171, %193 : vector<64x8xf32>
    %195 = vector.extract_strided_slice %176 {offsets = [1, 0], sizes = [1, 8], strides = [1, 1]} : vector<4x8xf32> to vector<1x8xf32>
    %196 = vector.broadcast %195 : vector<1x8xf32> to vector<64x8xf32>
    %197 = arith.addf %194, %196 : vector<64x8xf32>
    %cst_151 = arith.constant 0.000000e+00 : f32
    %198 = vector.broadcast %cst_151 : f32 to vector<64x8xf32>
    %199 = arith.maximumf %197, %198 : vector<64x8xf32>
    %200 = vector.extract_strided_slice %178 {offsets = [1, 0], sizes = [1, 8], strides = [1, 1]} : vector<4x8xf32> to vector<1x8xf32>
    %201 = vector.broadcast %200 : vector<1x8xf32> to vector<64x8xf32>
    %202 = arith.mulf %199, %201 : vector<64x8xf32>
    %203 = arith.addf %191, %202 : vector<64x8xf32>
    %204 = vector.extract_strided_slice %174 {offsets = [2, 0], sizes = [1, 8], strides = [1, 1]} : vector<4x8xf32> to vector<1x8xf32>
    %205 = vector.broadcast %204 : vector<1x8xf32> to vector<64x8xf32>
    %206 = arith.mulf %171, %205 : vector<64x8xf32>
    %207 = vector.extract_strided_slice %176 {offsets = [2, 0], sizes = [1, 8], strides = [1, 1]} : vector<4x8xf32> to vector<1x8xf32>
    %208 = vector.broadcast %207 : vector<1x8xf32> to vector<64x8xf32>
    %209 = arith.addf %206, %208 : vector<64x8xf32>
    %cst_152 = arith.constant 0.000000e+00 : f32
    %210 = vector.broadcast %cst_152 : f32 to vector<64x8xf32>
    %211 = arith.maximumf %209, %210 : vector<64x8xf32>
    %212 = vector.extract_strided_slice %178 {offsets = [2, 0], sizes = [1, 8], strides = [1, 1]} : vector<4x8xf32> to vector<1x8xf32>
    %213 = vector.broadcast %212 : vector<1x8xf32> to vector<64x8xf32>
    %214 = arith.mulf %211, %213 : vector<64x8xf32>
    %215 = arith.addf %203, %214 : vector<64x8xf32>
    %216 = vector.extract_strided_slice %174 {offsets = [3, 0], sizes = [1, 8], strides = [1, 1]} : vector<4x8xf32> to vector<1x8xf32>
    %217 = vector.broadcast %216 : vector<1x8xf32> to vector<64x8xf32>
    %218 = arith.mulf %171, %217 : vector<64x8xf32>
    %219 = vector.extract_strided_slice %176 {offsets = [3, 0], sizes = [1, 8], strides = [1, 1]} : vector<4x8xf32> to vector<1x8xf32>
    %220 = vector.broadcast %219 : vector<1x8xf32> to vector<64x8xf32>
    %221 = arith.addf %218, %220 : vector<64x8xf32>
    %cst_153 = arith.constant 0.000000e+00 : f32
    %222 = vector.broadcast %cst_153 : f32 to vector<64x8xf32>
    %223 = arith.maximumf %221, %222 : vector<64x8xf32>
    %224 = vector.extract_strided_slice %178 {offsets = [3, 0], sizes = [1, 8], strides = [1, 1]} : vector<4x8xf32> to vector<1x8xf32>
    %225 = vector.broadcast %224 : vector<1x8xf32> to vector<64x8xf32>
    %226 = arith.mulf %223, %225 : vector<64x8xf32>
    %227 = arith.addf %215, %226 : vector<64x8xf32>
    %228 = arith.addf %171, %227 : vector<64x8xf32>
    %c1_154 = arith.constant 1 : index
    %c0_155 = arith.constant 0 : index
    %229 = vector.load %arg5[%c1_154, %c0_155] : memref<2x8xf32, #tpu.memory_space<vmem>>, vector<1x8xf32>
    %230 = vector.broadcast %229 : vector<1x8xf32> to vector<64x8xf32>
    %231 = arith.addf %228, %230 : vector<64x8xf32>
    %232 = tpu.transpose %231, [1, 0] : vector<64x8xf32> -> vector<8x64xf32>
    %c0_156 = arith.constant 0 : index
    %c0_157 = arith.constant 0 : index
    %c0_158 = arith.constant 0 : index
    %233 = vector.load %arg7[%c0_156, %c0_157, %c0_158] : memref<1x8x64xf32, #tpu.memory_space<vmem>>, vector<1x8x64xf32>
    %234 = vector.shape_cast %233 : vector<1x8x64xf32> to vector<8x64xf32>
    %235 = vector.shape_cast %232 : vector<8x64xf32> to vector<1x8x64xf32>
    tpu.vector_store %arg7[%c0_156, %c0_157, %c0_158], %235 {strides = array<i32>} : memref<1x8x64xf32, #tpu.memory_space<vmem>>, vector<1x8x64xf32>,
    return
  }
  func.func @transform_0(%arg0: i32) -> (i32, i32, i32, i32) {
    %c0_i32 = arith.constant 0 : i32
    %c0_i32_0 = arith.constant 0 : i32
    %c0_i32_1 = arith.constant 0 : i32
    %c0_i32_2 = arith.constant 0 : i32
    return %arg0, %c0_i32, %c0_i32_0, %c0_i32_1 : i32, i32, i32, i32
  }
  func.func @transform_1(%arg0: i32) -> (i32, i32, i32) {
    %c0_i32 = arith.constant 0 : i32
    %c0_i32_0 = arith.constant 0 : i32
    %c0_i32_1 = arith.constant 0 : i32
    %c0_i32_2 = arith.constant 0 : i32
    return %c0_i32, %c0_i32_0, %c0_i32_1 : i32, i32, i32
  }
  func.func @transform_2(%arg0: i32) -> (i32, i32) {
    %c0_i32 = arith.constant 0 : i32
    %c0_i32_0 = arith.constant 0 : i32
    %c0_i32_1 = arith.constant 0 : i32
    return %c0_i32, %c0_i32_0 : i32, i32
  }
  func.func @transform_3(%arg0: i32) -> (i32, i32, i32) {
    %c0_i32 = arith.constant 0 : i32
    %c0_i32_0 = arith.constant 0 : i32
    %c0_i32_1 = arith.constant 0 : i32
    %c0_i32_2 = arith.constant 0 : i32
    return %c0_i32, %c0_i32_0, %c0_i32_1 : i32, i32, i32
  }
  func.func @transform_4(%arg0: i32) -> (i32, i32) {
    %c0_i32 = arith.constant 0 : i32
    %c0_i32_0 = arith.constant 0 : i32
    %c0_i32_1 = arith.constant 0 : i32
    return %c0_i32, %c0_i32_0 : i32, i32
  }
  func.func @transform_5(%arg0: i32) -> (i32, i32, i32) {
    %c0_i32 = arith.constant 0 : i32
    %c0_i32_0 = arith.constant 0 : i32
    %c0_i32_1 = arith.constant 0 : i32
    %c0_i32_2 = arith.constant 0 : i32
    return %c0_i32, %c0_i32_0, %c0_i32_1 : i32, i32, i32
  }
  func.func @transform_6(%arg0: i32) -> (i32, i32, i32) {
    %c0_i32 = arith.constant 0 : i32
    %c0_i32_0 = arith.constant 0 : i32
    %c0_i32_1 = arith.constant 0 : i32
    return %arg0, %c0_i32, %c0_i32_0 : i32, i32, i32
  }
}

</mosaic_0001>

<llo_original>
// kernel: tpu_custom_call.1
$region0: #{tpu_custom_call.1}
  #allocation0 [shape = 'u32[]', space=smem, size = 0x4, offset = 0x4, fixed_abs, tag = 'smem constant byte address 0x4 - core index']
  #allocation1 [shape = 'u32[144,128]{1,0:T(1,128)}', space=vmem, size = 0x12000, scoped, tag = 'internal scratch']
  #allocation2 [shape = 'f32[82,4]{1,0:T(8,128)}', space=vmem, size = 0xb000, scoped, tag = 'scratch operand']
  #allocation3 [shape = 'f32[82,8]{1,0:T(8,128)}', space=vmem, size = 0xb000, scoped, tag = 'scratch operand']
  %s0 = inlined_call_operand.vmem [shape: f32[2,4,64,4], index: 0, kind: input, shape index: {}]
  %s1 = inlined_call_operand.vmem [shape: f32[9,4,8], index: 1, kind: input, shape index: {}]
  %s2 = inlined_call_operand.vmem [shape: f32[1,8], index: 2, kind: input, shape index: {}]
  %s3 = inlined_call_operand.vmem [shape: f32[9,8,8], index: 3, kind: input, shape index: {}]
  %s4 = inlined_call_operand.vmem [shape: f32[2,8], index: 4, kind: input, shape index: {}]
  %s5 = inlined_call_operand.vmem [shape: f32[3,4,8], index: 5, kind: input, shape index: {}]
  %s6 = inlined_call_operand.hbm [shape: f32[2,8,64], index: 6, kind: output, shape index: {}]
  %s7 = sld [smem:[#allocation0]]
  $region57: #{tpu_custom_call.1} parent=0
    _
  %s9 = ssub.s32 1, %s7
  %s10 = scalar_select 0, %s9, %s7
  $region1: #{tpu_custom_call.1} parent=0
    #allocation4 [shape = 'u8[8192]{0}', space=vmem, size = 0x2000, scoped, tag = 'output window, operand 0']
    #allocation5 [shape = 's32[2]{0}', space=sflag, size = 0x8, scoped, tag = 'scoped memory for tpu_custom_call.1']
    %11 = vsyncpa [#allocation5], 0
    %s12 = scalar_lea.sflag [#allocation5], 1
    %13 = vsyncpa %s12, 0
    loop: start=0, step=1, limit=4
    $region2: #{tpu_custom_call.1} parent=1 // loop_pre_header
      _
    $region3: #{tpu_custom_call.1} parent=1 // loop_header
      %s15 = sphi 0, %s19
      %p16 = scmp.ge.s32.totalorder %s15, 4
      %s25 = sphi 0, %s27
      %s28 = sphi 0, %s25
      %s29 = sphi 0, %s28
      %s45 = sphi 0, %s29
      %s49 = sphi 0, %s49
      %s51 = sphi 0, %s49
      %s52 = sphi 0, %s51
      %s66 = sphi 0, %s52
      %s70 = sphi 0, %s70
      %s72 = sphi 0, %s70
      %s73 = sphi 0, %s72
      %s87 = sphi 0, %s73
      %s91 = sphi 0, %s91
      %s93 = sphi 0, %s91
      %s94 = sphi 0, %s93
      %s108 = sphi 0, %s94
      %s112 = sphi 0, %s112
      %s114 = sphi 0, %s112
      %s115 = sphi 0, %s114
      %s129 = sphi 0, %s115
      %s133 = sphi 0, %s133
      %s135 = sphi 0, %s133
      %s136 = sphi 0, %s135
      %s150 = sphi 0, %s136
      %s156 = sphi 0, %s158
      %s159 = sphi 0, %s156
      %s160 = sphi 0, %s159
      %s176 = sphi 0, %s160
    $region4: #{tpu_custom_call.1} parent=1 // loop_header_branch
      %18 = sbr.rel (%p16) target = $region8
    $region5: #{tpu_custom_call.1} parent=1 // loop_body
      %s20 = ssub.s32 %s15, 1
      %s21 = ssub.s32 %s15, 2
      %s22 = sadd.s32 %s15, 1
      %s23 = ssub.s32 %s15, %s22
      %p24 = scmp.eq.s32.totalorder %s23, 0
      %s26 = sadd.s32 %s25, 1
      %s27 = scalar_select %p24, %s25, %s26
      %p30 = pneg %p24
      %p31 = scmp.eq.s32.totalorder %s15, 1
      %p32 = por %p30, %p31
      %p33 = scmp.ne.s32.totalorder %s25, %s28
      %p34 = scmp.eq.s32.totalorder %s15, 0
      %p35 = por %p33, %p34
      %p36 = scmp.ne.s32.totalorder %s25, %s28
      %p37 = scmp.eq.s32.totalorder %s20, 1
      %p38 = por %p36, %p37
      %p39 = scmp.ne.s32.totalorder %s28, %s29
      %p40 = scmp.eq.s32.totalorder %s20, 0
      %p41 = por %p39, %p40
      %p42 = scmp.ne.s32.totalorder %s28, %s29
      %p43 = scmp.eq.s32.totalorder %s21, 1
      %p44 = por %p42, %p43
      %p46 = scmp.ne.s32.totalorder %s29, %s45
      %p47 = scmp.eq.s32.totalorder %s21, 0
      %p48 = por %p46, %p47
      %s50 = sadd.s32 %s49, 1
      %p53 = scmp.eq.s32.totalorder %s15, 1
      %p54 = scmp.ne.s32.totalorder %s49, %s51
      %p55 = scmp.eq.s32.totalorder %s15, 0
      %p56 = por %p54, %p55
      %p57 = scmp.ne.s32.totalorder %s49, %s51
      %p58 = scmp.eq.s32.totalorder %s20, 1
      %p59 = por %p57, %p58
      %p60 = scmp.ne.s32.totalorder %s51, %s52
      %p61 = scmp.eq.s32.totalorder %s20, 0
      %p62 = por %p60, %p61
      %p63 = scmp.ne.s32.totalorder %s51, %s52
      %p64 = scmp.eq.s32.totalorder %s21, 1
      %p65 = por %p63, %p64
      %p67 = scmp.ne.s32.totalorder %s52, %s66
      %p68 = scmp.eq.s32.totalorder %s21, 0
      %p69 = por %p67, %p68
      %s71 = sadd.s32 %s70, 1
      %p74 = scmp.eq.s32.totalorder %s15, 1
      %p75 = scmp.ne.s32.totalorder %s70, %s72
      %p76 = scmp.eq.s32.totalorder %s15, 0
      %p77 = por %p75, %p76
      %p78 = scmp.ne.s32.totalorder %s70, %s72
      %p79 = scmp.eq.s32.totalorder %s20, 1
      %p80 = por %p78, %p79
      %p81 = scmp.ne.s32.totalorder %s72, %s73
      %p82 = scmp.eq.s32.totalorder %s20, 0
      %p83 = por %p81, %p82
      %p84 = scmp.ne.s32.totalorder %s72, %s73
      %p85 = scmp.eq.s32.totalorder %s21, 1
      %p86 = por %p84, %p85
      %p88 = scmp.ne.s32.totalorder %s73, %s87
      %p89 = scmp.eq.s32.totalorder %s21, 0
      %p90 = por %p88, %p89
      %s92 = sadd.s32 %s91, 1
      %p95 = scmp.eq.s32.totalorder %s15, 1
      %p96 = scmp.ne.s32.totalorder %s91, %s93
      %p97 = scmp.eq.s32.totalorder %s15, 0
      %p98 = por %p96, %p97
      %p99 = scmp.ne.s32.totalorder %s91, %s93
      %p100 = scmp.eq.s32.totalorder %s20, 1
      %p101 = por %p99, %p100
      %p102 = scmp.ne.s32.totalorder %s93, %s94
      %p103 = scmp.eq.s32.totalorder %s20, 0
      %p104 = por %p102, %p103
      %p105 = scmp.ne.s32.totalorder %s93, %s94
      %p106 = scmp.eq.s32.totalorder %s21, 1
      %p107 = por %p105, %p106
      %p109 = scmp.ne.s32.totalorder %s94, %s108
      %p110 = scmp.eq.s32.totalorder %s21, 0
      %p111 = por %p109, %p110
      %s113 = sadd.s32 %s112, 1
      %p116 = scmp.eq.s32.totalorder %s15, 1
      %p117 = scmp.ne.s32.totalorder %s112, %s114
      %p118 = scmp.eq.s32.totalorder %s15, 0
      %p119 = por %p117, %p118
      %p120 = scmp.ne.s32.totalorder %s112, %s114
      %p121 = scmp.eq.s32.totalorder %s20, 1
      %p122 = por %p120, %p121
      %p123 = scmp.ne.s32.totalorder %s114, %s115
      %p124 = scmp.eq.s32.totalorder %s20, 0
      %p125 = por %p123, %p124
      %p126 = scmp.ne.s32.totalorder %s114, %s115
      %p127 = scmp.eq.s32.totalorder %s21, 1
      %p128 = por %p126, %p127
      %p130 = scmp.ne.s32.totalorder %s115, %s129
      %p131 = scmp.eq.s32.totalorder %s21, 0
      %p132 = por %p130, %p131
      %s134 = sadd.s32 %s133, 1
      %p137 = scmp.eq.s32.totalorder %s15, 1
      %p138 = scmp.ne.s32.totalorder %s133, %s135
      %p139 = scmp.eq.s32.totalorder %s15, 0
      %p140 = por %p138, %p139
      %p141 = scmp.ne.s32.totalorder %s133, %s135
      %p142 = scmp.eq.s32.totalorder %s20, 1
      %p143 = por %p141, %p142
      %p144 = scmp.ne.s32.totalorder %s135, %s136
      %p145 = scmp.eq.s32.totalorder %s20, 0
      %p146 = por %p144, %p145
      %p147 = scmp.ne.s32.totalorder %s135, %s136
      %p148 = scmp.eq.s32.totalorder %s21, 1
      %p149 = por %p147, %p148
      %p151 = scmp.ne.s32.totalorder %s136, %s150
      %p152 = scmp.eq.s32.totalorder %s21, 0
      %p153 = por %p151, %p152
      %s154 = ssub.s32 %s15, %s22
      %p155 = scmp.eq.s32.totalorder %s154, 0
      %s157 = sadd.s32 %s156, 1
      %s158 = scalar_select %p155, %s156, %s157
      %p161 = pneg %p155
      %p162 = scmp.eq.s32.totalorder %s15, 1
      %p163 = por %p161, %p162
      %p164 = scmp.ne.s32.totalorder %s156, %s159
      %p165 = scmp.eq.s32.totalorder %s15, 0
      %p166 = por %p164, %p165
      %p167 = scmp.ne.s32.totalorder %s156, %s159
      %p168 = scmp.eq.s32.totalorder %s20, 1
      %p169 = por %p167, %p168
      %p170 = scmp.ne.s32.totalorder %s159, %s160
      %p171 = scmp.eq.s32.totalorder %s20, 0
      %p172 = por %p170, %p171
      %p173 = scmp.ne.s32.totalorder %s159, %s160
      %p174 = scmp.eq.s32.totalorder %s21, 1
      %p175 = por %p173, %p174
      %p177 = scmp.ne.s32.totalorder %s160, %s176
      %p178 = scmp.eq.s32.totalorder %s21, 0
      %p179 = por %p177, %p178
      %p180 = scmp.le.s32.totalorder 1, %s15
      %p181 = scmp.lt.s32.totalorder %s15, 3
      %p182 = pnand %p180, %p181
      %p183 = pneg %p182
      // Predicated region
      $region9: #{tpu_custom_call.1} parent=5 // pred_check
        _
      $region10: #{tpu_custom_call.1} parent=5 // pred_check_branch
        %185 = sbr.rel (%p182) target = $region12
      $region11: #{tpu_custom_call.1} parent=5 // pred_region
        %s186 = ssub.s32 %s15, 1
        // Predicated region
        $region13: #{tpu_custom_call.1} parent=11 // pred_check
          %p187 = pneg %p62
        $region14: #{tpu_custom_call.1} parent=11 // pred_check_branch
          %189 = sbr.rel (%p187) target = $region16
        $region15: #{tpu_custom_call.1} parent=11 // pred_region
          _
        $region16: #{tpu_custom_call.1} parent=11 // pred_fallthru
          _
        // Predicated region
        $region17: #{tpu_custom_call.1} parent=11 // pred_check
          %p190 = pneg %p83
        $region18: #{tpu_custom_call.1} parent=11 // pred_check_branch
          %192 = sbr.rel (%p190) target = $region20
        $region19: #{tpu_custom_call.1} parent=11 // pred_region
          _
        $region20: #{tpu_custom_call.1} parent=11 // pred_fallthru
          _
        // Predicated region
        $region21: #{tpu_custom_call.1} parent=11 // pred_check
          %p193 = pneg %p104
        $region22: #{tpu_custom_call.1} parent=11 // pred_check_branch
          %195 = sbr.rel (%p193) target = $region24
        $region23: #{tpu_custom_call.1} parent=11 // pred_region
          _
        $region24: #{tpu_custom_call.1} parent=11 // pred_fallthru
          _
        // Predicated region
        $region25: #{tpu_custom_call.1} parent=11 // pred_check
          %p196 = pneg %p125
        $region26: #{tpu_custom_call.1} parent=11 // pred_check_branch
          %198 = sbr.rel (%p196) target = $region28
        $region27: #{tpu_custom_call.1} parent=11 // pred_region
          _
        $region28: #{tpu_custom_call.1} parent=11 // pred_fallthru
          _
        // Predicated region
        $region29: #{tpu_custom_call.1} parent=11 // pred_check
          %p199 = pneg %p146
        $region30: #{tpu_custom_call.1} parent=11 // pred_check_branch
          %201 = sbr.rel (%p199) target = $region32
        $region31: #{tpu_custom_call.1} parent=11 // pred_region
          _
        $region32: #{tpu_custom_call.1} parent=11 // pred_fallthru
          _
      $region12: #{tpu_custom_call.1} parent=5 // pred_fallthru
        _
      %p202 = scmp.lt.s32.totalorder %s15, 2
      // Predicated region
      $region33: #{tpu_custom_call.1} parent=5 // pred_check
        %p203 = pneg %p202
      $region34: #{tpu_custom_call.1} parent=5 // pred_check_branch
        %205 = sbr.rel (%p203) target = $region36
      $region35: #{tpu_custom_call.1} parent=5 // pred_region
        // Predicated region
        $region37: #{tpu_custom_call.1} parent=35 // pred_check
          %p206 = pneg %p35
        $region38: #{tpu_custom_call.1} parent=35 // pred_check_branch
          %208 = sbr.rel (%p206) target = $region40
        $region39: #{tpu_custom_call.1} parent=35 // pred_region
          %p209 = scmp.lt.s32.totalorder %s15, 1
          %s210 = scalar_select %p209, %s15, 1
          %s211 = smul.addr %s210, 32
          %s212 = smul.addr %s211, 8
          %s213 = scalar_lea.vmem %s0, %s212
        $region40: #{tpu_custom_call.1} parent=35 // pred_fallthru
          _
      $region36: #{tpu_custom_call.1} parent=5 // pred_fallthru
        _
      %p214 = scmp.le.s32.totalorder 1, %s15
      %p215 = scmp.lt.s32.totalorder %s15, 3
      %p216 = pnand %p214, %p215
      %p217 = pneg %p216
      // Predicated region
      $region41: #{tpu_custom_call.1} parent=5 // pred_check
        _
      $region42: #{tpu_custom_call.1} parent=5 // pred_check_branch
        %219 = sbr.rel (%p216) target = $region44
      $region43: #{tpu_custom_call.1} parent=5 // pred_region
        %s220 = ssub.s32 %s15, 1
        %p221 = scmp.lt.s32.totalorder %s20, 1
        %s222 = scalar_select %p221, %s20, 1
        %s223 = smul.addr %s222, 32
        %s224 = smul.addr %s223, 8
        %s225 = scalar_lea.vmem %s0, %s224
        %p226 = pneg %p41
        %p227 = pneg %p38
        %p228 = pneg %p62
        %p229 = pneg %p59
        %p230 = pneg %p83
        %p231 = pneg %p80
        %p232 = pneg %p104
        %p233 = pneg %p101
        %p234 = pneg %p125
        %p235 = pneg %p122
        %p236 = pneg %p146
        %p237 = pneg %p143
        %p238 = pneg %p172
        %p239 = pneg %p169
        %s240 = sand.u32 %s159, 1
        %s241 = scalar_lea.sflag [#allocation5], %s240
        %s242 = sand.u32 %s159, 1
        %s243 = smul.addr %s242, 8
        %s244 = scalar_lea.vmem [#allocation4], %s243
        %p245 = scmp.lt.s32.totalorder %s20, 1
        %s246 = scalar_select %p245, %s20, 1
        %s247 = smul.addr %s246, 32
        %s248 = smul.addr %s247, 8
        %s249 = scalar_lea.vmem %s0, %s248
        %v250 = vld [vmem:[%s249] sm:$0xff]
        %v251 = vld [vmem:[%s249 + $0x8] sm:$0xff]
        %v252 = vld [vmem:[%s249 + $0x10] sm:$0xff]
        %v253 = vld [vmem:[%s249 + $0x18] sm:$0xff]
        %v254 = vld [vmem:[%s249 + $0x20] sm:$0xff]
        %v255 = vld [vmem:[%s249 + $0x28] sm:$0xff]
        %v256 = vld [vmem:[%s249 + $0x30] sm:$0xff]
        %v257 = vld [vmem:[%s249 + $0x38] sm:$0xff]
        %s258 = scalar_lea.vmem %s249, 64
        %v259 = vld [vmem:[%s258] sm:$0xff]
        %v260 = vld [vmem:[%s258 + $0x8] sm:$0xff]
        %v261 = vld [vmem:[%s258 + $0x10] sm:$0xff]
        %v262 = vld [vmem:[%s258 + $0x18] sm:$0xff]
        %v263 = vld [vmem:[%s258 + $0x20] sm:$0xff]
        %v264 = vld [vmem:[%s258 + $0x28] sm:$0xff]
        %v265 = vld [vmem:[%s258 + $0x30] sm:$0xff]
        %v266 = vld [vmem:[%s258 + $0x38] sm:$0xff]
        %v267 = vmax.f32 %v250, %v259
        %v268 = vmax.f32 %v251, %v260
        %v269 = vmax.f32 %v252, %v261
        %v270 = vmax.f32 %v253, %v262
        %v271 = vmax.f32 %v254, %v263
        %v272 = vmax.f32 %v255, %v264
        %v273 = vmax.f32 %v256, %v265
        %v274 = vmax.f32 %v257, %v266
        %s275 = scalar_lea.vmem %s249, 128
        %v276 = vld [vmem:[%s275] sm:$0xff]
        %v277 = vld [vmem:[%s275 + $0x8] sm:$0xff]
        %v278 = vld [vmem:[%s275 + $0x10] sm:$0xff]
        %v279 = vld [vmem:[%s275 + $0x18] sm:$0xff]
        %v280 = vld [vmem:[%s275 + $0x20] sm:$0xff]
        %v281 = vld [vmem:[%s275 + $0x28] sm:$0xff]
        %v282 = vld [vmem:[%s275 + $0x30] sm:$0xff]
        %v283 = vld [vmem:[%s275 + $0x38] sm:$0xff]
        %s284 = scalar_lea.vmem %s249, 192
        %v285 = vld [vmem:[%s284] sm:$0xff]
        %v286 = vld [vmem:[%s284 + $0x8] sm:$0xff]
        %v287 = vld [vmem:[%s284 + $0x10] sm:$0xff]
        %v288 = vld [vmem:[%s284 + $0x18] sm:$0xff]
        %v289 = vld [vmem:[%s284 + $0x20] sm:$0xff]
        %v290 = vld [vmem:[%s284 + $0x28] sm:$0xff]
        %v291 = vld [vmem:[%s284 + $0x30] sm:$0xff]
        %v292 = vld [vmem:[%s284 + $0x38] sm:$0xff]
        %v293 = vmax.f32 %v276, %v285
        %v294 = vmax.f32 %v277, %v286
        %v295 = vmax.f32 %v278, %v287
        %v296 = vmax.f32 %v279, %v288
        %v297 = vmax.f32 %v280, %v289
        %v298 = vmax.f32 %v281, %v290
        %v299 = vmax.f32 %v282, %v291
        %v300 = vmax.f32 %v283, %v292
        %v301 = vmax.f32 %v267, %v293
        %v302 = vmax.f32 %v268, %v294
        %v303 = vmax.f32 %v269, %v295
        %v304 = vmax.f32 %v270, %v296
        %v305 = vmax.f32 %v271, %v297
        %v306 = vmax.f32 %v272, %v298
        %v307 = vmax.f32 %v273, %v299
        %v308 = vmax.f32 %v274, %v300
        %v309 = vlaneseq
        %v310 = vshrl.u32 %v309, 7
        %v311 = vadd.s32 %v310, 8
        %v312 = vadd.s32 %v310, 16
        %v313 = vadd.s32 %v310, 24
        %v314 = vadd.s32 %v310, 32
        %v315 = vadd.s32 %v310, 40
        %v316 = vadd.s32 %v310, 48
        %v317 = vadd.s32 %v310, 56
        %vm318 = vcmp.lt.s32.totalorder %v310, 0
        %v319 = vsub.s32 0, %v310
        %v320 = vsel %vm318, %v319, %v310
        %v321 = vshrl.u32 %v320, 3
        %v322 = vand.u32 %v320, 7
        %v323 = vsub.s32 0, %v322
        %v324 = vsel %vm318, %v323, %v322
        %vm325 = vcmp.lt.s32.totalorder %v311, 0
        %v326 = vsub.s32 0, %v311
        %v327 = vsel %vm325, %v326, %v311
        %v328 = vshrl.u32 %v327, 3
        %v329 = vand.u32 %v327, 7
        %v330 = vsub.s32 0, %v329
        %v331 = vsel %vm325, %v330, %v329
        %vm332 = vcmp.lt.s32.totalorder %v312, 0
        %v333 = vsub.s32 0, %v312
        %v334 = vsel %vm332, %v333, %v312
        %v335 = vshrl.u32 %v334, 3
        %v336 = vand.u32 %v334, 7
        %v337 = vsub.s32 0, %v336
        %v338 = vsel %vm332, %v337, %v336
        %vm339 = vcmp.lt.s32.totalorder %v313, 0
        %v340 = vsub.s32 0, %v313
        %v341 = vsel %vm339, %v340, %v313
        %v342 = vshrl.u32 %v341, 3
        %v343 = vand.u32 %v341, 7
        %v344 = vsub.s32 0, %v343
        %v345 = vsel %vm339, %v344, %v343
        %vm346 = vcmp.lt.s32.totalorder %v314, 0
        %v347 = vsub.s32 0, %v314
        %v348 = vsel %vm346, %v347, %v314
        %v349 = vshrl.u32 %v348, 3
        %v350 = vand.u32 %v348, 7
        %v351 = vsub.s32 0, %v350
        %v352 = vsel %vm346, %v351, %v350
        %vm353 = vcmp.lt.s32.totalorder %v315, 0
        %v354 = vsub.s32 0, %v315
        %v355 = vsel %vm353, %v354, %v315
        %v356 = vshrl.u32 %v355, 3
        %v357 = vand.u32 %v355, 7
        %v358 = vsub.s32 0, %v357
        %v359 = vsel %vm353, %v358, %v357
        %vm360 = vcmp.lt.s32.totalorder %v316, 0
        %v361 = vsub.s32 0, %v316
        %v362 = vsel %vm360, %v361, %v316
        %v363 = vshrl.u32 %v362, 3
        %v364 = vand.u32 %v362, 7
        %v365 = vsub.s32 0, %v364
        %v366 = vsel %vm360, %v365, %v364
        %vm367 = vcmp.lt.s32.totalorder %v317, 0
        %v368 = vsub.s32 0, %v317
        %v369 = vsel %vm367, %v368, %v317
        %v370 = vshrl.u32 %v369, 3
        %v371 = vand.u32 %v369, 7
        %v372 = vsub.s32 0, %v371
        %v373 = vsel %vm367, %v372, %v371
        %vm374 = vcmp.ne.s32.totalorder %v324, 0
        %vm375 = vcmp.ne.s32.totalorder %v331, 0
        %vm376 = vcmp.ne.s32.totalorder %v338, 0
        %vm377 = vcmp.ne.s32.totalorder %v345, 0
        %vm378 = vcmp.ne.s32.totalorder %v352, 0
        %vm379 = vcmp.ne.s32.totalorder %v359, 0
        %vm380 = vcmp.ne.s32.totalorder %v366, 0
        %vm381 = vcmp.ne.s32.totalorder %v373, 0
        %vm382 = vcmp.lt.s32.totalorder %v324, 0
        %vm383 = vcmp.lt.s32.totalorder %v331, 0
        %vm384 = vcmp.lt.s32.totalorder %v338, 0
        %vm385 = vcmp.lt.s32.totalorder %v345, 0
        %vm386 = vcmp.lt.s32.totalorder %v352, 0
        %vm387 = vcmp.lt.s32.totalorder %v359, 0
        %vm388 = vcmp.lt.s32.totalorder %v366, 0
        %vm389 = vcmp.lt.s32.totalorder %v373, 0
        %vm390 = vmand %vm382, %vm374
        %vm391 = vmand %vm383, %vm375
        %vm392 = vmand %vm384, %vm376
        %vm393 = vmand %vm385, %vm377
        %vm394 = vmand %vm386, %vm378
        %vm395 = vmand %vm387, %vm379
        %vm396 = vmand %vm388, %vm380
        %vm397 = vmand %vm389, %vm381
        %v398 = vadd.s32 %v324, 8
        %v399 = vadd.s32 %v331, 8
        %v400 = vadd.s32 %v338, 8
        %v401 = vadd.s32 %v345, 8
        %v402 = vadd.s32 %v352, 8
        %v403 = vadd.s32 %v359, 8
        %v404 = vadd.s32 %v366, 8
        %v405 = vadd.s32 %v373, 8
        %v406 = vsel %vm390, %v398, %v324
        %v407 = vsel %vm391, %v399, %v331
        %v408 = vsel %vm392, %v400, %v338
        %v409 = vsel %vm393, %v401, %v345
        %v410 = vsel %vm394, %v402, %v352
        %v411 = vsel %vm395, %v403, %v359
        %v412 = vsel %vm396, %v404, %v366
        %v413 = vsel %vm397, %v405, %v373
        %vm414 = vcmp.eq.s32.totalorder %v406, 0
        %vm415 = vcmp.eq.s32.totalorder %v407, 0
        %vm416 = vcmp.eq.s32.totalorder %v408, 0
        %vm417 = vcmp.eq.s32.totalorder %v409, 0
        %vm418 = vcmp.eq.s32.totalorder %v410, 0
        %vm419 = vcmp.eq.s32.totalorder %v411, 0
        %vm420 = vcmp.eq.s32.totalorder %v412, 0
        %vm421 = vcmp.eq.s32.totalorder %v413, 0
        %vm422 = vcmp.eq.s32.totalorder %v406, 7
        %vm423 = vcmp.eq.s32.totalorder %v407, 7
        %vm424 = vcmp.eq.s32.totalorder %v408, 7
        %vm425 = vcmp.eq.s32.totalorder %v409, 7
        %vm426 = vcmp.eq.s32.totalorder %v410, 7
        %vm427 = vcmp.eq.s32.totalorder %v411, 7
        %vm428 = vcmp.eq.s32.totalorder %v412, 7
        %vm429 = vcmp.eq.s32.totalorder %v413, 7
        %vm430 = vcmask 31744
        %431 = vst.msk [vmem:[#allocation2] sm:$0xff] %vm430, 0.0
        %vm432 = vcmask 24576
        %433 = vst.msk [vmem:[#allocation2 + $0x8] sm:$0x1] %vm432, 0.0
        %434 = vst.msk [vmem:[#allocation2 + $0x9] sm:$0xff] %vm430, %v301
        %435 = vst.msk [vmem:[#allocation2 + $0x11] sm:$0xff] %vm430, %v302
        %436 = vst.msk [vmem:[#allocation2 + $0x19] sm:$0xff] %vm430, %v303
        %437 = vst.msk [vmem:[#allocation2 + $0x21] sm:$0xff] %vm430, %v304
        %438 = vst.msk [vmem:[#allocation2 + $0x29] sm:$0xff] %vm430, %v305
        %439 = vst.msk [vmem:[#allocation2 + $0x31] sm:$0xff] %vm430, %v306
        %440 = vst.msk [vmem:[#allocation2 + $0x39] sm:$0xff] %vm430, %v307
        %441 = vst.msk [vmem:[#allocation2 + $0x41] sm:$0xff] %vm430, %v308
        %442 = vst.msk [vmem:[#allocation2 + $0x49] sm:$0xff] %vm430, 0.0
        %443 = vst.msk [vmem:[#allocation2 + $0x51] sm:$0x1] %vm432, 0.0
        %v444 = vld [vmem:[#allocation2] sm:$0xff]
        %v445 = vld [vmem:[#allocation2 + $0x8] sm:$0xff]
        %v446 = vld [vmem:[#allocation2 + $0x10] sm:$0xff]
        %v447 = vld [vmem:[#allocation2 + $0x18] sm:$0xff]
        %v448 = vld [vmem:[#allocation2 + $0x20] sm:$0xff]
        %v449 = vld [vmem:[#allocation2 + $0x28] sm:$0xff]
        %v450 = vld [vmem:[#allocation2 + $0x30] sm:$0xff]
        %v451 = vld [vmem:[#allocation2 + $0x38] sm:$0xff]
        %v452 = vld [vmem:[%s1] sm:$0xf]
        %v453 = vld [vmem:[#allocation2 + $0x40] sm:$0xff]
        %s454 = scalar_lea.vmem %s1, 12
        %v455 = vld [vmem:[%s454] sm:$0xf]
        %v457 = vsel %vm430, %v445, 0
        %v460 = vsel %vm430, %v446, 0
        %v463 = vsel %vm430, %v447, 0
        %v466 = vsel %vm430, %v448, 0
        %v469 = vsel %vm430, %v449, 0
        %v472 = vsel %vm430, %v450, 0
        %v475 = vsel %vm430, %v451, 0
        %v478 = vsel %vm430, %v453, 0
        %vm480 = vcmask 1043456
        %v482 = vsel %vm480, %v455, 0
        %484 = vmatprep.subr.mxu0 0.0
        %485 = vmatpush1.msra.mxu0 %v482
        %486 = vmatprep.subr.mxu0 0.0
        %487 = vmatpush1.msra.mxu0 0.0
        %488 = vmatprep.subr.mxu0 0.0
        %489 = vmatpush1.msra.mxu0 0.0
        %490 = vmatprep.subr.mxu0 0.0
        %491 = vmatpush1.msra.mxu0 0.0
        %492 = vmatprep.subr.mxu0 0.0
        %493 = vmatpush1.msra.mxu0 0.0
        %494 = vmatprep.subr.mxu0 0.0
        %495 = vmatpush1.msra.mxu0 0.0
        %496 = vmatprep.subr.mxu0 0.0
        %497 = vmatpush1.msra.mxu0 0.0
        %498 = vmatprep.subr.mxu0 0.0
        %499 = vmatpush1.msra.mxu0 0.0
        %500 = vmatprep.subr.mxu0 0.0
        %501 = vmatpush1.msra.mxu0 0.0
        %502 = vmatprep.subr.mxu0 0.0
        %503 = vmatpush1.msra.mxu0 0.0
        %504 = vmatprep.subr.mxu0 0.0
        %505 = vmatpush1.msra.mxu0 0.0
        %506 = vmatprep.subr.mxu0 0.0
        %507 = vmatpush1.msra.mxu0 0.0
        %508 = vmatprep.subr.mxu0 0.0
        %509 = vmatpush1.msra.mxu0 0.0
        %510 = vmatprep.subr.mxu0 0.0
        %511 = vmatpush1.msra.mxu0 0.0
        %512 = vmatprep.subr.mxu0 0.0
        %513 = vmatpush1.msra.mxu0 0.0
        %514 = vmatprep.subr.mxu0 0.0
        %515 = vmatpush1.msra.mxu0 0.0
        %516 = vmatprep.subr.mxu0 0.0
        %517 = vmatpush1.msra.mxu0 0.0
        %518 = vmatprep.subr.mxu0 0.0
        %519 = vmatpush1.msra.mxu0 0.0
        %520 = vmatprep.subr.mxu0 0.0
        %521 = vmatpush1.msra.mxu0 0.0
        %522 = vmatprep.subr.mxu0 0.0
        %523 = vmatpush1.msra.mxu0 0.0
        %524 = vmatprep.subr.mxu0 0.0
        %525 = vmatpush1.msra.mxu0 0.0
        %526 = vmatprep.subr.mxu0 0.0
        %527 = vmatpush1.msra.mxu0 0.0
        %528 = vmatprep.subr.mxu0 0.0
        %529 = vmatpush1.msra.mxu0 0.0
        %530 = vmatprep.subr.mxu0 0.0
        %531 = vmatpush1.msra.mxu0 0.0
        %532 = vmatprep.subr.mxu0 0.0
        %533 = vmatpush1.msra.mxu0 0.0
        %534 = vmatprep.subr.mxu0 0.0
        %535 = vmatpush1.msra.mxu0 0.0
        %536 = vmatprep.subr.mxu0 0.0
        %537 = vmatpush1.msra.mxu0 0.0
        %538 = vmatprep.subr.mxu0 0.0
        %539 = vmatpush1.msra.mxu0 0.0
        %540 = vmatprep.subr.mxu0 0.0
        %541 = vmatpush1.msra.mxu0 0.0
        %542 = vmatprep.subr.mxu0 0.0
        %543 = vmatpush1.msra.mxu0 0.0
        %544 = vmatprep.subr.mxu0 0.0
        %545 = vmatpush1.msra.mxu0 0.0
        %546 = vmatprep.subr.mxu0 0.0
        %547 = vmatpush1.msra.mxu0 0.0
        %548 = vmatprep.mubr.f32.mxu0 0.0
        %549 = vmatmul.mubr.f32.gmra.mrb[0].mxu0 %v457
        %v550 = vpop.f32.mrb[0].mxu0
        %v551 = vadd.f32 0.0, %v550
        %v552 = vpop.f32.mrb[0].mxu0
        %553 = vmatprep.mubr.f32.mxu0 0.0
        %554 = vmatmul.mubr.f32.gmra.mrb[0].mxu0 %v460
        %v555 = vpop.f32.mrb[0].mxu0
        %v556 = vadd.f32 0.0, %v555
        %v557 = vpop.f32.mrb[0].mxu0
        %558 = vmatprep.mubr.f32.mxu0 0.0
        %559 = vmatmul.mubr.f32.gmra.mrb[0].mxu0 %v463
        %v560 = vpop.f32.mrb[0].mxu0
        %v561 = vadd.f32 0.0, %v560
        %v562 = vpop.f32.mrb[0].mxu0
        %563 = vmatprep.mubr.f32.mxu0 0.0
        %564 = vmatmul.mubr.f32.gmra.mrb[0].mxu0 %v466
        %v565 = vpop.f32.mrb[0].mxu0
        %v566 = vadd.f32 0.0, %v565
        %v567 = vpop.f32.mrb[0].mxu0
        %568 = vmatprep.mubr.f32.mxu0 0.0
        %569 = vmatmul.mubr.f32.gmra.mrb[0].mxu0 %v469
        %v570 = vpop.f32.mrb[0].mxu0
        %v571 = vadd.f32 0.0, %v570
        %v572 = vpop.f32.mrb[0].mxu0
        %573 = vmatprep.mubr.f32.mxu0 0.0
        %574 = vmatmul.mubr.f32.gmra.mrb[0].mxu0 %v472
        %v575 = vpop.f32.mrb[0].mxu0
        %v576 = vadd.f32 0.0, %v575
        %v577 = vpop.f32.mrb[0].mxu0
        %578 = vmatprep.mubr.f32.mxu0 0.0
        %579 = vmatmul.mubr.f32.gmra.mrb[0].mxu0 %v475
        %v580 = vpop.f32.mrb[0].mxu0
        %v581 = vadd.f32 0.0, %v580
        %v582 = vpop.f32.mrb[0].mxu0
        %583 = vmatprep.mubr.f32.mxu0 0.0
        %584 = vmatmul.mubr.f32.gmra.mrb[0].mxu0 %v478
        %v585 = vpop.f32.mrb[0].mxu0
        %v586 = vadd.f32 0.0, %v585
        %v587 = vpop.f32.mrb[0].mxu0
        %588 = vdwg.mxu0
        %v590 = vsel %vm430, %v444, 0
        %v593 = vsel %vm480, %v452, 0
        %595 = vmatprep.subr.mxu0 0.0
        %596 = vmatpush1.msra.mxu0 %v593
        %597 = vmatprep.subr.mxu0 0.0
        %598 = vmatpush1.msra.mxu0 0.0
        %599 = vmatprep.subr.mxu0 0.0
        %600 = vmatpush1.msra.mxu0 0.0
        %601 = vmatprep.subr.mxu0 0.0
        %602 = vmatpush1.msra.mxu0 0.0
        %603 = vmatprep.subr.mxu0 0.0
        %604 = vmatpush1.msra.mxu0 0.0
        %605 = vmatprep.subr.mxu0 0.0
        %606 = vmatpush1.msra.mxu0 0.0
        %607 = vmatprep.subr.mxu0 0.0
        %608 = vmatpush1.msra.mxu0 0.0
        %609 = vmatprep.subr.mxu0 0.0
        %610 = vmatpush1.msra.mxu0 0.0
        %611 = vmatprep.subr.mxu0 0.0
        %612 = vmatpush1.msra.mxu0 0.0
        %613 = vmatprep.subr.mxu0 0.0
        %614 = vmatpush1.msra.mxu0 0.0
        %615 = vmatprep.subr.mxu0 0.0
        %616 = vmatpush1.msra.mxu0 0.0
        %617 = vmatprep.subr.mxu0 0.0
        %618 = vmatpush1.msra.mxu0 0.0
        %619 = vmatprep.subr.mxu0 0.0
        %620 = vmatpush1.msra.mxu0 0.0
        %621 = vmatprep.subr.mxu0 0.0
        %622 = vmatpush1.msra.mxu0 0.0
        %623 = vmatprep.subr.mxu0 0.0
        %624 = vmatpush1.msra.mxu0 0.0
        %625 = vmatprep.subr.mxu0 0.0
        %626 = vmatpush1.msra.mxu0 0.0
        %627 = vmatprep.subr.mxu0 0.0
        %628 = vmatpush1.msra.mxu0 0.0
        %629 = vmatprep.subr.mxu0 0.0
        %630 = vmatpush1.msra.mxu0 0.0
        %631 = vmatprep.subr.mxu0 0.0
        %632 = vmatpush1.msra.mxu0 0.0
        %633 = vmatprep.subr.mxu0 0.0
        %634 = vmatpush1.msra.mxu0 0.0
        %635 = vmatprep.subr.mxu0 0.0
        %636 = vmatpush1.msra.mxu0 0.0
        %637 = vmatprep.subr.mxu0 0.0
        %638 = vmatpush1.msra.mxu0 0.0
        %639 = vmatprep.subr.mxu0 0.0
        %640 = vmatpush1.msra.mxu0 0.0
        %641 = vmatprep.subr.mxu0 0.0
        %642 = vmatpush1.msra.mxu0 0.0
        %643 = vmatprep.subr.mxu0 0.0
        %644 = vmatpush1.msra.mxu0 0.0
        %645 = vmatprep.subr.mxu0 0.0
        %646 = vmatpush1.msra.mxu0 0.0
        %647 = vmatprep.subr.mxu0 0.0
        %648 = vmatpush1.msra.mxu0 0.0
        %649 = vmatprep.subr.mxu0 0.0
        %650 = vmatpush1.msra.mxu0 0.0
        %651 = vmatprep.subr.mxu0 0.0
        %652 = vmatpush1.msra.mxu0 0.0
        %653 = vmatprep.subr.mxu0 0.0
        %654 = vmatpush1.msra.mxu0 0.0
        %655 = vmatprep.subr.mxu0 0.0
        %656 = vmatpush1.msra.mxu0 0.0
        %657 = vmatprep.subr.mxu0 0.0
        %658 = vmatpush1.msra.mxu0 0.0
        %659 = vmatprep.mubr.f32.mxu0 0.0
        %660 = vmatmul.mubr.f32.gmra.mrb[0].mxu0 %v590
        %v661 = vpop.f32.mrb[0].mxu0
        %v662 = vadd.f32 %v551, %v661
        %v663 = vpop.f32.mrb[0].mxu0
        %664 = vmatprep.mubr.f32.mxu0 0.0
        %665 = vmatmul.mubr.f32.gmra.mrb[0].mxu0 %v457
        %v666 = vpop.f32.mrb[0].mxu0
        %v667 = vadd.f32 %v556, %v666
        %v668 = vpop.f32.mrb[0].mxu0
        %669 = vmatprep.mubr.f32.mxu0 0.0
        %670 = vmatmul.mubr.f32.gmra.mrb[0].mxu0 %v460
        %v671 = vpop.f32.mrb[0].mxu0
        %v672 = vadd.f32 %v561, %v671
        %v673 = vpop.f32.mrb[0].mxu0
        %674 = vmatprep.mubr.f32.mxu0 0.0
        %675 = vmatmul.mubr.f32.gmra.mrb[0].mxu0 %v463
        %v676 = vpop.f32.mrb[0].mxu0
        %v677 = vadd.f32 %v566, %v676
        %v678 = vpop.f32.mrb[0].mxu0
        %679 = vmatprep.mubr.f32.mxu0 0.0
        %680 = vmatmul.mubr.f32.gmra.mrb[0].mxu0 %v466
        %v681 = vpop.f32.mrb[0].mxu0
        %v682 = vadd.f32 %v571, %v681
        %v683 = vpop.f32.mrb[0].mxu0
        %684 = vmatprep.mubr.f32.mxu0 0.0
        %685 = vmatmul.mubr.f32.gmra.mrb[0].mxu0 %v469
        %v686 = vpop.f32.mrb[0].mxu0
        %v687 = vadd.f32 %v576, %v686
        %v688 = vpop.f32.mrb[0].mxu0
        %689 = vmatprep.mubr.f32.mxu0 0.0
        %690 = vmatmul.mubr.f32.gmra.mrb[0].mxu0 %v472
        %v691 = vpop.f32.mrb[0].mxu0
        %v692 = vadd.f32 %v581, %v691
        %v693 = vpop.f32.mrb[0].mxu0
        %694 = vmatprep.mubr.f32.mxu0 0.0
        %695 = vmatmul.mubr.f32.gmra.mrb[0].mxu0 %v475
        %v696 = vpop.f32.mrb[0].mxu0
        %v697 = vadd.f32 %v586, %v696
        %v698 = vpop.f32.mrb[0].mxu0
        %699 = vdwg.mxu0
        %v700 = vld [vmem:[#allocation2 + $0x10] sm:$0xff]
        %v701 = vld [vmem:[#allocation2 + $0x18] sm:$0xff]
        %v702 = vld [vmem:[#allocation2 + $0x20] sm:$0xff]
        %v703 = vld [vmem:[#allocation2 + $0x28] sm:$0xff]
        %v704 = vld [vmem:[#allocation2 + $0x30] sm:$0xff]
        %v705 = vld [vmem:[#allocation2 + $0x38] sm:$0xff]
        %v706 = vld [vmem:[#allocation2 + $0x40] sm:$0xff]
        %v707 = vld [vmem:[#allocation2 + $0x48] sm:$0xff]
        %s708 = scalar_lea.vmem %s1, 24
        %v709 = vld [vmem:[%s708] sm:$0xf]
        %v711 = vsel %vm430, %v700, 0
        %v714 = vsel %vm430, %v701, 0
        %v717 = vsel %vm430, %v702, 0
        %v720 = vsel %vm430, %v703, 0
        %v723 = vsel %vm430, %v704, 0
        %v726 = vsel %vm430, %v705, 0
        %v729 = vsel %vm430, %v706, 0
        %v732 = vsel %vm430, %v707, 0
        %v735 = vsel %vm480, %v709, 0
        %737 = vmatprep.subr.mxu0 0.0
        %738 = vmatpush1.msra.mxu0 %v735
        %739 = vmatprep.subr.mxu0 0.0
        %740 = vmatpush1.msra.mxu0 0.0
        %741 = vmatprep.subr.mxu0 0.0
        %742 = vmatpush1.msra.mxu0 0.0
        %743 = vmatprep.subr.mxu0 0.0
        %744 = vmatpush1.msra.mxu0 0.0
        %745 = vmatprep.subr.mxu0 0.0
        %746 = vmatpush1.msra.mxu0 0.0
        %747 = vmatprep.subr.mxu0 0.0
        %748 = vmatpush1.msra.mxu0 0.0
        %749 = vmatprep.subr.mxu0 0.0
        %750 = vmatpush1.msra.mxu0 0.0
        %751 = vmatprep.subr.mxu0 0.0
        %752 = vmatpush1.msra.mxu0 0.0
        %753 = vmatprep.subr.mxu0 0.0
        %754 = vmatpush1.msra.mxu0 0.0
        %755 = vmatprep.subr.mxu0 0.0
        %756 = vmatpush1.msra.mxu0 0.0
        %757 = vmatprep.subr.mxu0 0.0
        %758 = vmatpush1.msra.mxu0 0.0
        %759 = vmatprep.subr.mxu0 0.0
        %760 = vmatpush1.msra.mxu0 0.0
        %761 = vmatprep.subr.mxu0 0.0
        %762 = vmatpush1.msra.mxu0 0.0
        %763 = vmatprep.subr.mxu0 0.0
        %764 = vmatpush1.msra.mxu0 0.0
        %765 = vmatprep.subr.mxu0 0.0
        %766 = vmatpush1.msra.mxu0 0.0
        %767 = vmatprep.subr.mxu0 0.0
        %768 = vmatpush1.msra.mxu0 0.0
        %769 = vmatprep.subr.mxu0 0.0
        %770 = vmatpush1.msra.mxu0 0.0
        %771 = vmatprep.subr.mxu0 0.0
        %772 = vmatpush1.msra.mxu0 0.0
        %773 = vmatprep.subr.mxu0 0.0
        %774 = vmatpush1.msra.mxu0 0.0
        %775 = vmatprep.subr.mxu0 0.0
        %776 = vmatpush1.msra.mxu0 0.0
        %777 = vmatprep.subr.mxu0 0.0
        %778 = vmatpush1.msra.mxu0 0.0
        %779 = vmatprep.subr.mxu0 0.0
        %780 = vmatpush1.msra.mxu0 0.0
        %781 = vmatprep.subr.mxu0 0.0
        %782 = vmatpush1.msra.mxu0 0.0
        %783 = vmatprep.subr.mxu0 0.0
        %784 = vmatpush1.msra.mxu0 0.0
        %785 = vmatprep.subr.mxu0 0.0
        %786 = vmatpush1.msra.mxu0 0.0
        %787 = vmatprep.subr.mxu0 0.0
        %788 = vmatpush1.msra.mxu0 0.0
        %789 = vmatprep.subr.mxu0 0.0
        %790 = vmatpush1.msra.mxu0 0.0
        %791 = vmatprep.subr.mxu0 0.0
        %792 = vmatpush1.msra.mxu0 0.0
        %793 = vmatprep.subr.mxu0 0.0
        %794 = vmatpush1.msra.mxu0 0.0
        %795 = vmatprep.subr.mxu0 0.0
        %796 = vmatpush1.msra.mxu0 0.0
        %797 = vmatprep.subr.mxu0 0.0
        %798 = vmatpush1.msra.mxu0 0.0
        %799 = vmatprep.subr.mxu0 0.0
        %800 = vmatpush1.msra.mxu0 0.0
        %801 = vmatprep.mubr.f32.mxu0 0.0
        %802 = vmatmul.mubr.f32.gmra.mrb[0].mxu0 %v711
        %v803 = vpop.f32.mrb[0].mxu0
        %v804 = vadd.f32 0.0, %v803
        %v805 = vpop.f32.mrb[0].mxu0
        %806 = vmatprep.mubr.f32.mxu0 0.0
        %807 = vmatmul.mubr.f32.gmra.mrb[0].mxu0 %v714
        %v808 = vpop.f32.mrb[0].mxu0
        %v809 = vadd.f32 0.0, %v808
        %v810 = vpop.f32.mrb[0].mxu0
        %811 = vmatprep.mubr.f32.mxu0 0.0
        %812 = vmatmul.mubr.f32.gmra.mrb[0].mxu0 %v717
        %v813 = vpop.f32.mrb[0].mxu0
        %v814 = vadd.f32 0.0, %v813
        %v815 = vpop.f32.mrb[0].mxu0
        %816 = vmatprep.mubr.f32.mxu0 0.0
        %817 = vmatmul.mubr.f32.gmra.mrb[0].mxu0 %v720
        %v818 = vpop.f32.mrb[0].mxu0
        %v819 = vadd.f32 0.0, %v818
        %v820 = vpop.f32.mrb[0].mxu0
        %821 = vmatprep.mubr.f32.mxu0 0.0
        %822 = vmatmul.mubr.f32.gmra.mrb[0].mxu0 %v723
        %v823 = vpop.f32.mrb[0].mxu0
        %v824 = vadd.f32 0.0, %v823
        %v825 = vpop.f32.mrb[0].mxu0
        %826 = vmatprep.mubr.f32.mxu0 0.0
        %827 = vmatmul.mubr.f32.gmra.mrb[0].mxu0 %v726
        %v828 = vpop.f32.mrb[0].mxu0
        %v829 = vadd.f32 0.0, %v828
        %v830 = vpop.f32.mrb[0].mxu0
        %831 = vmatprep.mubr.f32.mxu0 0.0
        %832 = vmatmul.mubr.f32.gmra.mrb[0].mxu0 %v729
        %v833 = vpop.f32.mrb[0].mxu0
        %v834 = vadd.f32 0.0, %v833
        %v835 = vpop.f32.mrb[0].mxu0
        %836 = vmatprep.mubr.f32.mxu0 0.0
        %837 = vmatmul.mubr.f32.gmra.mrb[0].mxu0 %v732
        %v838 = vpop.f32.mrb[0].mxu0
        %v839 = vadd.f32 0.0, %v838
        %v840 = vpop.f32.mrb[0].mxu0
        %841 = vdwg.mxu0
        %v842 = vadd.f32 %v662, %v804
        %v843 = vadd.f32 %v667, %v809
        %v844 = vadd.f32 %v672, %v814
        %v845 = vadd.f32 %v677, %v819
        %v846 = vadd.f32 %v682, %v824
        %v847 = vadd.f32 %v687, %v829
        %v848 = vadd.f32 %v692, %v834
        %v849 = vadd.f32 %v697, %v839
        %v850 = vsel %vm414, 1, 0
        %v851 = vsel %vm415, 1, 0
        %v852 = vsel %vm416, 1, 0
        %v853 = vsel %vm417, 1, 0
        %v854 = vsel %vm418, 1, 0
        %v855 = vsel %vm419, 1, 0
        %v856 = vsel %vm420, 1, 0
        %v857 = vsel %vm421, 1, 0
        %vm858 = vcmp.eq.s32.totalorder %v850, 1
        %vm859 = vcmp.eq.s32.totalorder %v851, 1
        %vm860 = vcmp.eq.s32.totalorder %v852, 1
        %vm861 = vcmp.eq.s32.totalorder %v853, 1
        %vm862 = vcmp.eq.s32.totalorder %v854, 1
        %vm863 = vcmp.eq.s32.totalorder %v855, 1
        %vm864 = vcmp.eq.s32.totalorder %v856, 1
        %vm865 = vcmp.eq.s32.totalorder %v857, 1
        %v866 = vsel %vm858, 0.0, %v842
        %v867 = vsel %vm859, 0.0, %v843
        %v868 = vsel %vm860, 0.0, %v844
        %v869 = vsel %vm861, 0.0, %v845
        %v870 = vsel %vm862, 0.0, %v846
        %v871 = vsel %vm863, 0.0, %v847
        %v872 = vsel %vm864, 0.0, %v848
        %v873 = vsel %vm865, 0.0, %v849
        %v874 = vadd.f32 %v866, 0.0
        %v875 = vadd.f32 %v867, 0.0
        %v876 = vadd.f32 %v868, 0.0
        %v877 = vadd.f32 %v869, 0.0
        %v878 = vadd.f32 %v870, 0.0
        %v879 = vadd.f32 %v871, 0.0
        %v880 = vadd.f32 %v872, 0.0
        %v881 = vadd.f32 %v873, 0.0
        %v882 = vld [vmem:[#allocation2 + $0x1] sm:$0xff]
        %v883 = vld [vmem:[#allocation2 + $0x9] sm:$0xff]
        %v884 = vld [vmem:[#allocation2 + $0x11] sm:$0xff]
        %v885 = vld [vmem:[#allocation2 + $0x19] sm:$0xff]
        %v886 = vld [vmem:[#allocation2 + $0x21] sm:$0xff]
        %v887 = vld [vmem:[#allocation2 + $0x29] sm:$0xff]
        %v888 = vld [vmem:[#allocation2 + $0x31] sm:$0xff]
        %v889 = vld [vmem:[#allocation2 + $0x39] sm:$0xff]
        %s890 = scalar_lea.vmem %s1, 4
        %v891 = vld [vmem:[%s890] sm:$0xf]
        %v892 = vld [vmem:[#allocation2 + $0x41] sm:$0xff]
        %s893 = scalar_lea.vmem %s1, 16
        %v894 = vld [vmem:[%s893] sm:$0xf]
        %v896 = vsel %vm430, %v883, 0
        %v899 = vsel %vm430, %v884, 0
        %v902 = vsel %vm430, %v885, 0
        %v905 = vsel %vm430, %v886, 0
        %v908 = vsel %vm430, %v887, 0
        %v911 = vsel %vm430, %v888, 0
        %v914 = vsel %vm430, %v889, 0
        %v917 = vsel %vm430, %v892, 0
        %v920 = vsel %vm480, %v894, 0
        %922 = vmatprep.subr.mxu0 0.0
        %923 = vmatpush1.msra.mxu0 %v920
        %924 = vmatprep.subr.mxu0 0.0
        %925 = vmatpush1.msra.mxu0 0.0
        %926 = vmatprep.subr.mxu0 0.0
        %927 = vmatpush1.msra.mxu0 0.0
        %928 = vmatprep.subr.mxu0 0.0
        %929 = vmatpush1.msra.mxu0 0.0
        %930 = vmatprep.subr.mxu0 0.0
        %931 = vmatpush1.msra.mxu0 0.0
        %932 = vmatprep.subr.mxu0 0.0
        %933 = vmatpush1.msra.mxu0 0.0
        %934 = vmatprep.subr.mxu0 0.0
        %935 = vmatpush1.msra.mxu0 0.0
        %936 = vmatprep.subr.mxu0 0.0
        %937 = vmatpush1.msra.mxu0 0.0
        %938 = vmatprep.subr.mxu0 0.0
        %939 = vmatpush1.msra.mxu0 0.0
        %940 = vmatprep.subr.mxu0 0.0
        %941 = vmatpush1.msra.mxu0 0.0
        %942 = vmatprep.subr.mxu0 0.0
        %943 = vmatpush1.msra.mxu0 0.0
        %944 = vmatprep.subr.mxu0 0.0
        %945 = vmatpush1.msra.mxu0 0.0
        %946 = vmatprep.subr.mxu0 0.0
        %947 = vmatpush1.msra.mxu0 0.0
        %948 = vmatprep.subr.mxu0 0.0
        %949 = vmatpush1.msra.mxu0 0.0
        %950 = vmatprep.subr.mxu0 0.0
        %951 = vmatpush1.msra.mxu0 0.0
        %952 = vmatprep.subr.mxu0 0.0
        %953 = vmatpush1.msra.mxu0 0.0
        %954 = vmatprep.subr.mxu0 0.0
        %955 = vmatpush1.msra.mxu0 0.0
        %956 = vmatprep.subr.mxu0 0.0
        %957 = vmatpush1.msra.mxu0 0.0
        %958 = vmatprep.subr.mxu0 0.0
        %959 = vmatpush1.msra.mxu0 0.0
        %960 = vmatprep.subr.mxu0 0.0
        %961 = vmatpush1.msra.mxu0 0.0
        %962 = vmatprep.subr.mxu0 0.0
        %963 = vmatpush1.msra.mxu0 0.0
        %964 = vmatprep.subr.mxu0 0.0
        %965 = vmatpush1.msra.mxu0 0.0
        %966 = vmatprep.subr.mxu0 0.0
        %967 = vmatpush1.msra.mxu0 0.0
        %968 = vmatprep.subr.mxu0 0.0
        %969 = vmatpush1.msra.mxu0 0.0
        %970 = vmatprep.subr.mxu0 0.0
        %971 = vmatpush1.msra.mxu0 0.0
        %972 = vmatprep.subr.mxu0 0.0
        %973 = vmatpush1.msra.mxu0 0.0
        %974 = vmatprep.subr.mxu0 0.0
        %975 = vmatpush1.msra.mxu0 0.0
        %976 = vmatprep.subr.mxu0 0.0
        %977 = vmatpush1.msra.mxu0 0.0
        %978 = vmatprep.subr.mxu0 0.0
        %979 = vmatpush1.msra.mxu0 0.0
        %980 = vmatprep.subr.mxu0 0.0
        %981 = vmatpush1.msra.mxu0 0.0
        %982 = vmatprep.subr.mxu0 0.0
        %983 = vmatpush1.msra.mxu0 0.0
        %984 = vmatprep.subr.mxu0 0.0
        %985 = vmatpush1.msra.mxu0 0.0
        %986 = vmatprep.mubr.f32.mxu0 0.0
        %987 = vmatmul.mubr.f32.gmra.mrb[0].mxu0 %v896
        %v988 = vpop.f32.mrb[0].mxu0
        %v989 = vadd.f32 0.0, %v988
        %v990 = vpop.f32.mrb[0].mxu0
        %991 = vmatprep.mubr.f32.mxu0 0.0
        %992 = vmatmul.mubr.f32.gmra.mrb[0].mxu0 %v899
        %v993 = vpop.f32.mrb[0].mxu0
        %v994 = vadd.f32 0.0, %v993
        %v995 = vpop.f32.mrb[0].mxu0
        %996 = vmatprep.mubr.f32.mxu0 0.0
        %997 = vmatmul.mubr.f32.gmra.mrb[0].mxu0 %v902
        %v998 = vpop.f32.mrb[0].mxu0
        %v999 = vadd.f32 0.0, %v998
        %v1000 = vpop.f32.mrb[0].mxu0
        %1001 = vmatprep.mubr.f32.mxu0 0.0
        %1002 = vmatmul.mubr.f32.gmra.mrb[0].mxu0 %v905
        %v1003 = vpop.f32.mrb[0].mxu0
        %v1004 = vadd.f32 0.0, %v1003
        %v1005 = vpop.f32.mrb[0].mxu0
        %1006 = vmatprep.mubr.f32.mxu0 0.0
        %1007 = vmatmul.mubr.f32.gmra.mrb[0].mxu0 %v908
        %v1008 = vpop.f32.mrb[0].mxu0
        %v1009 = vadd.f32 0.0, %v1008
        %v1010 = vpop.f32.mrb[0].mxu0
        %1011 = vmatprep.mubr.f32.mxu0 0.0
        %1012 = vmatmul.mubr.f32.gmra.mrb[0].mxu0 %v911
        %v1013 = vpop.f32.mrb[0].mxu0
        %v1014 = vadd.f32 0.0, %v1013
        %v1015 = vpop.f32.mrb[0].mxu0
        %1016 = vmatprep.mubr.f32.mxu0 0.0
        %1017 = vmatmul.mubr.f32.gmra.mrb[0].mxu0 %v914
        %v1018 = vpop.f32.mrb[0].mxu0
        %v1019 = vadd.f32 0.0, %v1018
        %v1020 = vpop.f32.mrb[0].mxu0
        %1021 = vmatprep.mubr.f32.mxu0 0.0
        %1022 = vmatmul.mubr.f32.gmra.mrb[0].mxu0 %v917
        %v1023 = vpop.f32.mrb[0].mxu0
        %v1024 = vadd.f32 0.0, %v1023
        %v1025 = vpop.f32.mrb[0].mxu0
        %1026 = vdwg.mxu0
        %v1028 = vsel %vm430, %v882, 0
        %v1031 = vsel %vm480, %v891, 0
        %1033 = vmatprep.subr.mxu0 0.0
        %1034 = vmatpush1.msra.mxu0 %v1031
        %1035 = vmatprep.subr.mxu0 0.0
        %1036 = vmatpush1.msra.mxu0 0.0
        %1037 = vmatprep.subr.mxu0 0.0
        %1038 = vmatpush1.msra.mxu0 0.0
        %1039 = vmatprep.subr.mxu0 0.0
        %1040 = vmatpush1.msra.mxu0 0.0
        %1041 = vmatprep.subr.mxu0 0.0
        %1042 = vmatpush1.msra.mxu0 0.0
        %1043 = vmatprep.subr.mxu0 0.0
        %1044 = vmatpush1.msra.mxu0 0.0
        %1045 = vmatprep.subr.mxu0 0.0
        %1046 = vmatpush1.msra.mxu0 0.0
        %1047 = vmatprep.subr.mxu0 0.0
        %1048 = vmatpush1.msra.mxu0 0.0
        %1049 = vmatprep.subr.mxu0 0.0
        %1050 = vmatpush1.msra.mxu0 0.0
        %1051 = vmatprep.subr.mxu0 0.0
        %1052 = vmatpush1.msra.mxu0 0.0
        %1053 = vmatprep.subr.mxu0 0.0
        %1054 = vmatpush1.msra.mxu0 0.0
        %1055 = vmatprep.subr.mxu0 0.0
        %1056 = vmatpush1.msra.mxu0 0.0
        %1057 = vmatprep.subr.mxu0 0.0
        %1058 = vmatpush1.msra.mxu0 0.0
        %1059 = vmatprep.subr.mxu0 0.0
        %1060 = vmatpush1.msra.mxu0 0.0
        %1061 = vmatprep.subr.mxu0 0.0
        %1062 = vmatpush1.msra.mxu0 0.0
        %1063 = vmatprep.subr.mxu0 0.0
        %1064 = vmatpush1.msra.mxu0 0.0
        %1065 = vmatprep.subr.mxu0 0.0
        %1066 = vmatpush1.msra.mxu0 0.0
        %1067 = vmatprep.subr.mxu0 0.0
        %1068 = vmatpush1.msra.mxu0 0.0
        %1069 = vmatprep.subr.mxu0 0.0
        %1070 = vmatpush1.msra.mxu0 0.0
        %1071 = vmatprep.subr.mxu0 0.0
        %1072 = vmatpush1.msra.mxu0 0.0
        %1073 = vmatprep.subr.mxu0 0.0
        %1074 = vmatpush1.msra.mxu0 0.0
        %1075 = vmatprep.subr.mxu0 0.0
        %1076 = vmatpush1.msra.mxu0 0.0
        %1077 = vmatprep.subr.mxu0 0.0
        %1078 = vmatpush1.msra.mxu0 0.0
        %1079 = vmatprep.subr.mxu0 0.0
        %1080 = vmatpush1.msra.mxu0 0.0
        %1081 = vmatprep.subr.mxu0 0.0
        %1082 = vmatpush1.msra.mxu0 0.0
        %1083 = vmatprep.subr.mxu0 0.0
        %1084 = vmatpush1.msra.mxu0 0.0
        %1085 = vmatprep.subr.mxu0 0.0
        %1086 = vmatpush1.msra.mxu0 0.0
        %1087 = vmatprep.subr.mxu0 0.0
        %1088 = vmatpush1.msra.mxu0 0.0
        %1089 = vmatprep.subr.mxu0 0.0
        %1090 = vmatpush1.msra.mxu0 0.0
        %1091 = vmatprep.subr.mxu0 0.0
        %1092 = vmatpush1.msra.mxu0 0.0
        %1093 = vmatprep.subr.mxu0 0.0
        %1094 = vmatpush1.msra.mxu0 0.0
        %1095 = vmatprep.subr.mxu0 0.0
        %1096 = vmatpush1.msra.mxu0 0.0
        %1097 = vmatprep.mubr.f32.mxu0 0.0
        %1098 = vmatmul.mubr.f32.gmra.mrb[0].mxu0 %v1028
        %v1099 = vpop.f32.mrb[0].mxu0
        %v1100 = vadd.f32 %v989, %v1099
        %v1101 = vpop.f32.mrb[0].mxu0
        %1102 = vmatprep.mubr.f32.mxu0 0.0
        %1103 = vmatmul.mubr.f32.gmra.mrb[0].mxu0 %v896
        %v1104 = vpop.f32.mrb[0].mxu0
        %v1105 = vadd.f32 %v994, %v1104
        %v1106 = vpop.f32.mrb[0].mxu0
        %1107 = vmatprep.mubr.f32.mxu0 0.0
        %1108 = vmatmul.mubr.f32.gmra.mrb[0].mxu0 %v899
        %v1109 = vpop.f32.mrb[0].mxu0
        %v1110 = vadd.f32 %v999, %v1109
        %v1111 = vpop.f32.mrb[0].mxu0
        %1112 = vmatprep.mubr.f32.mxu0 0.0
        %1113 = vmatmul.mubr.f32.gmra.mrb[0].mxu0 %v902
        %v1114 = vpop.f32.mrb[0].mxu0
        %v1115 = vadd.f32 %v1004, %v1114
        %v1116 = vpop.f32.mrb[0].mxu0
        %1117 = vmatprep.mubr.f32.mxu0 0.0
        %1118 = vmatmul.mubr.f32.gmra.mrb[0].mxu0 %v905
        %v1119 = vpop.f32.mrb[0].mxu0
        %v1120 = vadd.f32 %v1009, %v1119
        %v1121 = vpop.f32.mrb[0].mxu0
        %1122 = vmatprep.mubr.f32.mxu0 0.0
        %1123 = vmatmul.mubr.f32.gmra.mrb[0].mxu0 %v908
        %v1124 = vpop.f32.mrb[0].mxu0
        %v1125 = vadd.f32 %v1014, %v1124
        %v1126 = vpop.f32.mrb[0].mxu0
        %1127 = vmatprep.mubr.f32.mxu0 0.0
        %1128 = vmatmul.mubr.f32.gmra.mrb[0].mxu0 %v911
        %v1129 = vpop.f32.mrb[0].mxu0
        %v1130 = vadd.f32 %v1019, %v1129
        %v1131 = vpop.f32.mrb[0].mxu0
        %1132 = vmatprep.mubr.f32.mxu0 0.0
        %1133 = vmatmul.mubr.f32.gmra.mrb[0].mxu0 %v914
        %v1134 = vpop.f32.mrb[0].mxu0
        %v1135 = vadd.f32 %v1024, %v1134
        %v1136 = vpop.f32.mrb[0].mxu0
        %1137 = vdwg.mxu0
        %v1138 = vld [vmem:[#allocation2 + $0x11] sm:$0xff]
        %v1139 = vld [vmem:[#allocation2 + $0x19] sm:$0xff]
        %v1140 = vld [vmem:[#allocation2 + $0x21] sm:$0xff]
        %v1141 = vld [vmem:[#allocation2 + $0x29] sm:$0xff]
        %v1142 = vld [vmem:[#allocation2 + $0x31] sm:$0xff]
        %v1143 = vld [vmem:[#allocation2 + $0x39] sm:$0xff]
        %v1144 = vld [vmem:[#allocation2 + $0x41] sm:$0xff]
        %v1145 = vld [vmem:[#allocation2 + $0x49] sm:$0xff]
        %s1146 = scalar_lea.vmem %s1, 28
        %v1147 = vld [vmem:[%s1146] sm:$0xf]
        %v1149 = vsel %vm430, %v1138, 0
        %v1152 = vsel %vm430, %v1139, 0
        %v1155 = vsel %vm430, %v1140, 0
        %v1158 = vsel %vm430, %v1141, 0
        %v1161 = vsel %vm430, %v1142, 0
        %v1164 = vsel %vm430, %v1143, 0
        %v1167 = vsel %vm430, %v1144, 0
        %v1170 = vsel %vm430, %v1145, 0
        %v1173 = vsel %vm480, %v1147, 0
        %1175 = vmatprep.subr.mxu0 0.0
        %1176 = vmatpush1.msra.mxu0 %v1173
        %1177 = vmatprep.subr.mxu0 0.0
        %1178 = vmatpush1.msra.mxu0 0.0
        %1179 = vmatprep.subr.mxu0 0.0
        %1180 = vmatpush1.msra.mxu0 0.0
        %1181 = vmatprep.subr.mxu0 0.0
        %1182 = vmatpush1.msra.mxu0 0.0
        %1183 = vmatprep.subr.mxu0 0.0
        %1184 = vmatpush1.msra.mxu0 0.0
        %1185 = vmatprep.subr.mxu0 0.0
        %1186 = vmatpush1.msra.mxu0 0.0
        %1187 = vmatprep.subr.mxu0 0.0
        %1188 = vmatpush1.msra.mxu0 0.0
        %1189 = vmatprep.subr.mxu0 0.0
        %1190 = vmatpush1.msra.mxu0 0.0
        %1191 = vmatprep.subr.mxu0 0.0
        %1192 = vmatpush1.msra.mxu0 0.0
        %1193 = vmatprep.subr.mxu0 0.0
        %1194 = vmatpush1.msra.mxu0 0.0
        %1195 = vmatprep.subr.mxu0 0.0
        %1196 = vmatpush1.msra.mxu0 0.0
        %1197 = vmatprep.subr.mxu0 0.0
        %1198 = vmatpush1.msra.mxu0 0.0
        %1199 = vmatprep.subr.mxu0 0.0
        %1200 = vmatpush1.msra.mxu0 0.0
        %1201 = vmatprep.subr.mxu0 0.0
        %1202 = vmatpush1.msra.mxu0 0.0
        %1203 = vmatprep.subr.mxu0 0.0
        %1204 = vmatpush1.msra.mxu0 0.0
        %1205 = vmatprep.subr.mxu0 0.0
        %1206 = vmatpush1.msra.mxu0 0.0
        %1207 = vmatprep.subr.mxu0 0.0
        %1208 = vmatpush1.msra.mxu0 0.0
        %1209 = vmatprep.subr.mxu0 0.0
        %1210 = vmatpush1.msra.mxu0 0.0
        %1211 = vmatprep.subr.mxu0 0.0
        %1212 = vmatpush1.msra.mxu0 0.0
        %1213 = vmatprep.subr.mxu0 0.0
        %1214 = vmatpush1.msra.mxu0 0.0
        %1215 = vmatprep.subr.mxu0 0.0
        %1216 = vmatpush1.msra.mxu0 0.0
        %1217 = vmatprep.subr.mxu0 0.0
        %1218 = vmatpush1.msra.mxu0 0.0
        %1219 = vmatprep.subr.mxu0 0.0
        %1220 = vmatpush1.msra.mxu0 0.0
        %1221 = vmatprep.subr.mxu0 0.0
        %1222 = vmatpush1.msra.mxu0 0.0
        %1223 = vmatprep.subr.mxu0 0.0
        %1224 = vmatpush1.msra.mxu0 0.0
        %1225 = vmatprep.subr.mxu0 0.0
        %1226 = vmatpush1.msra.mxu0 0.0
        %1227 = vmatprep.subr.mxu0 0.0
        %1228 = vmatpush1.msra.mxu0 0.0
        %1229 = vmatprep.subr.mxu0 0.0
        %1230 = vmatpush1.msra.mxu0 0.0
        %1231 = vmatprep.subr.mxu0 0.0
        %1232 = vmatpush1.msra.mxu0 0.0
        %1233 = vmatprep.subr.mxu0 0.0
        %1234 = vmatpush1.msra.mxu0 0.0
        %1235 = vmatprep.subr.mxu0 0.0
        %1236 = vmatpush1.msra.mxu0 0.0
        %1237 = vmatprep.subr.mxu0 0.0
        %1238 = vmatpush1.msra.mxu0 0.0
        %1239 = vmatprep.mubr.f32.mxu0 0.0
        %1240 = vmatmul.mubr.f32.gmra.mrb[0].mxu0 %v1149
        %v1241 = vpop.f32.mrb[0].mxu0
        %v1242 = vadd.f32 0.0, %v1241
        %v1243 = vpop.f32.mrb[0].mxu0
        %1244 = vmatprep.mubr.f32.mxu0 0.0
        %1245 = vmatmul.mubr.f32.gmra.mrb[0].mxu0 %v1152
        %v1246 = vpop.f32.mrb[0].mxu0
        %v1247 = vadd.f32 0.0, %v1246
        %v1248 = vpop.f32.mrb[0].mxu0
        %1249 = vmatprep.mubr.f32.mxu0 0.0
        %1250 = vmatmul.mubr.f32.gmra.mrb[0].mxu0 %v1155
        %v1251 = vpop.f32.mrb[0].mxu0
        %v1252 = vadd.f32 0.0, %v1251
        %v1253 = vpop.f32.mrb[0].mxu0
        %1254 = vmatprep.mubr.f32.mxu0 0.0
        %1255 = vmatmul.mubr.f32.gmra.mrb[0].mxu0 %v1158
        %v1256 = vpop.f32.mrb[0].mxu0
        %v1257 = vadd.f32 0.0, %v1256
        %v1258 = vpop.f32.mrb[0].mxu0
        %1259 = vmatprep.mubr.f32.mxu0 0.0
        %1260 = vmatmul.mubr.f32.gmra.mrb[0].mxu0 %v1161
        %v1261 = vpop.f32.mrb[0].mxu0
        %v1262 = vadd.f32 0.0, %v1261
        %v1263 = vpop.f32.mrb[0].mxu0
        %1264 = vmatprep.mubr.f32.mxu0 0.0
        %1265 = vmatmul.mubr.f32.gmra.mrb[0].mxu0 %v1164
        %v1266 = vpop.f32.mrb[0].mxu0
        %v1267 = vadd.f32 0.0, %v1266
        %v1268 = vpop.f32.mrb[0].mxu0
        %1269 = vmatprep.mubr.f32.mxu0 0.0
        %1270 = vmatmul.mubr.f32.gmra.mrb[0].mxu0 %v1167
        %v1271 = vpop.f32.mrb[0].mxu0
        %v1272 = vadd.f32 0.0, %v1271
        %v1273 = vpop.f32.mrb[0].mxu0
        %1274 = vmatprep.mubr.f32.mxu0 0.0
        %1275 = vmatmul.mubr.f32.gmra.mrb[0].mxu0 %v1170
        %v1276 = vpop.f32.mrb[0].mxu0
        %v1277 = vadd.f32 0.0, %v1276
        %v1278 = vpop.f32.mrb[0].mxu0
        %1279 = vdwg.mxu0
        %v1280 = vadd.f32 %v1100, %v1242
        %v1281 = vadd.f32 %v1105, %v1247
        %v1282 = vadd.f32 %v1110, %v1252
        %v1283 = vadd.f32 %v1115, %v1257
        %v1284 = vadd.f32 %v1120, %v1262
        %v1285 = vadd.f32 %v1125, %v1267
        %v1286 = vadd.f32 %v1130, %v1272
        %v1287 = vadd.f32 %v1135, %v1277
        %v1288 = vadd.f32 %v874, %v1280
        %v1289 = vadd.f32 %v875, %v1281
        %v1290 = vadd.f32 %v876, %v1282
        %v1291 = vadd.f32 %v877, %v1283
        %v1292 = vadd.f32 %v878, %v1284
        %v1293 = vadd.f32 %v879, %v1285
        %v1294 = vadd.f32 %v880, %v1286
        %v1295 = vadd.f32 %v881, %v1287
        %v1296 = vld [vmem:[#allocation2 + $0x2] sm:$0xff]
        %v1297 = vld [vmem:[#allocation2 + $0xa] sm:$0xff]
        %v1298 = vld [vmem:[#allocation2 + $0x12] sm:$0xff]
        %v1299 = vld [vmem:[#allocation2 + $0x1a] sm:$0xff]
        %v1300 = vld [vmem:[#allocation2 + $0x22] sm:$0xff]
        %v1301 = vld [vmem:[#allocation2 + $0x2a] sm:$0xff]
        %v1302 = vld [vmem:[#allocation2 + $0x32] sm:$0xff]
        %v1303 = vld [vmem:[#allocation2 + $0x3a] sm:$0xff]
        %s1304 = scalar_lea.vmem %s1, 8
        %v1305 = vld [vmem:[%s1304] sm:$0xf]
        %v1306 = vld [vmem:[#allocation2 + $0x42] sm:$0xff]
        %s1307 = scalar_lea.vmem %s1, 20
        %v1308 = vld [vmem:[%s1307] sm:$0xf]
        %v1310 = vsel %vm430, %v1297, 0
        %v1313 = vsel %vm430, %v1298, 0
        %v1316 = vsel %vm430, %v1299, 0
        %v1319 = vsel %vm430, %v1300, 0
        %v1322 = vsel %vm430, %v1301, 0
        %v1325 = vsel %vm430, %v1302, 0
        %v1328 = vsel %vm430, %v1303, 0
        %v1331 = vsel %vm430, %v1306, 0
        %v1334 = vsel %vm480, %v1308, 0
        %1336 = vmatprep.subr.mxu0 0.0
        %1337 = vmatpush1.msra.mxu0 %v1334
        %1338 = vmatprep.subr.mxu0 0.0
        %1339 = vmatpush1.msra.mxu0 0.0
        %1340 = vmatprep.subr.mxu0 0.0
        %1341 = vmatpush1.msra.mxu0 0.0
        %1342 = vmatprep.subr.mxu0 0.0
        %1343 = vmatpush1.msra.mxu0 0.0
        %1344 = vmatprep.subr.mxu0 0.0
        %1345 = vmatpush1.msra.mxu0 0.0
        %1346 = vmatprep.subr.mxu0 0.0
        %1347 = vmatpush1.msra.mxu0 0.0
        %1348 = vmatprep.subr.mxu0 0.0
        %1349 = vmatpush1.msra.mxu0 0.0
        %1350 = vmatprep.subr.mxu0 0.0
        %1351 = vmatpush1.msra.mxu0 0.0
        %1352 = vmatprep.subr.mxu0 0.0
        %1353 = vmatpush1.msra.mxu0 0.0
        %1354 = vmatprep.subr.mxu0 0.0
        %1355 = vmatpush1.msra.mxu0 0.0
        %1356 = vmatprep.subr.mxu0 0.0
        %1357 = vmatpush1.msra.mxu0 0.0
        %1358 = vmatprep.subr.mxu0 0.0
        %1359 = vmatpush1.msra.mxu0 0.0
        %1360 = vmatprep.subr.mxu0 0.0
        %1361 = vmatpush1.msra.mxu0 0.0
        %1362 = vmatprep.subr.mxu0 0.0
        %1363 = vmatpush1.msra.mxu0 0.0
        %1364 = vmatprep.subr.mxu0 0.0
        %1365 = vmatpush1.msra.mxu0 0.0
        %1366 = vmatprep.subr.mxu0 0.0
        %1367 = vmatpush1.msra.mxu0 0.0
        %1368 = vmatprep.subr.mxu0 0.0
        %1369 = vmatpush1.msra.mxu0 0.0
        %1370 = vmatprep.subr.mxu0 0.0
        %1371 = vmatpush1.msra.mxu0 0.0
        %1372 = vmatprep.subr.mxu0 0.0
        %1373 = vmatpush1.msra.mxu0 0.0
        %1374 = vmatprep.subr.mxu0 0.0
        %1375 = vmatpush1.msra.mxu0 0.0
        %1376 = vmatprep.subr.mxu0 0.0
        %1377 = vmatpush1.msra.mxu0 0.0
        %1378 = vmatprep.subr.mxu0 0.0
        %1379 = vmatpush1.msra.mxu0 0.0
        %1380 = vmatprep.subr.mxu0 0.0
        %1381 = vmatpush1.msra.mxu0 0.0
        %1382 = vmatprep.subr.mxu0 0.0
        %1383 = vmatpush1.msra.mxu0 0.0
        %1384 = vmatprep.subr.mxu0 0.0
        %1385 = vmatpush1.msra.mxu0 0.0
        %1386 = vmatprep.subr.mxu0 0.0
        %1387 = vmatpush1.msra.mxu0 0.0
        %1388 = vmatprep.subr.mxu0 0.0
        %1389 = vmatpush1.msra.mxu0 0.0
        %1390 = vmatprep.subr.mxu0 0.0
        %1391 = vmatpush1.msra.mxu0 0.0
        %1392 = vmatprep.subr.mxu0 0.0
        %1393 = vmatpush1.msra.mxu0 0.0
        %1394 = vmatprep.subr.mxu0 0.0
        %1395 = vmatpush1.msra.mxu0 0.0
        %1396 = vmatprep.subr.mxu0 0.0
        %1397 = vmatpush1.msra.mxu0 0.0
        %1398 = vmatprep.subr.mxu0 0.0
        %1399 = vmatpush1.msra.mxu0 0.0
        %1400 = vmatprep.mubr.f32.mxu0 0.0
        %1401 = vmatmul.mubr.f32.gmra.mrb[0].mxu0 %v1310
        %v1402 = vpop.f32.mrb[0].mxu0
        %v1403 = vadd.f32 0.0, %v1402
        %v1404 = vpop.f32.mrb[0].mxu0
        %1405 = vmatprep.mubr.f32.mxu0 0.0
        %1406 = vmatmul.mubr.f32.gmra.mrb[0].mxu0 %v1313
        %v1407 = vpop.f32.mrb[0].mxu0
        %v1408 = vadd.f32 0.0, %v1407
        %v1409 = vpop.f32.mrb[0].mxu0
        %1410 = vmatprep.mubr.f32.mxu0 0.0
        %1411 = vmatmul.mubr.f32.gmra.mrb[0].mxu0 %v1316
        %v1412 = vpop.f32.mrb[0].mxu0
        %v1413 = vadd.f32 0.0, %v1412
        %v1414 = vpop.f32.mrb[0].mxu0
        %1415 = vmatprep.mubr.f32.mxu0 0.0
        %1416 = vmatmul.mubr.f32.gmra.mrb[0].mxu0 %v1319
        %v1417 = vpop.f32.mrb[0].mxu0
        %v1418 = vadd.f32 0.0, %v1417
        %v1419 = vpop.f32.mrb[0].mxu0
        %1420 = vmatprep.mubr.f32.mxu0 0.0
        %1421 = vmatmul.mubr.f32.gmra.mrb[0].mxu0 %v1322
        %v1422 = vpop.f32.mrb[0].mxu0
        %v1423 = vadd.f32 0.0, %v1422
        %v1424 = vpop.f32.mrb[0].mxu0
        %1425 = vmatprep.mubr.f32.mxu0 0.0
        %1426 = vmatmul.mubr.f32.gmra.mrb[0].mxu0 %v1325
        %v1427 = vpop.f32.mrb[0].mxu0
        %v1428 = vadd.f32 0.0, %v1427
        %v1429 = vpop.f32.mrb[0].mxu0
        %1430 = vmatprep.mubr.f32.mxu0 0.0
        %1431 = vmatmul.mubr.f32.gmra.mrb[0].mxu0 %v1328
        %v1432 = vpop.f32.mrb[0].mxu0
        %v1433 = vadd.f32 0.0, %v1432
        %v1434 = vpop.f32.mrb[0].mxu0
        %1435 = vmatprep.mubr.f32.mxu0 0.0
        %1436 = vmatmul.mubr.f32.gmra.mrb[0].mxu0 %v1331
        %v1437 = vpop.f32.mrb[0].mxu0
        %v1438 = vadd.f32 0.0, %v1437
        %v1439 = vpop.f32.mrb[0].mxu0
        %1440 = vdwg.mxu0
        %v1442 = vsel %vm430, %v1296, 0
        %v1445 = vsel %vm480, %v1305, 0
        %1447 = vmatprep.subr.mxu0 0.0
        %1448 = vmatpush1.msra.mxu0 %v1445
        %1449 = vmatprep.subr.mxu0 0.0
        %1450 = vmatpush1.msra.mxu0 0.0
        %1451 = vmatprep.subr.mxu0 0.0
        %1452 = vmatpush1.msra.mxu0 0.0
        %1453 = vmatprep.subr.mxu0 0.0
        %1454 = vmatpush1.msra.mxu0 0.0
        %1455 = vmatprep.subr.mxu0 0.0
        %1456 = vmatpush1.msra.mxu0 0.0
        %1457 = vmatprep.subr.mxu0 0.0
        %1458 = vmatpush1.msra.mxu0 0.0
        %1459 = vmatprep.subr.mxu0 0.0
        %1460 = vmatpush1.msra.mxu0 0.0
        %1461 = vmatprep.subr.mxu0 0.0
        %1462 = vmatpush1.msra.mxu0 0.0
        %1463 = vmatprep.subr.mxu0 0.0
        %1464 = vmatpush1.msra.mxu0 0.0
        %1465 = vmatprep.subr.mxu0 0.0
        %1466 = vmatpush1.msra.mxu0 0.0
        %1467 = vmatprep.subr.mxu0 0.0
        %1468 = vmatpush1.msra.mxu0 0.0
        %1469 = vmatprep.subr.mxu0 0.0
        %1470 = vmatpush1.msra.mxu0 0.0
        %1471 = vmatprep.subr.mxu0 0.0
        %1472 = vmatpush1.msra.mxu0 0.0
        %1473 = vmatprep.subr.mxu0 0.0
        %1474 = vmatpush1.msra.mxu0 0.0
        %1475 = vmatprep.subr.mxu0 0.0
        %1476 = vmatpush1.msra.mxu0 0.0
        %1477 = vmatprep.subr.mxu0 0.0
        %1478 = vmatpush1.msra.mxu0 0.0
        %1479 = vmatprep.subr.mxu0 0.0
        %1480 = vmatpush1.msra.mxu0 0.0
        %1481 = vmatprep.subr.mxu0 0.0
        %1482 = vmatpush1.msra.mxu0 0.0
        %1483 = vmatprep.subr.mxu0 0.0
        %1484 = vmatpush1.msra.mxu0 0.0
        %1485 = vmatprep.subr.mxu0 0.0
        %1486 = vmatpush1.msra.mxu0 0.0
        %1487 = vmatprep.subr.mxu0 0.0
        %1488 = vmatpush1.msra.mxu0 0.0
        %1489 = vmatprep.subr.mxu0 0.0
        %1490 = vmatpush1.msra.mxu0 0.0
        %1491 = vmatprep.subr.mxu0 0.0
        %1492 = vmatpush1.msra.mxu0 0.0
        %1493 = vmatprep.subr.mxu0 0.0
        %1494 = vmatpush1.msra.mxu0 0.0
        %1495 = vmatprep.subr.mxu0 0.0
        %1496 = vmatpush1.msra.mxu0 0.0
        %1497 = vmatprep.subr.mxu0 0.0
        %1498 = vmatpush1.msra.mxu0 0.0
        %1499 = vmatprep.subr.mxu0 0.0
        %1500 = vmatpush1.msra.mxu0 0.0
        %1501 = vmatprep.subr.mxu0 0.0
        %1502 = vmatpush1.msra.mxu0 0.0
        %1503 = vmatprep.subr.mxu0 0.0
        %1504 = vmatpush1.msra.mxu0 0.0
        %1505 = vmatprep.subr.mxu0 0.0
        %1506 = vmatpush1.msra.mxu0 0.0
        %1507 = vmatprep.subr.mxu0 0.0
        %1508 = vmatpush1.msra.mxu0 0.0
        %1509 = vmatprep.subr.mxu0 0.0
        %1510 = vmatpush1.msra.mxu0 0.0
        %1511 = vmatprep.mubr.f32.mxu0 0.0
        %1512 = vmatmul.mubr.f32.gmra.mrb[0].mxu0 %v1442
        %v1513 = vpop.f32.mrb[0].mxu0
        %v1514 = vadd.f32 %v1403, %v1513
        %v1515 = vpop.f32.mrb[0].mxu0
        %1516 = vmatprep.mubr.f32.mxu0 0.0
        %1517 = vmatmul.mubr.f32.gmra.mrb[0].mxu0 %v1310
        %v1518 = vpop.f32.mrb[0].mxu0
        %v1519 = vadd.f32 %v1408, %v1518
        %v1520 = vpop.f32.mrb[0].mxu0
        %1521 = vmatprep.mubr.f32.mxu0 0.0
        %1522 = vmatmul.mubr.f32.gmra.mrb[0].mxu0 %v1313
        %v1523 = vpop.f32.mrb[0].mxu0
        %v1524 = vadd.f32 %v1413, %v1523
        %v1525 = vpop.f32.mrb[0].mxu0
        %1526 = vmatprep.mubr.f32.mxu0 0.0
        %1527 = vmatmul.mubr.f32.gmra.mrb[0].mxu0 %v1316
        %v1528 = vpop.f32.mrb[0].mxu0
        %v1529 = vadd.f32 %v1418, %v1528
        %v1530 = vpop.f32.mrb[0].mxu0
        %1531 = vmatprep.mubr.f32.mxu0 0.0
        %1532 = vmatmul.mubr.f32.gmra.mrb[0].mxu0 %v1319
        %v1533 = vpop.f32.mrb[0].mxu0
        %v1534 = vadd.f32 %v1423, %v1533
        %v1535 = vpop.f32.mrb[0].mxu0
        %1536 = vmatprep.mubr.f32.mxu0 0.0
        %1537 = vmatmul.mubr.f32.gmra.mrb[0].mxu0 %v1322
        %v1538 = vpop.f32.mrb[0].mxu0
        %v1539 = vadd.f32 %v1428, %v1538
        %v1540 = vpop.f32.mrb[0].mxu0
        %1541 = vmatprep.mubr.f32.mxu0 0.0
        %1542 = vmatmul.mubr.f32.gmra.mrb[0].mxu0 %v1325
        %v1543 = vpop.f32.mrb[0].mxu0
        %v1544 = vadd.f32 %v1433, %v1543
        %v1545 = vpop.f32.mrb[0].mxu0
        %1546 = vmatprep.mubr.f32.mxu0 0.0
        %1547 = vmatmul.mubr.f32.gmra.mrb[0].mxu0 %v1328
        %v1548 = vpop.f32.mrb[0].mxu0
        %v1549 = vadd.f32 %v1438, %v1548
        %v1550 = vpop.f32.mrb[0].mxu0
        %1551 = vdwg.mxu0
        %v1552 = vld [vmem:[#allocation2 + $0x12] sm:$0xff]
        %v1553 = vld [vmem:[#allocation2 + $0x1a] sm:$0xff]
        %v1554 = vld [vmem:[#allocation2 + $0x22] sm:$0xff]
        %v1555 = vld [vmem:[#allocation2 + $0x2a] sm:$0xff]
        %v1556 = vld [vmem:[#allocation2 + $0x32] sm:$0xff]
        %v1557 = vld [vmem:[#allocation2 + $0x3a] sm:$0xff]
        %v1558 = vld [vmem:[#allocation2 + $0x42] sm:$0xff]
        %v1559 = vld [vmem:[#allocation2 + $0x4a] sm:$0xff]
        %s1560 = scalar_lea.vmem %s1, 32
        %v1561 = vld [vmem:[%s1560] sm:$0xf]
        %v1563 = vsel %vm430, %v1552, 0
        %v1566 = vsel %vm430, %v1553, 0
        %v1569 = vsel %vm430, %v1554, 0
        %v1572 = vsel %vm430, %v1555, 0
        %v1575 = vsel %vm430, %v1556, 0
        %v1578 = vsel %vm430, %v1557, 0
        %v1581 = vsel %vm430, %v1558, 0
        %v1584 = vsel %vm430, %v1559, 0
        %v1587 = vsel %vm480, %v1561, 0
        %1589 = vmatprep.subr.mxu0 0.0
        %1590 = vmatpush1.msra.mxu0 %v1587
        %1591 = vmatprep.subr.mxu0 0.0
        %1592 = vmatpush1.msra.mxu0 0.0
        %1593 = vmatprep.subr.mxu0 0.0
        %1594 = vmatpush1.msra.mxu0 0.0
        %1595 = vmatprep.subr.mxu0 0.0
        %1596 = vmatpush1.msra.mxu0 0.0
        %1597 = vmatprep.subr.mxu0 0.0
        %1598 = vmatpush1.msra.mxu0 0.0
        %1599 = vmatprep.subr.mxu0 0.0
        %1600 = vmatpush1.msra.mxu0 0.0
        %1601 = vmatprep.subr.mxu0 0.0
        %1602 = vmatpush1.msra.mxu0 0.0
        %1603 = vmatprep.subr.mxu0 0.0
        %1604 = vmatpush1.msra.mxu0 0.0
        %1605 = vmatprep.subr.mxu0 0.0
        %1606 = vmatpush1.msra.mxu0 0.0
        %1607 = vmatprep.subr.mxu0 0.0
        %1608 = vmatpush1.msra.mxu0 0.0
        %1609 = vmatprep.subr.mxu0 0.0
        %1610 = vmatpush1.msra.mxu0 0.0
        %1611 = vmatprep.subr.mxu0 0.0
        %1612 = vmatpush1.msra.mxu0 0.0
        %1613 = vmatprep.subr.mxu0 0.0
        %1614 = vmatpush1.msra.mxu0 0.0
        %1615 = vmatprep.subr.mxu0 0.0
        %1616 = vmatpush1.msra.mxu0 0.0
        %1617 = vmatprep.subr.mxu0 0.0
        %1618 = vmatpush1.msra.mxu0 0.0
        %1619 = vmatprep.subr.mxu0 0.0
        %1620 = vmatpush1.msra.mxu0 0.0
        %1621 = vmatprep.subr.mxu0 0.0
        %1622 = vmatpush1.msra.mxu0 0.0
        %1623 = vmatprep.subr.mxu0 0.0
        %1624 = vmatpush1.msra.mxu0 0.0
        %1625 = vmatprep.subr.mxu0 0.0
        %1626 = vmatpush1.msra.mxu0 0.0
        %1627 = vmatprep.subr.mxu0 0.0
        %1628 = vmatpush1.msra.mxu0 0.0
        %1629 = vmatprep.subr.mxu0 0.0
        %1630 = vmatpush1.msra.mxu0 0.0
        %1631 = vmatprep.subr.mxu0 0.0
        %1632 = vmatpush1.msra.mxu0 0.0
        %1633 = vmatprep.subr.mxu0 0.0
        %1634 = vmatpush1.msra.mxu0 0.0
        %1635 = vmatprep.subr.mxu0 0.0
        %1636 = vmatpush1.msra.mxu0 0.0
        %1637 = vmatprep.subr.mxu0 0.0
        %1638 = vmatpush1.msra.mxu0 0.0
        %1639 = vmatprep.subr.mxu0 0.0
        %1640 = vmatpush1.msra.mxu0 0.0
        %1641 = vmatprep.subr.mxu0 0.0
        %1642 = vmatpush1.msra.mxu0 0.0
        %1643 = vmatprep.subr.mxu0 0.0
        %1644 = vmatpush1.msra.mxu0 0.0
        %1645 = vmatprep.subr.mxu0 0.0
        %1646 = vmatpush1.msra.mxu0 0.0
        %1647 = vmatprep.subr.mxu0 0.0
        %1648 = vmatpush1.msra.mxu0 0.0
        %1649 = vmatprep.subr.mxu0 0.0
        %1650 = vmatpush1.msra.mxu0 0.0
        %1651 = vmatprep.subr.mxu0 0.0
        %1652 = vmatpush1.msra.mxu0 0.0
        %1653 = vmatprep.mubr.f32.mxu0 0.0
        %1654 = vmatmul.mubr.f32.gmra.mrb[0].mxu0 %v1563
        %v1655 = vpop.f32.mrb[0].mxu0
        %v1656 = vadd.f32 0.0, %v1655
        %v1657 = vpop.f32.mrb[0].mxu0
        %1658 = vmatprep.mubr.f32.mxu0 0.0
        %1659 = vmatmul.mubr.f32.gmra.mrb[0].mxu0 %v1566
        %v1660 = vpop.f32.mrb[0].mxu0
        %v1661 = vadd.f32 0.0, %v1660
        %v1662 = vpop.f32.mrb[0].mxu0
        %1663 = vmatprep.mubr.f32.mxu0 0.0
        %1664 = vmatmul.mubr.f32.gmra.mrb[0].mxu0 %v1569
        %v1665 = vpop.f32.mrb[0].mxu0
        %v1666 = vadd.f32 0.0, %v1665
        %v1667 = vpop.f32.mrb[0].mxu0
        %1668 = vmatprep.mubr.f32.mxu0 0.0
        %1669 = vmatmul.mubr.f32.gmra.mrb[0].mxu0 %v1572
        %v1670 = vpop.f32.mrb[0].mxu0
        %v1671 = vadd.f32 0.0, %v1670
        %v1672 = vpop.f32.mrb[0].mxu0
        %1673 = vmatprep.mubr.f32.mxu0 0.0
        %1674 = vmatmul.mubr.f32.gmra.mrb[0].mxu0 %v1575
        %v1675 = vpop.f32.mrb[0].mxu0
        %v1676 = vadd.f32 0.0, %v1675
        %v1677 = vpop.f32.mrb[0].mxu0
        %1678 = vmatprep.mubr.f32.mxu0 0.0
        %1679 = vmatmul.mubr.f32.gmra.mrb[0].mxu0 %v1578
        %v1680 = vpop.f32.mrb[0].mxu0
        %v1681 = vadd.f32 0.0, %v1680
        %v1682 = vpop.f32.mrb[0].mxu0
        %1683 = vmatprep.mubr.f32.mxu0 0.0
        %1684 = vmatmul.mubr.f32.gmra.mrb[0].mxu0 %v1581
        %v1685 = vpop.f32.mrb[0].mxu0
        %v1686 = vadd.f32 0.0, %v1685
        %v1687 = vpop.f32.mrb[0].mxu0
        %1688 = vmatprep.mubr.f32.mxu0 0.0
        %1689 = vmatmul.mubr.f32.gmra.mrb[0].mxu0 %v1584
        %v1690 = vpop.f32.mrb[0].mxu0
        %v1691 = vadd.f32 0.0, %v1690
        %v1692 = vpop.f32.mrb[0].mxu0
        %1693 = vdwg.mxu0
        %v1694 = vadd.f32 %v1514, %v1656
        %v1695 = vadd.f32 %v1519, %v1661
        %v1696 = vadd.f32 %v1524, %v1666
        %v1697 = vadd.f32 %v1529, %v1671
        %v1698 = vadd.f32 %v1534, %v1676
        %v1699 = vadd.f32 %v1539, %v1681
        %v1700 = vadd.f32 %v1544, %v1686
        %v1701 = vadd.f32 %v1549, %v1691
        %v1702 = vsel %vm422, 1, 0
        %v1703 = vsel %vm423, 1, 0
        %v1704 = vsel %vm424, 1, 0
        %v1705 = vsel %vm425, 1, 0
        %v1706 = vsel %vm426, 1, 0
        %v1707 = vsel %vm427, 1, 0
        %v1708 = vsel %vm428, 1, 0
        %v1709 = vsel %vm429, 1, 0
        %vm1710 = vcmp.eq.s32.totalorder %v1702, 1
        %vm1711 = vcmp.eq.s32.totalorder %v1703, 1
        %vm1712 = vcmp.eq.s32.totalorder %v1704, 1
        %vm1713 = vcmp.eq.s32.totalorder %v1705, 1
        %vm1714 = vcmp.eq.s32.totalorder %v1706, 1
        %vm1715 = vcmp.eq.s32.totalorder %v1707, 1
        %vm1716 = vcmp.eq.s32.totalorder %v1708, 1
        %vm1717 = vcmp.eq.s32.totalorder %v1709, 1
        %v1718 = vsel %vm1710, 0.0, %v1694
        %v1719 = vsel %vm1711, 0.0, %v1695
        %v1720 = vsel %vm1712, 0.0, %v1696
        %v1721 = vsel %vm1713, 0.0, %v1697
        %v1722 = vsel %vm1714, 0.0, %v1698
        %v1723 = vsel %vm1715, 0.0, %v1699
        %v1724 = vsel %vm1716, 0.0, %v1700
        %v1725 = vsel %vm1717, 0.0, %v1701
        %v1726 = vadd.f32 %v1288, %v1718
        %v1727 = vadd.f32 %v1289, %v1719
        %v1728 = vadd.f32 %v1290, %v1720
        %v1729 = vadd.f32 %v1291, %v1721
        %v1730 = vadd.f32 %v1292, %v1722
        %v1731 = vadd.f32 %v1293, %v1723
        %v1732 = vadd.f32 %v1294, %v1724
        %v1733 = vadd.f32 %v1295, %v1725
        %v1734 = vld [vmem:[%s2] sm:$0x1]
        %v1736 = vlaneseq
        %v1737 = vshrl.u32 %v1736, 7
        %v1738 = vsub.s32 0, %v1737
        %v1739 = vrot.slane %v1734, %v1738
        %v1741 = vadd.f32 %v1726, %v1739
        %v1742 = vadd.f32 %v1727, %v1739
        %v1743 = vadd.f32 %v1728, %v1739
        %v1744 = vadd.f32 %v1729, %v1739
        %v1745 = vadd.f32 %v1730, %v1739
        %v1746 = vadd.f32 %v1731, %v1739
        %v1747 = vadd.f32 %v1732, %v1739
        %v1748 = vadd.f32 %v1733, %v1739
        %v1749 = vmax.f32 %v1741, 0.0
        %v1750 = vmax.f32 %v1742, 0.0
        %v1751 = vmax.f32 %v1743, 0.0
        %v1752 = vmax.f32 %v1744, 0.0
        %v1753 = vmax.f32 %v1745, 0.0
        %v1754 = vmax.f32 %v1746, 0.0
        %v1755 = vmax.f32 %v1747, 0.0
        %v1756 = vmax.f32 %v1748, 0.0
        %vm1757 = vcmask 64512
        %1758 = vst.msk [vmem:[#allocation3] sm:$0xff] %vm1757, 0.0
        %vm1759 = vcmask 57344
        %1760 = vst.msk [vmem:[#allocation3 + $0x8] sm:$0x1] %vm1759, 0.0
        %1761 = vst.msk [vmem:[#allocation3 + $0x9] sm:$0xff] %vm1757, %v1749
        %1762 = vst.msk [vmem:[#allocation3 + $0x11] sm:$0xff] %vm1757, %v1750
        %1763 = vst.msk [vmem:[#allocation3 + $0x19] sm:$0xff] %vm1757, %v1751
        %1764 = vst.msk [vmem:[#allocation3 + $0x21] sm:$0xff] %vm1757, %v1752
        %1765 = vst.msk [vmem:[#allocation3 + $0x29] sm:$0xff] %vm1757, %v1753
        %1766 = vst.msk [vmem:[#allocation3 + $0x31] sm:$0xff] %vm1757, %v1754
        %1767 = vst.msk [vmem:[#allocation3 + $0x39] sm:$0xff] %vm1757, %v1755
        %1768 = vst.msk [vmem:[#allocation3 + $0x41] sm:$0xff] %vm1757, %v1756
        %1769 = vst.msk [vmem:[#allocation3 + $0x49] sm:$0xff] %vm1757, 0.0
        %1770 = vst.msk [vmem:[#allocation3 + $0x51] sm:$0x1] %vm1759, 0.0
        %v1771 = vld [vmem:[#allocation3] sm:$0xff]
        %v1772 = vld [vmem:[#allocation3 + $0x8] sm:$0xff]
        %v1773 = vld [vmem:[#allocation3 + $0x10] sm:$0xff]
        %v1774 = vld [vmem:[#allocation3 + $0x18] sm:$0xff]
        %v1775 = vld [vmem:[#allocation3 + $0x20] sm:$0xff]
        %v1776 = vld [vmem:[#allocation3 + $0x28] sm:$0xff]
        %v1777 = vld [vmem:[#allocation3 + $0x30] sm:$0xff]
        %v1778 = vld [vmem:[#allocation3 + $0x38] sm:$0xff]
        %v1779 = vld [vmem:[%s3] sm:$0xff]
        %v1780 = vld [vmem:[#allocation3 + $0x40] sm:$0xff]
        %s1781 = scalar_lea.vmem %s3, 24
        %v1782 = vld [vmem:[%s1781] sm:$0xff]
        %v1784 = vsel %vm1757, %v1772, 0
        %v1787 = vsel %vm1757, %v1773, 0
        %v1790 = vsel %vm1757, %v1774, 0
        %v1793 = vsel %vm1757, %v1775, 0
        %v1796 = vsel %vm1757, %v1776, 0
        %v1799 = vsel %vm1757, %v1777, 0
        %v1802 = vsel %vm1757, %v1778, 0
        %v1805 = vsel %vm1757, %v1780, 0
        %1807 = vmatprep.subr.mxu0 0.0
        %1808 = vmatpush1.msra.mxu0 %v1782
        %1809 = vmatprep.subr.mxu0 0.0
        %1810 = vmatpush1.msra.mxu0 0.0
        %1811 = vmatprep.subr.mxu0 0.0
        %1812 = vmatpush1.msra.mxu0 0.0
        %1813 = vmatprep.subr.mxu0 0.0
        %1814 = vmatpush1.msra.mxu0 0.0
        %1815 = vmatprep.subr.mxu0 0.0
        %1816 = vmatpush1.msra.mxu0 0.0
        %1817 = vmatprep.subr.mxu0 0.0
        %1818 = vmatpush1.msra.mxu0 0.0
        %1819 = vmatprep.subr.mxu0 0.0
        %1820 = vmatpush1.msra.mxu0 0.0
        %1821 = vmatprep.subr.mxu0 0.0
        %1822 = vmatpush1.msra.mxu0 0.0
        %1823 = vmatprep.subr.mxu0 0.0
        %1824 = vmatpush1.msra.mxu0 0.0
        %1825 = vmatprep.subr.mxu0 0.0
        %1826 = vmatpush1.msra.mxu0 0.0
        %1827 = vmatprep.subr.mxu0 0.0
        %1828 = vmatpush1.msra.mxu0 0.0
        %1829 = vmatprep.subr.mxu0 0.0
        %1830 = vmatpush1.msra.mxu0 0.0
        %1831 = vmatprep.subr.mxu0 0.0
        %1832 = vmatpush1.msra.mxu0 0.0
        %1833 = vmatprep.subr.mxu0 0.0
        %1834 = vmatpush1.msra.mxu0 0.0
        %1835 = vmatprep.subr.mxu0 0.0
        %1836 = vmatpush1.msra.mxu0 0.0
        %1837 = vmatprep.subr.mxu0 0.0
        %1838 = vmatpush1.msra.mxu0 0.0
        %1839 = vmatprep.subr.mxu0 0.0
        %1840 = vmatpush1.msra.mxu0 0.0
        %1841 = vmatprep.subr.mxu0 0.0
        %1842 = vmatpush1.msra.mxu0 0.0
        %1843 = vmatprep.subr.mxu0 0.0
        %1844 = vmatpush1.msra.mxu0 0.0
        %1845 = vmatprep.subr.mxu0 0.0
        %1846 = vmatpush1.msra.mxu0 0.0
        %1847 = vmatprep.subr.mxu0 0.0
        %1848 = vmatpush1.msra.mxu0 0.0
        %1849 = vmatprep.subr.mxu0 0.0
        %1850 = vmatpush1.msra.mxu0 0.0
        %1851 = vmatprep.subr.mxu0 0.0
        %1852 = vmatpush1.msra.mxu0 0.0
        %1853 = vmatprep.subr.mxu0 0.0
        %1854 = vmatpush1.msra.mxu0 0.0
        %1855 = vmatprep.subr.mxu0 0.0
        %1856 = vmatpush1.msra.mxu0 0.0
        %1857 = vmatprep.subr.mxu0 0.0
        %1858 = vmatpush1.msra.mxu0 0.0
        %1859 = vmatprep.subr.mxu0 0.0
        %1860 = vmatpush1.msra.mxu0 0.0
        %1861 = vmatprep.subr.mxu0 0.0
        %1862 = vmatpush1.msra.mxu0 0.0
        %1863 = vmatprep.subr.mxu0 0.0
        %1864 = vmatpush1.msra.mxu0 0.0
        %1865 = vmatprep.subr.mxu0 0.0
        %1866 = vmatpush1.msra.mxu0 0.0
        %1867 = vmatprep.subr.mxu0 0.0
        %1868 = vmatpush1.msra.mxu0 0.0
        %1869 = vmatprep.subr.mxu0 0.0
        %1870 = vmatpush1.msra.mxu0 0.0
        %1871 = vmatprep.mubr.f32.mxu0 0.0
        %1872 = vmatmul.mubr.f32.gmra.mrb[0].mxu0 %v1784
        %v1873 = vpop.f32.mrb[0].mxu0
        %v1874 = vadd.f32 0.0, %v1873
        %v1875 = vpop.f32.mrb[0].mxu0
        %1876 = vmatprep.mubr.f32.mxu0 0.0
        %1877 = vmatmul.mubr.f32.gmra.mrb[0].mxu0 %v1787
        %v1878 = vpop.f32.mrb[0].mxu0
        %v1879 = vadd.f32 0.0, %v1878
        %v1880 = vpop.f32.mrb[0].mxu0
        %1881 = vmatprep.mubr.f32.mxu0 0.0
        %1882 = vmatmul.mubr.f32.gmra.mrb[0].mxu0 %v1790
        %v1883 = vpop.f32.mrb[0].mxu0
        %v1884 = vadd.f32 0.0, %v1883
        %v1885 = vpop.f32.mrb[0].mxu0
        %1886 = vmatprep.mubr.f32.mxu0 0.0
        %1887 = vmatmul.mubr.f32.gmra.mrb[0].mxu0 %v1793
        %v1888 = vpop.f32.mrb[0].mxu0
        %v1889 = vadd.f32 0.0, %v1888
        %v1890 = vpop.f32.mrb[0].mxu0
        %1891 = vmatprep.mubr.f32.mxu0 0.0
        %1892 = vmatmul.mubr.f32.gmra.mrb[0].mxu0 %v1796
        %v1893 = vpop.f32.mrb[0].mxu0
        %v1894 = vadd.f32 0.0, %v1893
        %v1895 = vpop.f32.mrb[0].mxu0
        %1896 = vmatprep.mubr.f32.mxu0 0.0
        %1897 = vmatmul.mubr.f32.gmra.mrb[0].mxu0 %v1799
        %v1898 = vpop.f32.mrb[0].mxu0
        %v1899 = vadd.f32 0.0, %v1898
        %v1900 = vpop.f32.mrb[0].mxu0
        %1901 = vmatprep.mubr.f32.mxu0 0.0
        %1902 = vmatmul.mubr.f32.gmra.mrb[0].mxu0 %v1802
        %v1903 = vpop.f32.mrb[0].mxu0
        %v1904 = vadd.f32 0.0, %v1903
        %v1905 = vpop.f32.mrb[0].mxu0
        %1906 = vmatprep.mubr.f32.mxu0 0.0
        %1907 = vmatmul.mubr.f32.gmra.mrb[0].mxu0 %v1805
        %v1908 = vpop.f32.mrb[0].mxu0
        %v1909 = vadd.f32 0.0, %v1908
        %v1910 = vpop.f32.mrb[0].mxu0
        %1911 = vdwg.mxu0
        %v1913 = vsel %vm1757, %v1771, 0
        %1915 = vmatprep.subr.mxu0 0.0
        %1916 = vmatpush1.msra.mxu0 %v1779
        %1917 = vmatprep.subr.mxu0 0.0
        %1918 = vmatpush1.msra.mxu0 0.0
        %1919 = vmatprep.subr.mxu0 0.0
        %1920 = vmatpush1.msra.mxu0 0.0
        %1921 = vmatprep.subr.mxu0 0.0
        %1922 = vmatpush1.msra.mxu0 0.0
        %1923 = vmatprep.subr.mxu0 0.0
        %1924 = vmatpush1.msra.mxu0 0.0
        %1925 = vmatprep.subr.mxu0 0.0
        %1926 = vmatpush1.msra.mxu0 0.0
        %1927 = vmatprep.subr.mxu0 0.0
        %1928 = vmatpush1.msra.mxu0 0.0
        %1929 = vmatprep.subr.mxu0 0.0
        %1930 = vmatpush1.msra.mxu0 0.0
        %1931 = vmatprep.subr.mxu0 0.0
        %1932 = vmatpush1.msra.mxu0 0.0
        %1933 = vmatprep.subr.mxu0 0.0
        %1934 = vmatpush1.msra.mxu0 0.0
        %1935 = vmatprep.subr.mxu0 0.0
        %1936 = vmatpush1.msra.mxu0 0.0
        %1937 = vmatprep.subr.mxu0 0.0
        %1938 = vmatpush1.msra.mxu0 0.0
        %1939 = vmatprep.subr.mxu0 0.0
        %1940 = vmatpush1.msra.mxu0 0.0
        %1941 = vmatprep.subr.mxu0 0.0
        %1942 = vmatpush1.msra.mxu0 0.0
        %1943 = vmatprep.subr.mxu0 0.0
        %1944 = vmatpush1.msra.mxu0 0.0
        %1945 = vmatprep.subr.mxu0 0.0
        %1946 = vmatpush1.msra.mxu0 0.0
        %1947 = vmatprep.subr.mxu0 0.0
        %1948 = vmatpush1.msra.mxu0 0.0
        %1949 = vmatprep.subr.mxu0 0.0
        %1950 = vmatpush1.msra.mxu0 0.0
        %1951 = vmatprep.subr.mxu0 0.0
        %1952 = vmatpush1.msra.mxu0 0.0
        %1953 = vmatprep.subr.mxu0 0.0
        %1954 = vmatpush1.msra.mxu0 0.0
        %1955 = vmatprep.subr.mxu0 0.0
        %1956 = vmatpush1.msra.mxu0 0.0
        %1957 = vmatprep.subr.mxu0 0.0
        %1958 = vmatpush1.msra.mxu0 0.0
        %1959 = vmatprep.subr.mxu0 0.0
        %1960 = vmatpush1.msra.mxu0 0.0
        %1961 = vmatprep.subr.mxu0 0.0
        %1962 = vmatpush1.msra.mxu0 0.0
        %1963 = vmatprep.subr.mxu0 0.0
        %1964 = vmatpush1.msra.mxu0 0.0
        %1965 = vmatprep.subr.mxu0 0.0
        %1966 = vmatpush1.msra.mxu0 0.0
        %1967 = vmatprep.subr.mxu0 0.0
        %1968 = vmatpush1.msra.mxu0 0.0
        %1969 = vmatprep.subr.mxu0 0.0
        %1970 = vmatpush1.msra.mxu0 0.0
        %1971 = vmatprep.subr.mxu0 0.0
        %1972 = vmatpush1.msra.mxu0 0.0
        %1973 = vmatprep.subr.mxu0 0.0
        %1974 = vmatpush1.msra.mxu0 0.0
        %1975 = vmatprep.subr.mxu0 0.0
        %1976 = vmatpush1.msra.mxu0 0.0
        %1977 = vmatprep.subr.mxu0 0.0
        %1978 = vmatpush1.msra.mxu0 0.0
        %1979 = vmatprep.mubr.f32.mxu0 0.0
        %1980 = vmatmul.mubr.f32.gmra.mrb[0].mxu0 %v1913
        %v1981 = vpop.f32.mrb[0].mxu0
        %v1982 = vadd.f32 %v1874, %v1981
        %v1983 = vpop.f32.mrb[0].mxu0
        %1984 = vmatprep.mubr.f32.mxu0 0.0
        %1985 = vmatmul.mubr.f32.gmra.mrb[0].mxu0 %v1784
        %v1986 = vpop.f32.mrb[0].mxu0
        %v1987 = vadd.f32 %v1879, %v1986
        %v1988 = vpop.f32.mrb[0].mxu0
        %1989 = vmatprep.mubr.f32.mxu0 0.0
        %1990 = vmatmul.mubr.f32.gmra.mrb[0].mxu0 %v1787
        %v1991 = vpop.f32.mrb[0].mxu0
        %v1992 = vadd.f32 %v1884, %v1991
        %v1993 = vpop.f32.mrb[0].mxu0
        %1994 = vmatprep.mubr.f32.mxu0 0.0
        %1995 = vmatmul.mubr.f32.gmra.mrb[0].mxu0 %v1790
        %v1996 = vpop.f32.mrb[0].mxu0
        %v1997 = vadd.f32 %v1889, %v1996
        %v1998 = vpop.f32.mrb[0].mxu0
        %1999 = vmatprep.mubr.f32.mxu0 0.0
        %2000 = vmatmul.mubr.f32.gmra.mrb[0].mxu0 %v1793
        %v2001 = vpop.f32.mrb[0].mxu0
        %v2002 = vadd.f32 %v1894, %v2001
        %v2003 = vpop.f32.mrb[0].mxu0
        %2004 = vmatprep.mubr.f32.mxu0 0.0
        %2005 = vmatmul.mubr.f32.gmra.mrb[0].mxu0 %v1796
        %v2006 = vpop.f32.mrb[0].mxu0
        %v2007 = vadd.f32 %v1899, %v2006
        %v2008 = vpop.f32.mrb[0].mxu0
        %2009 = vmatprep.mubr.f32.mxu0 0.0
        %2010 = vmatmul.mubr.f32.gmra.mrb[0].mxu0 %v1799
        %v2011 = vpop.f32.mrb[0].mxu0
        %v2012 = vadd.f32 %v1904, %v2011
        %v2013 = vpop.f32.mrb[0].mxu0
        %2014 = vmatprep.mubr.f32.mxu0 0.0
        %2015 = vmatmul.mubr.f32.gmra.mrb[0].mxu0 %v1802
        %v2016 = vpop.f32.mrb[0].mxu0
        %v2017 = vadd.f32 %v1909, %v2016
        %v2018 = vpop.f32.mrb[0].mxu0
        %2019 = vdwg.mxu0
        %v2020 = vld [vmem:[#allocation3 + $0x10] sm:$0xff]
        %v2021 = vld [vmem:[#allocation3 + $0x18] sm:$0xff]
        %v2022 = vld [vmem:[#allocation3 + $0x20] sm:$0xff]
        %v2023 = vld [vmem:[#allocation3 + $0x28] sm:$0xff]
        %v2024 = vld [vmem:[#allocation3 + $0x30] sm:$0xff]
        %v2025 = vld [vmem:[#allocation3 + $0x38] sm:$0xff]
        %v2026 = vld [vmem:[#allocation3 + $0x40] sm:$0xff]
        %v2027 = vld [vmem:[#allocation3 + $0x48] sm:$0xff]
        %s2028 = scalar_lea.vmem %s3, 48
        %v2029 = vld [vmem:[%s2028] sm:$0xff]
        %v2031 = vsel %vm1757, %v2020, 0
        %v2034 = vsel %vm1757, %v2021, 0
        %v2037 = vsel %vm1757, %v2022, 0
        %v2040 = vsel %vm1757, %v2023, 0
        %v2043 = vsel %vm1757, %v2024, 0
        %v2046 = vsel %vm1757, %v2025, 0
        %v2049 = vsel %vm1757, %v2026, 0
        %v2052 = vsel %vm1757, %v2027, 0
        %2054 = vmatprep.subr.mxu0 0.0
        %2055 = vmatpush1.msra.mxu0 %v2029
        %2056 = vmatprep.subr.mxu0 0.0
        %2057 = vmatpush1.msra.mxu0 0.0
        %2058 = vmatprep.subr.mxu0 0.0
        %2059 = vmatpush1.msra.mxu0 0.0
        %2060 = vmatprep.subr.mxu0 0.0
        %2061 = vmatpush1.msra.mxu0 0.0
        %2062 = vmatprep.subr.mxu0 0.0
        %2063 = vmatpush1.msra.mxu0 0.0
        %2064 = vmatprep.subr.mxu0 0.0
        %2065 = vmatpush1.msra.mxu0 0.0
        %2066 = vmatprep.subr.mxu0 0.0
        %2067 = vmatpush1.msra.mxu0 0.0
        %2068 = vmatprep.subr.mxu0 0.0
        %2069 = vmatpush1.msra.mxu0 0.0
        %2070 = vmatprep.subr.mxu0 0.0
        %2071 = vmatpush1.msra.mxu0 0.0
        %2072 = vmatprep.subr.mxu0 0.0
        %2073 = vmatpush1.msra.mxu0 0.0
        %2074 = vmatprep.subr.mxu0 0.0
        %2075 = vmatpush1.msra.mxu0 0.0
        %2076 = vmatprep.subr.mxu0 0.0
        %2077 = vmatpush1.msra.mxu0 0.0
        %2078 = vmatprep.subr.mxu0 0.0
        %2079 = vmatpush1.msra.mxu0 0.0
        %2080 = vmatprep.subr.mxu0 0.0
        %2081 = vmatpush1.msra.mxu0 0.0
        %2082 = vmatprep.subr.mxu0 0.0
        %2083 = vmatpush1.msra.mxu0 0.0
        %2084 = vmatprep.subr.mxu0 0.0
        %2085 = vmatpush1.msra.mxu0 0.0
        %2086 = vmatprep.subr.mxu0 0.0
        %2087 = vmatpush1.msra.mxu0 0.0
        %2088 = vmatprep.subr.mxu0 0.0
        %2089 = vmatpush1.msra.mxu0 0.0
        %2090 = vmatprep.subr.mxu0 0.0
        %2091 = vmatpush1.msra.mxu0 0.0
        %2092 = vmatprep.subr.mxu0 0.0
        %2093 = vmatpush1.msra.mxu0 0.0
        %2094 = vmatprep.subr.mxu0 0.0
        %2095 = vmatpush1.msra.mxu0 0.0
        %2096 = vmatprep.subr.mxu0 0.0
        %2097 = vmatpush1.msra.mxu0 0.0
        %2098 = vmatprep.subr.mxu0 0.0
        %2099 = vmatpush1.msra.mxu0 0.0
        %2100 = vmatprep.subr.mxu0 0.0
        %2101 = vmatpush1.msra.mxu0 0.0
        %2102 = vmatprep.subr.mxu0 0.0
        %2103 = vmatpush1.msra.mxu0 0.0
        %2104 = vmatprep.subr.mxu0 0.0
        %2105 = vmatpush1.msra.mxu0 0.0
        %2106 = vmatprep.subr.mxu0 0.0
        %2107 = vmatpush1.msra.mxu0 0.0
        %2108 = vmatprep.subr.mxu0 0.0
        %2109 = vmatpush1.msra.mxu0 0.0
        %2110 = vmatprep.subr.mxu0 0.0
        %2111 = vmatpush1.msra.mxu0 0.0
        %2112 = vmatprep.subr.mxu0 0.0
        %2113 = vmatpush1.msra.mxu0 0.0
        %2114 = vmatprep.subr.mxu0 0.0
        %2115 = vmatpush1.msra.mxu0 0.0
        %2116 = vmatprep.subr.mxu0 0.0
        %2117 = vmatpush1.msra.mxu0 0.0
        %2118 = vmatprep.mubr.f32.mxu0 0.0
        %2119 = vmatmul.mubr.f32.gmra.mrb[0].mxu0 %v2031
        %v2120 = vpop.f32.mrb[0].mxu0
        %v2121 = vadd.f32 0.0, %v2120
        %v2122 = vpop.f32.mrb[0].mxu0
        %2123 = vmatprep.mubr.f32.mxu0 0.0
        %2124 = vmatmul.mubr.f32.gmra.mrb[0].mxu0 %v2034
        %v2125 = vpop.f32.mrb[0].mxu0
        %v2126 = vadd.f32 0.0, %v2125
        %v2127 = vpop.f32.mrb[0].mxu0
        %2128 = vmatprep.mubr.f32.mxu0 0.0
        %2129 = vmatmul.mubr.f32.gmra.mrb[0].mxu0 %v2037
        %v2130 = vpop.f32.mrb[0].mxu0
        %v2131 = vadd.f32 0.0, %v2130
        %v2132 = vpop.f32.mrb[0].mxu0
        %2133 = vmatprep.mubr.f32.mxu0 0.0
        %2134 = vmatmul.mubr.f32.gmra.mrb[0].mxu0 %v2040
        %v2135 = vpop.f32.mrb[0].mxu0
        %v2136 = vadd.f32 0.0, %v2135
        %v2137 = vpop.f32.mrb[0].mxu0
        %2138 = vmatprep.mubr.f32.mxu0 0.0
        %2139 = vmatmul.mubr.f32.gmra.mrb[0].mxu0 %v2043
        %v2140 = vpop.f32.mrb[0].mxu0
        %v2141 = vadd.f32 0.0, %v2140
        %v2142 = vpop.f32.mrb[0].mxu0
        %2143 = vmatprep.mubr.f32.mxu0 0.0
        %2144 = vmatmul.mubr.f32.gmra.mrb[0].mxu0 %v2046
        %v2145 = vpop.f32.mrb[0].mxu0
        %v2146 = vadd.f32 0.0, %v2145
        %v2147 = vpop.f32.mrb[0].mxu0
        %2148 = vmatprep.mubr.f32.mxu0 0.0
        %2149 = vmatmul.mubr.f32.gmra.mrb[0].mxu0 %v2049
        %v2150 = vpop.f32.mrb[0].mxu0
        %v2151 = vadd.f32 0.0, %v2150
        %v2152 = vpop.f32.mrb[0].mxu0
        %2153 = vmatprep.mubr.f32.mxu0 0.0
        %2154 = vmatmul.mubr.f32.gmra.mrb[0].mxu0 %v2052
        %v2155 = vpop.f32.mrb[0].mxu0
        %v2156 = vadd.f32 0.0, %v2155
        %v2157 = vpop.f32.mrb[0].mxu0
        %2158 = vdwg.mxu0
        %v2159 = vadd.f32 %v1982, %v2121
        %v2160 = vadd.f32 %v1987, %v2126
        %v2161 = vadd.f32 %v1992, %v2131
        %v2162 = vadd.f32 %v1997, %v2136
        %v2163 = vadd.f32 %v2002, %v2141
        %v2164 = vadd.f32 %v2007, %v2146
        %v2165 = vadd.f32 %v2012, %v2151
        %v2166 = vadd.f32 %v2017, %v2156
        %v2167 = vsel %vm858, 0.0, %v2159
        %v2168 = vsel %vm859, 0.0, %v2160
        %v2169 = vsel %vm860, 0.0, %v2161
        %v2170 = vsel %vm861, 0.0, %v2162
        %v2171 = vsel %vm862, 0.0, %v2163
        %v2172 = vsel %vm863, 0.0, %v2164
        %v2173 = vsel %vm864, 0.0, %v2165
        %v2174 = vsel %vm865, 0.0, %v2166
        %v2175 = vadd.f32 %v2167, 0.0
        %v2176 = vadd.f32 %v2168, 0.0
        %v2177 = vadd.f32 %v2169, 0.0
        %v2178 = vadd.f32 %v2170, 0.0
        %v2179 = vadd.f32 %v2171, 0.0
        %v2180 = vadd.f32 %v2172, 0.0
        %v2181 = vadd.f32 %v2173, 0.0
        %v2182 = vadd.f32 %v2174, 0.0
        %v2183 = vld [vmem:[#allocation3 + $0x1] sm:$0xff]
        %v2184 = vld [vmem:[#allocation3 + $0x9] sm:$0xff]
        %v2185 = vld [vmem:[#allocation3 + $0x11] sm:$0xff]
        %v2186 = vld [vmem:[#allocation3 + $0x19] sm:$0xff]
        %v2187 = vld [vmem:[#allocation3 + $0x21] sm:$0xff]
        %v2188 = vld [vmem:[#allocation3 + $0x29] sm:$0xff]
        %v2189 = vld [vmem:[#allocation3 + $0x31] sm:$0xff]
        %v2190 = vld [vmem:[#allocation3 + $0x39] sm:$0xff]
        %s2191 = scalar_lea.vmem %s3, 8
        %v2192 = vld [vmem:[%s2191] sm:$0xff]
        %v2193 = vld [vmem:[#allocation3 + $0x41] sm:$0xff]
        %s2194 = scalar_lea.vmem %s3, 32
        %v2195 = vld [vmem:[%s2194] sm:$0xff]
        %v2197 = vsel %vm1757, %v2184, 0
        %v2200 = vsel %vm1757, %v2185, 0
        %v2203 = vsel %vm1757, %v2186, 0
        %v2206 = vsel %vm1757, %v2187, 0
        %v2209 = vsel %vm1757, %v2188, 0
        %v2212 = vsel %vm1757, %v2189, 0
        %v2215 = vsel %vm1757, %v2190, 0
        %v2218 = vsel %vm1757, %v2193, 0
        %2220 = vmatprep.subr.mxu0 0.0
        %2221 = vmatpush1.msra.mxu0 %v2195
        %2222 = vmatprep.subr.mxu0 0.0
        %2223 = vmatpush1.msra.mxu0 0.0
        %2224 = vmatprep.subr.mxu0 0.0
        %2225 = vmatpush1.msra.mxu0 0.0
        %2226 = vmatprep.subr.mxu0 0.0
        %2227 = vmatpush1.msra.mxu0 0.0
        %2228 = vmatprep.subr.mxu0 0.0
        %2229 = vmatpush1.msra.mxu0 0.0
        %2230 = vmatprep.subr.mxu0 0.0
        %2231 = vmatpush1.msra.mxu0 0.0
        %2232 = vmatprep.subr.mxu0 0.0
        %2233 = vmatpush1.msra.mxu0 0.0
        %2234 = vmatprep.subr.mxu0 0.0
        %2235 = vmatpush1.msra.mxu0 0.0
        %2236 = vmatprep.subr.mxu0 0.0
        %2237 = vmatpush1.msra.mxu0 0.0
        %2238 = vmatprep.subr.mxu0 0.0
        %2239 = vmatpush1.msra.mxu0 0.0
        %2240 = vmatprep.subr.mxu0 0.0
        %2241 = vmatpush1.msra.mxu0 0.0
        %2242 = vmatprep.subr.mxu0 0.0
        %2243 = vmatpush1.msra.mxu0 0.0
        %2244 = vmatprep.subr.mxu0 0.0
        %2245 = vmatpush1.msra.mxu0 0.0
        %2246 = vmatprep.subr.mxu0 0.0
        %2247 = vmatpush1.msra.mxu0 0.0
        %2248 = vmatprep.subr.mxu0 0.0
        %2249 = vmatpush1.msra.mxu0 0.0
        %2250 = vmatprep.subr.mxu0 0.0
        %2251 = vmatpush1.msra.mxu0 0.0
        %2252 = vmatprep.subr.mxu0 0.0
        %2253 = vmatpush1.msra.mxu0 0.0
        %2254 = vmatprep.subr.mxu0 0.0
        %2255 = vmatpush1.msra.mxu0 0.0
        %2256 = vmatprep.subr.mxu0 0.0
        %2257 = vmatpush1.msra.mxu0 0.0
        %2258 = vmatprep.subr.mxu0 0.0
        %2259 = vmatpush1.msra.mxu0 0.0
        %2260 = vmatprep.subr.mxu0 0.0
        %2261 = vmatpush1.msra.mxu0 0.0
        %2262 = vmatprep.subr.mxu0 0.0
        %2263 = vmatpush1.msra.mxu0 0.0
        %2264 = vmatprep.subr.mxu0 0.0
        %2265 = vmatpush1.msra.mxu0 0.0
        %2266 = vmatprep.subr.mxu0 0.0
        %2267 = vmatpush1.msra.mxu0 0.0
        %2268 = vmatprep.subr.mxu0 0.0
        %2269 = vmatpush1.msra.mxu0 0.0
        %2270 = vmatprep.subr.mxu0 0.0
        %2271 = vmatpush1.msra.mxu0 0.0
        %2272 = vmatprep.subr.mxu0 0.0
        %2273 = vmatpush1.msra.mxu0 0.0
        %2274 = vmatprep.subr.mxu0 0.0
        %2275 = vmatpush1.msra.mxu0 0.0
        %2276 = vmatprep.subr.mxu0 0.0
        %2277 = vmatpush1.msra.mxu0 0.0
        %2278 = vmatprep.subr.mxu0 0.0
        %2279 = vmatpush1.msra.mxu0 0.0
        %2280 = vmatprep.subr.mxu0 0.0
        %2281 = vmatpush1.msra.mxu0 0.0
        %2282 = vmatprep.subr.mxu0 0.0
        %2283 = vmatpush1.msra.mxu0 0.0
        %2284 = vmatprep.mubr.f32.mxu0 0.0
        %2285 = vmatmul.mubr.f32.gmra.mrb[0].mxu0 %v2197
        %v2286 = vpop.f32.mrb[0].mxu0
        %v2287 = vadd.f32 0.0, %v2286
        %v2288 = vpop.f32.mrb[0].mxu0
        %2289 = vmatprep.mubr.f32.mxu0 0.0
        %2290 = vmatmul.mubr.f32.gmra.mrb[0].mxu0 %v2200
        %v2291 = vpop.f32.mrb[0].mxu0
        %v2292 = vadd.f32 0.0, %v2291
        %v2293 = vpop.f32.mrb[0].mxu0
        %2294 = vmatprep.mubr.f32.mxu0 0.0
        %2295 = vmatmul.mubr.f32.gmra.mrb[0].mxu0 %v2203
        %v2296 = vpop.f32.mrb[0].mxu0
        %v2297 = vadd.f32 0.0, %v2296
        %v2298 = vpop.f32.mrb[0].mxu0
        %2299 = vmatprep.mubr.f32.mxu0 0.0
        %2300 = vmatmul.mubr.f32.gmra.mrb[0].mxu0 %v2206
        %v2301 = vpop.f32.mrb[0].mxu0
        %v2302 = vadd.f32 0.0, %v2301
        %v2303 = vpop.f32.mrb[0].mxu0
        %2304 = vmatprep.mubr.f32.mxu0 0.0
        %2305 = vmatmul.mubr.f32.gmra.mrb[0].mxu0 %v2209
        %v2306 = vpop.f32.mrb[0].mxu0
        %v2307 = vadd.f32 0.0, %v2306
        %v2308 = vpop.f32.mrb[0].mxu0
        %2309 = vmatprep.mubr.f32.mxu0 0.0
        %2310 = vmatmul.mubr.f32.gmra.mrb[0].mxu0 %v2212
        %v2311 = vpop.f32.mrb[0].mxu0
        %v2312 = vadd.f32 0.0, %v2311
        %v2313 = vpop.f32.mrb[0].mxu0
        %2314 = vmatprep.mubr.f32.mxu0 0.0
        %2315 = vmatmul.mubr.f32.gmra.mrb[0].mxu0 %v2215
        %v2316 = vpop.f32.mrb[0].mxu0
        %v2317 = vadd.f32 0.0, %v2316
        %v2318 = vpop.f32.mrb[0].mxu0
        %2319 = vmatprep.mubr.f32.mxu0 0.0
        %2320 = vmatmul.mubr.f32.gmra.mrb[0].mxu0 %v2218
        %v2321 = vpop.f32.mrb[0].mxu0
        %v2322 = vadd.f32 0.0, %v2321
        %v2323 = vpop.f32.mrb[0].mxu0
        %2324 = vdwg.mxu0
        %v2326 = vsel %vm1757, %v2183, 0
        %2328 = vmatprep.subr.mxu0 0.0
        %2329 = vmatpush1.msra.mxu0 %v2192
        %2330 = vmatprep.subr.mxu0 0.0
        %2331 = vmatpush1.msra.mxu0 0.0
        %2332 = vmatprep.subr.mxu0 0.0
        %2333 = vmatpush1.msra.mxu0 0.0
        %2334 = vmatprep.subr.mxu0 0.0
        %2335 = vmatpush1.msra.mxu0 0.0
        %2336 = vmatprep.subr.mxu0 0.0
        %2337 = vmatpush1.msra.mxu0 0.0
        %2338 = vmatprep.subr.mxu0 0.0
        %2339 = vmatpush1.msra.mxu0 0.0
        %2340 = vmatprep.subr.mxu0 0.0
        %2341 = vmatpush1.msra.mxu0 0.0
        %2342 = vmatprep.subr.mxu0 0.0
        %2343 = vmatpush1.msra.mxu0 0.0
        %2344 = vmatprep.subr.mxu0 0.0
        %2345 = vmatpush1.msra.mxu0 0.0
        %2346 = vmatprep.subr.mxu0 0.0
        %2347 = vmatpush1.msra.mxu0 0.0
        %2348 = vmatprep.subr.mxu0 0.0
        %2349 = vmatpush1.msra.mxu0 0.0
        %2350 = vmatprep.subr.mxu0 0.0
        %2351 = vmatpush1.msra.mxu0 0.0
        %2352 = vmatprep.subr.mxu0 0.0
        %2353 = vmatpush1.msra.mxu0 0.0
        %2354 = vmatprep.subr.mxu0 0.0
        %2355 = vmatpush1.msra.mxu0 0.0
        %2356 = vmatprep.subr.mxu0 0.0
        %2357 = vmatpush1.msra.mxu0 0.0
        %2358 = vmatprep.subr.mxu0 0.0
        %2359 = vmatpush1.msra.mxu0 0.0
        %2360 = vmatprep.subr.mxu0 0.0
        %2361 = vmatpush1.msra.mxu0 0.0
        %2362 = vmatprep.subr.mxu0 0.0
        %2363 = vmatpush1.msra.mxu0 0.0
        %2364 = vmatprep.subr.mxu0 0.0
        %2365 = vmatpush1.msra.mxu0 0.0
        %2366 = vmatprep.subr.mxu0 0.0
        %2367 = vmatpush1.msra.mxu0 0.0
        %2368 = vmatprep.subr.mxu0 0.0
        %2369 = vmatpush1.msra.mxu0 0.0
        %2370 = vmatprep.subr.mxu0 0.0
        %2371 = vmatpush1.msra.mxu0 0.0
        %2372 = vmatprep.subr.mxu0 0.0
        %2373 = vmatpush1.msra.mxu0 0.0
        %2374 = vmatprep.subr.mxu0 0.0
        %2375 = vmatpush1.msra.mxu0 0.0
        %2376 = vmatprep.subr.mxu0 0.0
        %2377 = vmatpush1.msra.mxu0 0.0
        %2378 = vmatprep.subr.mxu0 0.0
        %2379 = vmatpush1.msra.mxu0 0.0
        %2380 = vmatprep.subr.mxu0 0.0
        %2381 = vmatpush1.msra.mxu0 0.0
        %2382 = vmatprep.subr.mxu0 0.0
        %2383 = vmatpush1.msra.mxu0 0.0
        %2384 = vmatprep.subr.mxu0 0.0
        %2385 = vmatpush1.msra.mxu0 0.0
        %2386 = vmatprep.subr.mxu0 0.0
        %2387 = vmatpush1.msra.mxu0 0.0
        %2388 = vmatprep.subr.mxu0 0.0
        %2389 = vmatpush1.msra.mxu0 0.0
        %2390 = vmatprep.subr.mxu0 0.0
        %2391 = vmatpush1.msra.mxu0 0.0
        %2392 = vmatprep.mubr.f32.mxu0 0.0
        %2393 = vmatmul.mubr.f32.gmra.mrb[0].mxu0 %v2326
        %v2394 = vpop.f32.mrb[0].mxu0
        %v2395 = vadd.f32 %v2287, %v2394
        %v2396 = vpop.f32.mrb[0].mxu0
        %2397 = vmatprep.mubr.f32.mxu0 0.0
        %2398 = vmatmul.mubr.f32.gmra.mrb[0].mxu0 %v2197
        %v2399 = vpop.f32.mrb[0].mxu0
        %v2400 = vadd.f32 %v2292, %v2399
        %v2401 = vpop.f32.mrb[0].mxu0
        %2402 = vmatprep.mubr.f32.mxu0 0.0
        %2403 = vmatmul.mubr.f32.gmra.mrb[0].mxu0 %v2200
        %v2404 = vpop.f32.mrb[0].mxu0
        %v2405 = vadd.f32 %v2297, %v2404
        %v2406 = vpop.f32.mrb[0].mxu0
        %2407 = vmatprep.mubr.f32.mxu0 0.0
        %2408 = vmatmul.mubr.f32.gmra.mrb[0].mxu0 %v2203
        %v2409 = vpop.f32.mrb[0].mxu0
        %v2410 = vadd.f32 %v2302, %v2409
        %v2411 = vpop.f32.mrb[0].mxu0
        %2412 = vmatprep.mubr.f32.mxu0 0.0
        %2413 = vmatmul.mubr.f32.gmra.mrb[0].mxu0 %v2206
        %v2414 = vpop.f32.mrb[0].mxu0
        %v2415 = vadd.f32 %v2307, %v2414
        %v2416 = vpop.f32.mrb[0].mxu0
        %2417 = vmatprep.mubr.f32.mxu0 0.0
        %2418 = vmatmul.mubr.f32.gmra.mrb[0].mxu0 %v2209
        %v2419 = vpop.f32.mrb[0].mxu0
        %v2420 = vadd.f32 %v2312, %v2419
        %v2421 = vpop.f32.mrb[0].mxu0
        %2422 = vmatprep.mubr.f32.mxu0 0.0
        %2423 = vmatmul.mubr.f32.gmra.mrb[0].mxu0 %v2212
        %v2424 = vpop.f32.mrb[0].mxu0
        %v2425 = vadd.f32 %v2317, %v2424
        %v2426 = vpop.f32.mrb[0].mxu0
        %2427 = vmatprep.mubr.f32.mxu0 0.0
        %2428 = vmatmul.mubr.f32.gmra.mrb[0].mxu0 %v2215
        %v2429 = vpop.f32.mrb[0].mxu0
        %v2430 = vadd.f32 %v2322, %v2429
        %v2431 = vpop.f32.mrb[0].mxu0
        %2432 = vdwg.mxu0
        %v2433 = vld [vmem:[#allocation3 + $0x11] sm:$0xff]
        %v2434 = vld [vmem:[#allocation3 + $0x19] sm:$0xff]
        %v2435 = vld [vmem:[#allocation3 + $0x21] sm:$0xff]
        %v2436 = vld [vmem:[#allocation3 + $0x29] sm:$0xff]
        %v2437 = vld [vmem:[#allocation3 + $0x31] sm:$0xff]
        %v2438 = vld [vmem:[#allocation3 + $0x39] sm:$0xff]
        %v2439 = vld [vmem:[#allocation3 + $0x41] sm:$0xff]
        %v2440 = vld [vmem:[#allocation3 + $0x49] sm:$0xff]
        %s2441 = scalar_lea.vmem %s3, 56
        %v2442 = vld [vmem:[%s2441] sm:$0xff]
        %v2444 = vsel %vm1757, %v2433, 0
        %v2447 = vsel %vm1757, %v2434, 0
        %v2450 = vsel %vm1757, %v2435, 0
        %v2453 = vsel %vm1757, %v2436, 0
        %v2456 = vsel %vm1757, %v2437, 0
        %v2459 = vsel %vm1757, %v2438, 0
        %v2462 = vsel %vm1757, %v2439, 0
        %v2465 = vsel %vm1757, %v2440, 0
        %2467 = vmatprep.subr.mxu0 0.0
        %2468 = vmatpush1.msra.mxu0 %v2442
        %2469 = vmatprep.subr.mxu0 0.0
        %2470 = vmatpush1.msra.mxu0 0.0
        %2471 = vmatprep.subr.mxu0 0.0
        %2472 = vmatpush1.msra.mxu0 0.0
        %2473 = vmatprep.subr.mxu0 0.0
        %2474 = vmatpush1.msra.mxu0 0.0
        %2475 = vmatprep.subr.mxu0 0.0
        %2476 = vmatpush1.msra.mxu0 0.0
        %2477 = vmatprep.subr.mxu0 0.0
        %2478 = vmatpush1.msra.mxu0 0.0
        %2479 = vmatprep.subr.mxu0 0.0
        %2480 = vmatpush1.msra.mxu0 0.0
        %2481 = vmatprep.subr.mxu0 0.0
        %2482 = vmatpush1.msra.mxu0 0.0
        %2483 = vmatprep.subr.mxu0 0.0
        %2484 = vmatpush1.msra.mxu0 0.0
        %2485 = vmatprep.subr.mxu0 0.0
        %2486 = vmatpush1.msra.mxu0 0.0
        %2487 = vmatprep.subr.mxu0 0.0
        %2488 = vmatpush1.msra.mxu0 0.0
        %2489 = vmatprep.subr.mxu0 0.0
        %2490 = vmatpush1.msra.mxu0 0.0
        %2491 = vmatprep.subr.mxu0 0.0
        %2492 = vmatpush1.msra.mxu0 0.0
        %2493 = vmatprep.subr.mxu0 0.0
        %2494 = vmatpush1.msra.mxu0 0.0
        %2495 = vmatprep.subr.mxu0 0.0
        %2496 = vmatpush1.msra.mxu0 0.0
        %2497 = vmatprep.subr.mxu0 0.0
        %2498 = vmatpush1.msra.mxu0 0.0
        %2499 = vmatprep.subr.mxu0 0.0
        %2500 = vmatpush1.msra.mxu0 0.0
        %2501 = vmatprep.subr.mxu0 0.0
        %2502 = vmatpush1.msra.mxu0 0.0
        %2503 = vmatprep.subr.mxu0 0.0
        %2504 = vmatpush1.msra.mxu0 0.0
        %2505 = vmatprep.subr.mxu0 0.0
        %2506 = vmatpush1.msra.mxu0 0.0
        %2507 = vmatprep.subr.mxu0 0.0
        %2508 = vmatpush1.msra.mxu0 0.0
        %2509 = vmatprep.subr.mxu0 0.0
        %2510 = vmatpush1.msra.mxu0 0.0
        %2511 = vmatprep.subr.mxu0 0.0
        %2512 = vmatpush1.msra.mxu0 0.0
        %2513 = vmatprep.subr.mxu0 0.0
        %2514 = vmatpush1.msra.mxu0 0.0
        %2515 = vmatprep.subr.mxu0 0.0
        %2516 = vmatpush1.msra.mxu0 0.0
        %2517 = vmatprep.subr.mxu0 0.0
        %2518 = vmatpush1.msra.mxu0 0.0
        %2519 = vmatprep.subr.mxu0 0.0
        %2520 = vmatpush1.msra.mxu0 0.0
        %2521 = vmatprep.subr.mxu0 0.0
        %2522 = vmatpush1.msra.mxu0 0.0
        %2523 = vmatprep.subr.mxu0 0.0
        %2524 = vmatpush1.msra.mxu0 0.0
        %2525 = vmatprep.subr.mxu0 0.0
        %2526 = vmatpush1.msra.mxu0 0.0
        %2527 = vmatprep.subr.mxu0 0.0
        %2528 = vmatpush1.msra.mxu0 0.0
        %2529 = vmatprep.subr.mxu0 0.0
        %2530 = vmatpush1.msra.mxu0 0.0
        %2531 = vmatprep.mubr.f32.mxu0 0.0
        %2532 = vmatmul.mubr.f32.gmra.mrb[0].mxu0 %v2444
        %v2533 = vpop.f32.mrb[0].mxu0
        %v2534 = vadd.f32 0.0, %v2533
        %v2535 = vpop.f32.mrb[0].mxu0
        %2536 = vmatprep.mubr.f32.mxu0 0.0
        %2537 = vmatmul.mubr.f32.gmra.mrb[0].mxu0 %v2447
        %v2538 = vpop.f32.mrb[0].mxu0
        %v2539 = vadd.f32 0.0, %v2538
        %v2540 = vpop.f32.mrb[0].mxu0
        %2541 = vmatprep.mubr.f32.mxu0 0.0
        %2542 = vmatmul.mubr.f32.gmra.mrb[0].mxu0 %v2450
        %v2543 = vpop.f32.mrb[0].mxu0
        %v2544 = vadd.f32 0.0, %v2543
        %v2545 = vpop.f32.mrb[0].mxu0
        %2546 = vmatprep.mubr.f32.mxu0 0.0
        %2547 = vmatmul.mubr.f32.gmra.mrb[0].mxu0 %v2453
        %v2548 = vpop.f32.mrb[0].mxu0
        %v2549 = vadd.f32 0.0, %v2548
        %v2550 = vpop.f32.mrb[0].mxu0
        %2551 = vmatprep.mubr.f32.mxu0 0.0
        %2552 = vmatmul.mubr.f32.gmra.mrb[0].mxu0 %v2456
        %v2553 = vpop.f32.mrb[0].mxu0
        %v2554 = vadd.f32 0.0, %v2553
        %v2555 = vpop.f32.mrb[0].mxu0
        %2556 = vmatprep.mubr.f32.mxu0 0.0
        %2557 = vmatmul.mubr.f32.gmra.mrb[0].mxu0 %v2459
        %v2558 = vpop.f32.mrb[0].mxu0
        %v2559 = vadd.f32 0.0, %v2558
        %v2560 = vpop.f32.mrb[0].mxu0
        %2561 = vmatprep.mubr.f32.mxu0 0.0
        %2562 = vmatmul.mubr.f32.gmra.mrb[0].mxu0 %v2462
        %v2563 = vpop.f32.mrb[0].mxu0
        %v2564 = vadd.f32 0.0, %v2563
        %v2565 = vpop.f32.mrb[0].mxu0
        %2566 = vmatprep.mubr.f32.mxu0 0.0
        %2567 = vmatmul.mubr.f32.gmra.mrb[0].mxu0 %v2465
        %v2568 = vpop.f32.mrb[0].mxu0
        %v2569 = vadd.f32 0.0, %v2568
        %v2570 = vpop.f32.mrb[0].mxu0
        %2571 = vdwg.mxu0
        %v2572 = vadd.f32 %v2395, %v2534
        %v2573 = vadd.f32 %v2400, %v2539
        %v2574 = vadd.f32 %v2405, %v2544
        %v2575 = vadd.f32 %v2410, %v2549
        %v2576 = vadd.f32 %v2415, %v2554
        %v2577 = vadd.f32 %v2420, %v2559
        %v2578 = vadd.f32 %v2425, %v2564
        %v2579 = vadd.f32 %v2430, %v2569
        %v2580 = vadd.f32 %v2175, %v2572
        %v2581 = vadd.f32 %v2176, %v2573
        %v2582 = vadd.f32 %v2177, %v2574
        %v2583 = vadd.f32 %v2178, %v2575
        %v2584 = vadd.f32 %v2179, %v2576
        %v2585 = vadd.f32 %v2180, %v2577
        %v2586 = vadd.f32 %v2181, %v2578
        %v2587 = vadd.f32 %v2182, %v2579
        %v2588 = vld [vmem:[#allocation3 + $0x2] sm:$0xff]
        %v2589 = vld [vmem:[#allocation3 + $0xa] sm:$0xff]
        %v2590 = vld [vmem:[#allocation3 + $0x12] sm:$0xff]
        %v2591 = vld [vmem:[#allocation3 + $0x1a] sm:$0xff]
        %v2592 = vld [vmem:[#allocation3 + $0x22] sm:$0xff]
        %v2593 = vld [vmem:[#allocation3 + $0x2a] sm:$0xff]
        %v2594 = vld [vmem:[#allocation3 + $0x32] sm:$0xff]
        %v2595 = vld [vmem:[#allocation3 + $0x3a] sm:$0xff]
        %s2596 = scalar_lea.vmem %s3, 16
        %v2597 = vld [vmem:[%s2596] sm:$0xff]
        %v2598 = vld [vmem:[#allocation3 + $0x42] sm:$0xff]
        %s2599 = scalar_lea.vmem %s3, 40
        %v2600 = vld [vmem:[%s2599] sm:$0xff]
        %v2602 = vsel %vm1757, %v2589, 0
        %v2605 = vsel %vm1757, %v2590, 0
        %v2608 = vsel %vm1757, %v2591, 0
        %v2611 = vsel %vm1757, %v2592, 0
        %v2614 = vsel %vm1757, %v2593, 0
        %v2617 = vsel %vm1757, %v2594, 0
        %v2620 = vsel %vm1757, %v2595, 0
        %v2623 = vsel %vm1757, %v2598, 0
        %2625 = vmatprep.subr.mxu0 0.0
        %2626 = vmatpush1.msra.mxu0 %v2600
        %2627 = vmatprep.subr.mxu0 0.0
        %2628 = vmatpush1.msra.mxu0 0.0
        %2629 = vmatprep.subr.mxu0 0.0
        %2630 = vmatpush1.msra.mxu0 0.0
        %2631 = vmatprep.subr.mxu0 0.0
        %2632 = vmatpush1.msra.mxu0 0.0
        %2633 = vmatprep.subr.mxu0 0.0
        %2634 = vmatpush1.msra.mxu0 0.0
        %2635 = vmatprep.subr.mxu0 0.0
        %2636 = vmatpush1.msra.mxu0 0.0
        %2637 = vmatprep.subr.mxu0 0.0
        %2638 = vmatpush1.msra.mxu0 0.0
        %2639 = vmatprep.subr.mxu0 0.0
        %2640 = vmatpush1.msra.mxu0 0.0
        %2641 = vmatprep.subr.mxu0 0.0
        %2642 = vmatpush1.msra.mxu0 0.0
        %2643 = vmatprep.subr.mxu0 0.0
        %2644 = vmatpush1.msra.mxu0 0.0
        %2645 = vmatprep.subr.mxu0 0.0
        %2646 = vmatpush1.msra.mxu0 0.0
        %2647 = vmatprep.subr.mxu0 0.0
        %2648 = vmatpush1.msra.mxu0 0.0
        %2649 = vmatprep.subr.mxu0 0.0
        %2650 = vmatpush1.msra.mxu0 0.0
        %2651 = vmatprep.subr.mxu0 0.0
        %2652 = vmatpush1.msra.mxu0 0.0
        %2653 = vmatprep.subr.mxu0 0.0
        %2654 = vmatpush1.msra.mxu0 0.0
        %2655 = vmatprep.subr.mxu0 0.0
        %2656 = vmatpush1.msra.mxu0 0.0
        %2657 = vmatprep.subr.mxu0 0.0
        %2658 = vmatpush1.msra.mxu0 0.0
        %2659 = vmatprep.subr.mxu0 0.0
        %2660 = vmatpush1.msra.mxu0 0.0
        %2661 = vmatprep.subr.mxu0 0.0
        %2662 = vmatpush1.msra.mxu0 0.0
        %2663 = vmatprep.subr.mxu0 0.0
        %2664 = vmatpush1.msra.mxu0 0.0
        %2665 = vmatprep.subr.mxu0 0.0
        %2666 = vmatpush1.msra.mxu0 0.0
        %2667 = vmatprep.subr.mxu0 0.0
        %2668 = vmatpush1.msra.mxu0 0.0
        %2669 = vmatprep.subr.mxu0 0.0
        %2670 = vmatpush1.msra.mxu0 0.0
        %2671 = vmatprep.subr.mxu0 0.0
        %2672 = vmatpush1.msra.mxu0 0.0
        %2673 = vmatprep.subr.mxu0 0.0
        %2674 = vmatpush1.msra.mxu0 0.0
        %2675 = vmatprep.subr.mxu0 0.0
        %2676 = vmatpush1.msra.mxu0 0.0
        %2677 = vmatprep.subr.mxu0 0.0
        %2678 = vmatpush1.msra.mxu0 0.0
        %2679 = vmatprep.subr.mxu0 0.0
        %2680 = vmatpush1.msra.mxu0 0.0
        %2681 = vmatprep.subr.mxu0 0.0
        %2682 = vmatpush1.msra.mxu0 0.0
        %2683 = vmatprep.subr.mxu0 0.0
        %2684 = vmatpush1.msra.mxu0 0.0
        %2685 = vmatprep.subr.mxu0 0.0
        %2686 = vmatpush1.msra.mxu0 0.0
        %2687 = vmatprep.subr.mxu0 0.0
        %2688 = vmatpush1.msra.mxu0 0.0
        %2689 = vmatprep.mubr.f32.mxu0 0.0
        %2690 = vmatmul.mubr.f32.gmra.mrb[0].mxu0 %v2602
        %v2691 = vpop.f32.mrb[0].mxu0
        %v2692 = vadd.f32 0.0, %v2691
        %v2693 = vpop.f32.mrb[0].mxu0
        %2694 = vmatprep.mubr.f32.mxu0 0.0
        %2695 = vmatmul.mubr.f32.gmra.mrb[0].mxu0 %v2605
        %v2696 = vpop.f32.mrb[0].mxu0
        %v2697 = vadd.f32 0.0, %v2696
        %v2698 = vpop.f32.mrb[0].mxu0
        %2699 = vmatprep.mubr.f32.mxu0 0.0
        %2700 = vmatmul.mubr.f32.gmra.mrb[0].mxu0 %v2608
        %v2701 = vpop.f32.mrb[0].mxu0
        %v2702 = vadd.f32 0.0, %v2701
        %v2703 = vpop.f32.mrb[0].mxu0
        %2704 = vmatprep.mubr.f32.mxu0 0.0
        %2705 = vmatmul.mubr.f32.gmra.mrb[0].mxu0 %v2611
        %v2706 = vpop.f32.mrb[0].mxu0
        %v2707 = vadd.f32 0.0, %v2706
        %v2708 = vpop.f32.mrb[0].mxu0
        %2709 = vmatprep.mubr.f32.mxu0 0.0
        %2710 = vmatmul.mubr.f32.gmra.mrb[0].mxu0 %v2614
        %v2711 = vpop.f32.mrb[0].mxu0
        %v2712 = vadd.f32 0.0, %v2711
        %v2713 = vpop.f32.mrb[0].mxu0
        %2714 = vmatprep.mubr.f32.mxu0 0.0
        %2715 = vmatmul.mubr.f32.gmra.mrb[0].mxu0 %v2617
        %v2716 = vpop.f32.mrb[0].mxu0
        %v2717 = vadd.f32 0.0, %v2716
        %v2718 = vpop.f32.mrb[0].mxu0
        %2719 = vmatprep.mubr.f32.mxu0 0.0
        %2720 = vmatmul.mubr.f32.gmra.mrb[0].mxu0 %v2620
        %v2721 = vpop.f32.mrb[0].mxu0
        %v2722 = vadd.f32 0.0, %v2721
        %v2723 = vpop.f32.mrb[0].mxu0
        %2724 = vmatprep.mubr.f32.mxu0 0.0
        %2725 = vmatmul.mubr.f32.gmra.mrb[0].mxu0 %v2623
        %v2726 = vpop.f32.mrb[0].mxu0
        %v2727 = vadd.f32 0.0, %v2726
        %v2728 = vpop.f32.mrb[0].mxu0
        %2729 = vdwg.mxu0
        %v2731 = vsel %vm1757, %v2588, 0
        %2733 = vmatprep.subr.mxu0 0.0
        %2734 = vmatpush1.msra.mxu0 %v2597
        %2735 = vmatprep.subr.mxu0 0.0
        %2736 = vmatpush1.msra.mxu0 0.0
        %2737 = vmatprep.subr.mxu0 0.0
        %2738 = vmatpush1.msra.mxu0 0.0
        %2739 = vmatprep.subr.mxu0 0.0
        %2740 = vmatpush1.msra.mxu0 0.0
        %2741 = vmatprep.subr.mxu0 0.0
        %2742 = vmatpush1.msra.mxu0 0.0
        %2743 = vmatprep.subr.mxu0 0.0
        %2744 = vmatpush1.msra.mxu0 0.0
        %2745 = vmatprep.subr.mxu0 0.0
        %2746 = vmatpush1.msra.mxu0 0.0
        %2747 = vmatprep.subr.mxu0 0.0
        %2748 = vmatpush1.msra.mxu0 0.0
        %2749 = vmatprep.subr.mxu0 0.0
        %2750 = vmatpush1.msra.mxu0 0.0
        %2751 = vmatprep.subr.mxu0 0.0
        %2752 = vmatpush1.msra.mxu0 0.0
        %2753 = vmatprep.subr.mxu0 0.0
        %2754 = vmatpush1.msra.mxu0 0.0
        %2755 = vmatprep.subr.mxu0 0.0
        %2756 = vmatpush1.msra.mxu0 0.0
        %2757 = vmatprep.subr.mxu0 0.0
        %2758 = vmatpush1.msra.mxu0 0.0
        %2759 = vmatprep.subr.mxu0 0.0
        %2760 = vmatpush1.msra.mxu0 0.0
        %2761 = vmatprep.subr.mxu0 0.0
        %2762 = vmatpush1.msra.mxu0 0.0
        %2763 = vmatprep.subr.mxu0 0.0
        %2764 = vmatpush1.msra.mxu0 0.0
        %2765 = vmatprep.subr.mxu0 0.0
        %2766 = vmatpush1.msra.mxu0 0.0
        %2767 = vmatprep.subr.mxu0 0.0
        %2768 = vmatpush1.msra.mxu0 0.0
        %2769 = vmatprep.subr.mxu0 0.0
        %2770 = vmatpush1.msra.mxu0 0.0
        %2771 = vmatprep.subr.mxu0 0.0
        %2772 = vmatpush1.msra.mxu0 0.0
        %2773 = vmatprep.subr.mxu0 0.0
        %2774 = vmatpush1.msra.mxu0 0.0
        %2775 = vmatprep.subr.mxu0 0.0
        %2776 = vmatpush1.msra.mxu0 0.0
        %2777 = vmatprep.subr.mxu0 0.0
        %2778 = vmatpush1.msra.mxu0 0.0
        %2779 = vmatprep.subr.mxu0 0.0
        %2780 = vmatpush1.msra.mxu0 0.0
        %2781 = vmatprep.subr.mxu0 0.0
        %2782 = vmatpush1.msra.mxu0 0.0
        %2783 = vmatprep.subr.mxu0 0.0
        %2784 = vmatpush1.msra.mxu0 0.0
        %2785 = vmatprep.subr.mxu0 0.0
        %2786 = vmatpush1.msra.mxu0 0.0
        %2787 = vmatprep.subr.mxu0 0.0
        %2788 = vmatpush1.msra.mxu0 0.0
        %2789 = vmatprep.subr.mxu0 0.0
        %2790 = vmatpush1.msra.mxu0 0.0
        %2791 = vmatprep.subr.mxu0 0.0
        %2792 = vmatpush1.msra.mxu0 0.0
        %2793 = vmatprep.subr.mxu0 0.0
        %2794 = vmatpush1.msra.mxu0 0.0
        %2795 = vmatprep.subr.mxu0 0.0
        %2796 = vmatpush1.msra.mxu0 0.0
        %2797 = vmatprep.mubr.f32.mxu0 0.0
        %2798 = vmatmul.mubr.f32.gmra.mrb[0].mxu0 %v2731
        %v2799 = vpop.f32.mrb[0].mxu0
        %v2800 = vadd.f32 %v2692, %v2799
        %v2801 = vpop.f32.mrb[0].mxu0
        %2802 = vmatprep.mubr.f32.mxu0 0.0
        %2803 = vmatmul.mubr.f32.gmra.mrb[0].mxu0 %v2602
        %v2804 = vpop.f32.mrb[0].mxu0
        %v2805 = vadd.f32 %v2697, %v2804
        %v2806 = vpop.f32.mrb[0].mxu0
        %2807 = vmatprep.mubr.f32.mxu0 0.0
        %2808 = vmatmul.mubr.f32.gmra.mrb[0].mxu0 %v2605
        %v2809 = vpop.f32.mrb[0].mxu0
        %v2810 = vadd.f32 %v2702, %v2809
        %v2811 = vpop.f32.mrb[0].mxu0
        %2812 = vmatprep.mubr.f32.mxu0 0.0
        %2813 = vmatmul.mubr.f32.gmra.mrb[0].mxu0 %v2608
        %v2814 = vpop.f32.mrb[0].mxu0
        %v2815 = vadd.f32 %v2707, %v2814
        %v2816 = vpop.f32.mrb[0].mxu0
        %2817 = vmatprep.mubr.f32.mxu0 0.0
        %2818 = vmatmul.mubr.f32.gmra.mrb[0].mxu0 %v2611
        %v2819 = vpop.f32.mrb[0].mxu0
        %v2820 = vadd.f32 %v2712, %v2819
        %v2821 = vpop.f32.mrb[0].mxu0
        %2822 = vmatprep.mubr.f32.mxu0 0.0
        %2823 = vmatmul.mubr.f32.gmra.mrb[0].mxu0 %v2614
        %v2824 = vpop.f32.mrb[0].mxu0
        %v2825 = vadd.f32 %v2717, %v2824
        %v2826 = vpop.f32.mrb[0].mxu0
        %2827 = vmatprep.mubr.f32.mxu0 0.0
        %2828 = vmatmul.mubr.f32.gmra.mrb[0].mxu0 %v2617
        %v2829 = vpop.f32.mrb[0].mxu0
        %v2830 = vadd.f32 %v2722, %v2829
        %v2831 = vpop.f32.mrb[0].mxu0
        %2832 = vmatprep.mubr.f32.mxu0 0.0
        %2833 = vmatmul.mubr.f32.gmra.mrb[0].mxu0 %v2620
        %v2834 = vpop.f32.mrb[0].mxu0
        %v2835 = vadd.f32 %v2727, %v2834
        %v2836 = vpop.f32.mrb[0].mxu0
        %2837 = vdwg.mxu0
        %v2838 = vld [vmem:[#allocation3 + $0x12] sm:$0xff]
        %v2839 = vld [vmem:[#allocation3 + $0x1a] sm:$0xff]
        %v2840 = vld [vmem:[#allocation3 + $0x22] sm:$0xff]
        %v2841 = vld [vmem:[#allocation3 + $0x2a] sm:$0xff]
        %v2842 = vld [vmem:[#allocation3 + $0x32] sm:$0xff]
        %v2843 = vld [vmem:[#allocation3 + $0x3a] sm:$0xff]
        %v2844 = vld [vmem:[#allocation3 + $0x42] sm:$0xff]
        %v2845 = vld [vmem:[#allocation3 + $0x4a] sm:$0xff]
        %s2846 = scalar_lea.vmem %s3, 64
        %v2847 = vld [vmem:[%s2846] sm:$0xff]
        %v2849 = vsel %vm1757, %v2838, 0
        %v2852 = vsel %vm1757, %v2839, 0
        %v2855 = vsel %vm1757, %v2840, 0
        %v2858 = vsel %vm1757, %v2841, 0
        %v2861 = vsel %vm1757, %v2842, 0
        %v2864 = vsel %vm1757, %v2843, 0
        %v2867 = vsel %vm1757, %v2844, 0
        %v2870 = vsel %vm1757, %v2845, 0
        %2872 = vmatprep.subr.mxu0 0.0
        %2873 = vmatpush1.msra.mxu0 %v2847
        %2874 = vmatprep.subr.mxu0 0.0
        %2875 = vmatpush1.msra.mxu0 0.0
        %2876 = vmatprep.subr.mxu0 0.0
        %2877 = vmatpush1.msra.mxu0 0.0
        %2878 = vmatprep.subr.mxu0 0.0
        %2879 = vmatpush1.msra.mxu0 0.0
        %2880 = vmatprep.subr.mxu0 0.0
        %2881 = vmatpush1.msra.mxu0 0.0
        %2882 = vmatprep.subr.mxu0 0.0
        %2883 = vmatpush1.msra.mxu0 0.0
        %2884 = vmatprep.subr.mxu0 0.0
        %2885 = vmatpush1.msra.mxu0 0.0
        %2886 = vmatprep.subr.mxu0 0.0
        %2887 = vmatpush1.msra.mxu0 0.0
        %2888 = vmatprep.subr.mxu0 0.0
        %2889 = vmatpush1.msra.mxu0 0.0
        %2890 = vmatprep.subr.mxu0 0.0
        %2891 = vmatpush1.msra.mxu0 0.0
        %2892 = vmatprep.subr.mxu0 0.0
        %2893 = vmatpush1.msra.mxu0 0.0
        %2894 = vmatprep.subr.mxu0 0.0
        %2895 = vmatpush1.msra.mxu0 0.0
        %2896 = vmatprep.subr.mxu0 0.0
        %2897 = vmatpush1.msra.mxu0 0.0
        %2898 = vmatprep.subr.mxu0 0.0
        %2899 = vmatpush1.msra.mxu0 0.0
        %2900 = vmatprep.subr.mxu0 0.0
        %2901 = vmatpush1.msra.mxu0 0.0
        %2902 = vmatprep.subr.mxu0 0.0
        %2903 = vmatpush1.msra.mxu0 0.0
        %2904 = vmatprep.subr.mxu0 0.0
        %2905 = vmatpush1.msra.mxu0 0.0
        %2906 = vmatprep.subr.mxu0 0.0
        %2907 = vmatpush1.msra.mxu0 0.0
        %2908 = vmatprep.subr.mxu0 0.0
        %2909 = vmatpush1.msra.mxu0 0.0
        %2910 = vmatprep.subr.mxu0 0.0
        %2911 = vmatpush1.msra.mxu0 0.0
        %2912 = vmatprep.subr.mxu0 0.0
        %2913 = vmatpush1.msra.mxu0 0.0
        %2914 = vmatprep.subr.mxu0 0.0
        %2915 = vmatpush1.msra.mxu0 0.0
        %2916 = vmatprep.subr.mxu0 0.0
        %2917 = vmatpush1.msra.mxu0 0.0
        %2918 = vmatprep.subr.mxu0 0.0
        %2919 = vmatpush1.msra.mxu0 0.0
        %2920 = vmatprep.subr.mxu0 0.0
        %2921 = vmatpush1.msra.mxu0 0.0
        %2922 = vmatprep.subr.mxu0 0.0
        %2923 = vmatpush1.msra.mxu0 0.0
        %2924 = vmatprep.subr.mxu0 0.0
        %2925 = vmatpush1.msra.mxu0 0.0
        %2926 = vmatprep.subr.mxu0 0.0
        %2927 = vmatpush1.msra.mxu0 0.0
        %2928 = vmatprep.subr.mxu0 0.0
        %2929 = vmatpush1.msra.mxu0 0.0
        %2930 = vmatprep.subr.mxu0 0.0
        %2931 = vmatpush1.msra.mxu0 0.0
        %2932 = vmatprep.subr.mxu0 0.0
        %2933 = vmatpush1.msra.mxu0 0.0
        %2934 = vmatprep.subr.mxu0 0.0
        %2935 = vmatpush1.msra.mxu0 0.0
        %2936 = vmatprep.mubr.f32.mxu0 0.0
        %2937 = vmatmul.mubr.f32.gmra.mrb[0].mxu0 %v2849
        %v2938 = vpop.f32.mrb[0].mxu0
        %v2939 = vadd.f32 0.0, %v2938
        %v2940 = vpop.f32.mrb[0].mxu0
        %2941 = vmatprep.mubr.f32.mxu0 0.0
        %2942 = vmatmul.mubr.f32.gmra.mrb[0].mxu0 %v2852
        %v2943 = vpop.f32.mrb[0].mxu0
        %v2944 = vadd.f32 0.0, %v2943
        %v2945 = vpop.f32.mrb[0].mxu0
        %2946 = vmatprep.mubr.f32.mxu0 0.0
        %2947 = vmatmul.mubr.f32.gmra.mrb[0].mxu0 %v2855
        %v2948 = vpop.f32.mrb[0].mxu0
        %v2949 = vadd.f32 0.0, %v2948
        %v2950 = vpop.f32.mrb[0].mxu0
        %2951 = vmatprep.mubr.f32.mxu0 0.0
        %2952 = vmatmul.mubr.f32.gmra.mrb[0].mxu0 %v2858
        %v2953 = vpop.f32.mrb[0].mxu0
        %v2954 = vadd.f32 0.0, %v2953
        %v2955 = vpop.f32.mrb[0].mxu0
        %2956 = vmatprep.mubr.f32.mxu0 0.0
        %2957 = vmatmul.mubr.f32.gmra.mrb[0].mxu0 %v2861
        %v2958 = vpop.f32.mrb[0].mxu0
        %v2959 = vadd.f32 0.0, %v2958
        %v2960 = vpop.f32.mrb[0].mxu0
        %2961 = vmatprep.mubr.f32.mxu0 0.0
        %2962 = vmatmul.mubr.f32.gmra.mrb[0].mxu0 %v2864
        %v2963 = vpop.f32.mrb[0].mxu0
        %v2964 = vadd.f32 0.0, %v2963
        %v2965 = vpop.f32.mrb[0].mxu0
        %2966 = vmatprep.mubr.f32.mxu0 0.0
        %2967 = vmatmul.mubr.f32.gmra.mrb[0].mxu0 %v2867
        %v2968 = vpop.f32.mrb[0].mxu0
        %v2969 = vadd.f32 0.0, %v2968
        %v2970 = vpop.f32.mrb[0].mxu0
        %2971 = vmatprep.mubr.f32.mxu0 0.0
        %2972 = vmatmul.mubr.f32.gmra.mrb[0].mxu0 %v2870
        %v2973 = vpop.f32.mrb[0].mxu0
        %v2974 = vadd.f32 0.0, %v2973
        %v2975 = vpop.f32.mrb[0].mxu0
        %2976 = vdwg.mxu0
        %v2977 = vadd.f32 %v2800, %v2939
        %v2978 = vadd.f32 %v2805, %v2944
        %v2979 = vadd.f32 %v2810, %v2949
        %v2980 = vadd.f32 %v2815, %v2954
        %v2981 = vadd.f32 %v2820, %v2959
        %v2982 = vadd.f32 %v2825, %v2964
        %v2983 = vadd.f32 %v2830, %v2969
        %v2984 = vadd.f32 %v2835, %v2974
        %v2985 = vsel %vm1710, 0.0, %v2977
        %v2986 = vsel %vm1711, 0.0, %v2978
        %v2987 = vsel %vm1712, 0.0, %v2979
        %v2988 = vsel %vm1713, 0.0, %v2980
        %v2989 = vsel %vm1714, 0.0, %v2981
        %v2990 = vsel %vm1715, 0.0, %v2982
        %v2991 = vsel %vm1716, 0.0, %v2983
        %v2992 = vsel %vm1717, 0.0, %v2984
        %v2993 = vadd.f32 %v2580, %v2985
        %v2994 = vadd.f32 %v2581, %v2986
        %v2995 = vadd.f32 %v2582, %v2987
        %v2996 = vadd.f32 %v2583, %v2988
        %v2997 = vadd.f32 %v2584, %v2989
        %v2998 = vadd.f32 %v2585, %v2990
        %v2999 = vadd.f32 %v2586, %v2991
        %v3000 = vadd.f32 %v2587, %v2992
        %v3001 = vld [vmem:[%s4] sm:$0x1]
        %v3002 = vlaneseq
        %v3003 = vshrl.u32 %v3002, 7
        %v3004 = vsub.s32 0, %v3003
        %v3005 = vrot.slane %v3001, %v3004
        %v3006 = vadd.f32 %v2993, %v3005
        %v3007 = vadd.f32 %v2994, %v3005
        %v3008 = vadd.f32 %v2995, %v3005
        %v3009 = vadd.f32 %v2996, %v3005
        %v3010 = vadd.f32 %v2997, %v3005
        %v3011 = vadd.f32 %v2998, %v3005
        %v3012 = vadd.f32 %v2999, %v3005
        %v3013 = vadd.f32 %v3000, %v3005
        %v3014 = vmax.f32 %v3006, 0.0
        %v3015 = vmax.f32 %v3007, 0.0
        %v3016 = vmax.f32 %v3008, 0.0
        %v3017 = vmax.f32 %v3009, 0.0
        %v3018 = vmax.f32 %v3010, 0.0
        %v3019 = vmax.f32 %v3011, 0.0
        %v3020 = vmax.f32 %v3012, 0.0
        %v3021 = vmax.f32 %v3013, 0.0
        %v3022 = vld [vmem:[%s5] sm:$0xf]
        %v3023 = vld [vmem:[%s5 + $0x4] sm:$0xf]
        %v3024 = vld [vmem:[%s5 + $0x8] sm:$0xf]
        %v3025 = vlaneseq
        %v3026 = vshrl.u32 %v3025, 7
        %v3027 = vsub.s32 0, %v3026
        %v3028 = vrot.slane %v3022, %v3027
        %v3029 = vmul.f32 %v3014, %v3028
        %v3030 = vmul.f32 %v3015, %v3028
        %v3031 = vmul.f32 %v3016, %v3028
        %v3032 = vmul.f32 %v3017, %v3028
        %v3033 = vmul.f32 %v3018, %v3028
        %v3034 = vmul.f32 %v3019, %v3028
        %v3035 = vmul.f32 %v3020, %v3028
        %v3036 = vmul.f32 %v3021, %v3028
        %v3037 = vlaneseq
        %v3038 = vshrl.u32 %v3037, 7
        %v3039 = vsub.s32 0, %v3038
        %v3040 = vrot.slane %v3023, %v3039
        %v3041 = vadd.f32 %v3029, %v3040
        %v3042 = vadd.f32 %v3030, %v3040
        %v3043 = vadd.f32 %v3031, %v3040
        %v3044 = vadd.f32 %v3032, %v3040
        %v3045 = vadd.f32 %v3033, %v3040
        %v3046 = vadd.f32 %v3034, %v3040
        %v3047 = vadd.f32 %v3035, %v3040
        %v3048 = vadd.f32 %v3036, %v3040
        %v3049 = vmax.f32 %v3041, 0.0
        %v3050 = vmax.f32 %v3042, 0.0
        %v3051 = vmax.f32 %v3043, 0.0
        %v3052 = vmax.f32 %v3044, 0.0
        %v3053 = vmax.f32 %v3045, 0.0
        %v3054 = vmax.f32 %v3046, 0.0
        %v3055 = vmax.f32 %v3047, 0.0
        %v3056 = vmax.f32 %v3048, 0.0
        %v3057 = vlaneseq
        %v3058 = vshrl.u32 %v3057, 7
        %v3059 = vsub.s32 0, %v3058
        %v3060 = vrot.slane %v3024, %v3059
        %v3061 = vmul.f32 %v3049, %v3060
        %v3062 = vmul.f32 %v3050, %v3060
        %v3063 = vmul.f32 %v3051, %v3060
        %v3064 = vmul.f32 %v3052, %v3060
        %v3065 = vmul.f32 %v3053, %v3060
        %v3066 = vmul.f32 %v3054, %v3060
        %v3067 = vmul.f32 %v3055, %v3060
        %v3068 = vmul.f32 %v3056, %v3060
        %v3069 = vadd.f32 %v3061, 0.0
        %v3070 = vadd.f32 %v3062, 0.0
        %v3071 = vadd.f32 %v3063, 0.0
        %v3072 = vadd.f32 %v3064, 0.0
        %v3073 = vadd.f32 %v3065, 0.0
        %v3074 = vadd.f32 %v3066, 0.0
        %v3075 = vadd.f32 %v3067, 0.0
        %v3076 = vadd.f32 %v3068, 0.0
        %v3077 = vlaneseq
        %v3078 = vshrl.u32 %v3077, 7
        %v3079 = vsub.s32 1, %v3078
        %v3080 = vrot.slane %v3022, %v3079
        %v3081 = vmul.f32 %v3014, %v3080
        %v3082 = vmul.f32 %v3015, %v3080
        %v3083 = vmul.f32 %v3016, %v3080
        %v3084 = vmul.f32 %v3017, %v3080
        %v3085 = vmul.f32 %v3018, %v3080
        %v3086 = vmul.f32 %v3019, %v3080
        %v3087 = vmul.f32 %v3020, %v3080
        %v3088 = vmul.f32 %v3021, %v3080
        %v3089 = vlaneseq
        %v3090 = vshrl.u32 %v3089, 7
        %v3091 = vsub.s32 1, %v3090
        %v3092 = vrot.slane %v3023, %v3091
        %v3093 = vadd.f32 %v3081, %v3092
        %v3094 = vadd.f32 %v3082, %v3092
        %v3095 = vadd.f32 %v3083, %v3092
        %v3096 = vadd.f32 %v3084, %v3092
        %v3097 = vadd.f32 %v3085, %v3092
        %v3098 = vadd.f32 %v3086, %v3092
        %v3099 = vadd.f32 %v3087, %v3092
        %v3100 = vadd.f32 %v3088, %v3092
        %v3101 = vmax.f32 %v3093, 0.0
        %v3102 = vmax.f32 %v3094, 0.0
        %v3103 = vmax.f32 %v3095, 0.0
        %v3104 = vmax.f32 %v3096, 0.0
        %v3105 = vmax.f32 %v3097, 0.0
        %v3106 = vmax.f32 %v3098, 0.0
        %v3107 = vmax.f32 %v3099, 0.0
        %v3108 = vmax.f32 %v3100, 0.0
        %v3109 = vlaneseq
        %v3110 = vshrl.u32 %v3109, 7
        %v3111 = vsub.s32 1, %v3110
        %v3112 = vrot.slane %v3024, %v3111
        %v3113 = vmul.f32 %v3101, %v3112
        %v3114 = vmul.f32 %v3102, %v3112
        %v3115 = vmul.f32 %v3103, %v3112
        %v3116 = vmul.f32 %v3104, %v3112
        %v3117 = vmul.f32 %v3105, %v3112
        %v3118 = vmul.f32 %v3106, %v3112
        %v3119 = vmul.f32 %v3107, %v3112
        %v3120 = vmul.f32 %v3108, %v3112
        %v3121 = vadd.f32 %v3069, %v3113
        %v3122 = vadd.f32 %v3070, %v3114
        %v3123 = vadd.f32 %v3071, %v3115
        %v3124 = vadd.f32 %v3072, %v3116
        %v3125 = vadd.f32 %v3073, %v3117
        %v3126 = vadd.f32 %v3074, %v3118
        %v3127 = vadd.f32 %v3075, %v3119
        %v3128 = vadd.f32 %v3076, %v3120
        %v3129 = vlaneseq
        %v3130 = vshrl.u32 %v3129, 7
        %v3131 = vsub.s32 2, %v3130
        %v3132 = vrot.slane %v3022, %v3131
        %v3133 = vmul.f32 %v3014, %v3132
        %v3134 = vmul.f32 %v3015, %v3132
        %v3135 = vmul.f32 %v3016, %v3132
        %v3136 = vmul.f32 %v3017, %v3132
        %v3137 = vmul.f32 %v3018, %v3132
        %v3138 = vmul.f32 %v3019, %v3132
        %v3139 = vmul.f32 %v3020, %v3132
        %v3140 = vmul.f32 %v3021, %v3132
        %v3141 = vlaneseq
        %v3142 = vshrl.u32 %v3141, 7
        %v3143 = vsub.s32 2, %v3142
        %v3144 = vrot.slane %v3023, %v3143
        %v3145 = vadd.f32 %v3133, %v3144
        %v3146 = vadd.f32 %v3134, %v3144
        %v3147 = vadd.f32 %v3135, %v3144
        %v3148 = vadd.f32 %v3136, %v3144
        %v3149 = vadd.f32 %v3137, %v3144
        %v3150 = vadd.f32 %v3138, %v3144
        %v3151 = vadd.f32 %v3139, %v3144
        %v3152 = vadd.f32 %v3140, %v3144
        %v3153 = vmax.f32 %v3145, 0.0
        %v3154 = vmax.f32 %v3146, 0.0
        %v3155 = vmax.f32 %v3147, 0.0
        %v3156 = vmax.f32 %v3148, 0.0
        %v3157 = vmax.f32 %v3149, 0.0
        %v3158 = vmax.f32 %v3150, 0.0
        %v3159 = vmax.f32 %v3151, 0.0
        %v3160 = vmax.f32 %v3152, 0.0
        %v3161 = vlaneseq
        %v3162 = vshrl.u32 %v3161, 7
        %v3163 = vsub.s32 2, %v3162
        %v3164 = vrot.slane %v3024, %v3163
        %v3165 = vmul.f32 %v3153, %v3164
        %v3166 = vmul.f32 %v3154, %v3164
        %v3167 = vmul.f32 %v3155, %v3164
        %v3168 = vmul.f32 %v3156, %v3164
        %v3169 = vmul.f32 %v3157, %v3164
        %v3170 = vmul.f32 %v3158, %v3164
        %v3171 = vmul.f32 %v3159, %v3164
        %v3172 = vmul.f32 %v3160, %v3164
        %v3173 = vadd.f32 %v3121, %v3165
        %v3174 = vadd.f32 %v3122, %v3166
        %v3175 = vadd.f32 %v3123, %v3167
        %v3176 = vadd.f32 %v3124, %v3168
        %v3177 = vadd.f32 %v3125, %v3169
        %v3178 = vadd.f32 %v3126, %v3170
        %v3179 = vadd.f32 %v3127, %v3171
        %v3180 = vadd.f32 %v3128, %v3172
        %v3181 = vlaneseq
        %v3182 = vshrl.u32 %v3181, 7
        %v3183 = vsub.s32 3, %v3182
        %v3184 = vrot.slane %v3022, %v3183
        %v3185 = vmul.f32 %v3014, %v3184
        %v3186 = vmul.f32 %v3015, %v3184
        %v3187 = vmul.f32 %v3016, %v3184
        %v3188 = vmul.f32 %v3017, %v3184
        %v3189 = vmul.f32 %v3018, %v3184
        %v3190 = vmul.f32 %v3019, %v3184
        %v3191 = vmul.f32 %v3020, %v3184
        %v3192 = vmul.f32 %v3021, %v3184
        %v3193 = vlaneseq
        %v3194 = vshrl.u32 %v3193, 7
        %v3195 = vsub.s32 3, %v3194
        %v3196 = vrot.slane %v3023, %v3195
        %v3197 = vadd.f32 %v3185, %v3196
        %v3198 = vadd.f32 %v3186, %v3196
        %v3199 = vadd.f32 %v3187, %v3196
        %v3200 = vadd.f32 %v3188, %v3196
        %v3201 = vadd.f32 %v3189, %v3196
        %v3202 = vadd.f32 %v3190, %v3196
        %v3203 = vadd.f32 %v3191, %v3196
        %v3204 = vadd.f32 %v3192, %v3196
        %v3205 = vmax.f32 %v3197, 0.0
        %v3206 = vmax.f32 %v3198, 0.0
        %v3207 = vmax.f32 %v3199, 0.0
        %v3208 = vmax.f32 %v3200, 0.0
        %v3209 = vmax.f32 %v3201, 0.0
        %v3210 = vmax.f32 %v3202, 0.0
        %v3211 = vmax.f32 %v3203, 0.0
        %v3212 = vmax.f32 %v3204, 0.0
        %v3213 = vlaneseq
        %v3214 = vshrl.u32 %v3213, 7
        %v3215 = vsub.s32 3, %v3214
        %v3216 = vrot.slane %v3024, %v3215
        %v3217 = vmul.f32 %v3205, %v3216
        %v3218 = vmul.f32 %v3206, %v3216
        %v3219 = vmul.f32 %v3207, %v3216
        %v3220 = vmul.f32 %v3208, %v3216
        %v3221 = vmul.f32 %v3209, %v3216
        %v3222 = vmul.f32 %v3210, %v3216
        %v3223 = vmul.f32 %v3211, %v3216
        %v3224 = vmul.f32 %v3212, %v3216
        %v3225 = vadd.f32 %v3173, %v3217
        %v3226 = vadd.f32 %v3174, %v3218
        %v3227 = vadd.f32 %v3175, %v3219
        %v3228 = vadd.f32 %v3176, %v3220
        %v3229 = vadd.f32 %v3177, %v3221
        %v3230 = vadd.f32 %v3178, %v3222
        %v3231 = vadd.f32 %v3179, %v3223
        %v3232 = vadd.f32 %v3180, %v3224
        %v3233 = vadd.f32 %v3014, %v3225
        %v3234 = vadd.f32 %v3015, %v3226
        %v3235 = vadd.f32 %v3016, %v3227
        %v3236 = vadd.f32 %v3017, %v3228
        %v3237 = vadd.f32 %v3018, %v3229
        %v3238 = vadd.f32 %v3019, %v3230
        %v3239 = vadd.f32 %v3020, %v3231
        %v3240 = vadd.f32 %v3021, %v3232
        %v3241 = vld [vmem:[%s4 + $0x1] sm:$0x1]
        %v3242 = vlaneseq
        %v3243 = vshrl.u32 %v3242, 7
        %v3244 = vsub.s32 0, %v3243
        %v3245 = vrot.slane %v3241, %v3244
        %v3246 = vadd.f32 %v3233, %v3245
        %v3247 = vadd.f32 %v3234, %v3245
        %v3248 = vadd.f32 %v3235, %v3245
        %v3249 = vadd.f32 %v3236, %v3245
        %v3250 = vadd.f32 %v3237, %v3245
        %v3251 = vadd.f32 %v3238, %v3245
        %v3252 = vadd.f32 %v3239, %v3245
        %v3253 = vadd.f32 %v3240, %v3245
        %3254 = vxpose.xlu0.b32.start [1/16] %v3246, 128
        %3255 = vxpose.xlu0.b32.cont [2/16] %v3247, 128
        %3256 = vxpose.xlu0.b32.cont [3/16] %v3248, 128
        %3257 = vxpose.xlu0.b32.cont [4/16] %v3249, 128
        %3258 = vxpose.xlu0.b32.cont [5/16] %v3250, 128
        %3259 = vxpose.xlu0.b32.cont [6/16] %v3251, 128
        %3260 = vxpose.xlu0.b32.cont [7/16] %v3252, 128
        %3261 = vxpose.xlu0.b32.cont [8/16] %v3253, 128
        %3262 = vxpose.xlu0.b32.cont [9/16] 0.0, 128
        %3263 = vxpose.xlu0.b32.cont [10/16] 0.0, 128
        %3264 = vxpose.xlu0.b32.cont [11/16] 0.0, 128
        %3265 = vxpose.xlu0.b32.cont [12/16] 0.0, 128
        %3266 = vxpose.xlu0.b32.cont [13/16] 0.0, 128
        %3267 = vxpose.xlu0.b32.cont [14/16] 0.0, 128
        %3268 = vxpose.xlu0.b32.cont [15/16] 0.0, 128
        %3269 = vxpose.xlu0.b32.end [16/16] 0.0, 128
        %v3270 = vpop.trf.xlu0
        %v3271 = vpop.trf.xlu0
        %v3272 = vpop.trf.xlu0
        %v3273 = vpop.trf.xlu0
        %v3274 = vpop.trf.xlu0
        %v3275 = vpop.trf.xlu0
        %v3276 = vpop.trf.xlu0
        %v3277 = vpop.trf.xlu0
        %v3278 = vpop.trf.xlu0
        %v3279 = vpop.trf.xlu0
        %v3280 = vpop.trf.xlu0
        %v3281 = vpop.trf.xlu0
        %v3282 = vpop.trf.xlu0
        %v3283 = vpop.trf.xlu0
        %v3284 = vpop.trf.xlu0
        %v3285 = vpop.trf.xlu0
        %vm3286 = vcmask 523264
        %3287 = vst.msk [vmem:[%s244] sm:$0xff] %vm3286, %v3270
        %s3288 = sand.u32 %s159, 1
        %s3289 = scalar_lea.sflag [#allocation5], %s3288
        %s3290 = sand.u32 %s159, 1
        %s3291 = smul.addr %s3290, 8
        %s3292 = scalar_lea.vmem [#allocation4], %s3291
        // Predicated region
        $region45: #{tpu_custom_call.1} parent=43 // pred_check
          %p3293 = pneg %p169
        $region46: #{tpu_custom_call.1} parent=43 // pred_check_branch
          %3295 = sbr.rel (%p3293) target = $region48
        $region47: #{tpu_custom_call.1} parent=43 // pred_region
          %s3297 = ssub.s32 128, 128
          %3298 = vsyncadd %s3289, %s3297
          %s3299 = smul.addr %s20, 128
          %s3300 = scalar_lea.hbm %s6, %s3299
          %s3302 = sshll.u32 %s3292, 4
          %s3303 = int_to_ptr.vmem [resolvable:$true] %s3302
          %3305 = dma.vmem_to_hbm [thread:$0]  %s3303, 128, %s3300, %s3289
        $region48: #{tpu_custom_call.1} parent=43 // pred_fallthru
          _
      $region44: #{tpu_custom_call.1} parent=5 // pred_fallthru
        _
      %p3306 = scmp.le.s32.totalorder 2, %s15
      // Predicated region
      $region49: #{tpu_custom_call.1} parent=5 // pred_check
        %p3307 = pneg %p3306
      $region50: #{tpu_custom_call.1} parent=5 // pred_check_branch
        %3309 = sbr.rel (%p3307) target = $region52
      $region51: #{tpu_custom_call.1} parent=5 // pred_region
        %s3310 = ssub.s32 %s15, 2
        // Predicated region
        $region53: #{tpu_custom_call.1} parent=51 // pred_check
          %p3311 = pneg %p175
        $region54: #{tpu_custom_call.1} parent=51 // pred_check_branch
          %3313 = sbr.rel (%p3311) target = $region56
        $region55: #{tpu_custom_call.1} parent=51 // pred_region
          %s3314 = sand.u32 %s160, 1
          %s3315 = scalar_lea.sflag [#allocation5], %s3314
          %s3316 = sand.u32 %s160, 1
          %s3317 = smul.addr %s3316, 8
          %s3318 = scalar_lea.vmem [#allocation4], %s3317
          %3319 = dma.done %s3315, 128
        $region56: #{tpu_custom_call.1} parent=51 // pred_fallthru
          _
      $region52: #{tpu_custom_call.1} parent=5 // pred_fallthru
        _
    $region6: #{tpu_custom_call.1} parent=1 // loop_footer
      %s19 = sadd.s32 1, %s15
    $region7: #{tpu_custom_call.1} parent=1 // loop_footer_branch
      %14 = sbr.rel target = $region3
    $region8: #{tpu_custom_call.1} parent=1 // loop_exit
      _
    %3320 = vsyncpa [#allocation5], 1
    %s3321 = scalar_lea.sflag [#allocation5], 1
    %3322 = vsyncpa %s3321, 1

</llo_original>
